<compile_context>
chip_gen: v6e
topology: v6e:2x2x1
jax: 0.10.0
libtpu: 0.0.40
codegen_flags: <defaults>
</compile_context>

<pallas_src>
import math
import numpy as np
import jax
import jax.numpy as jnp
from jax import lax
from jax.experimental import pallas as pl
from jax.experimental.pallas import tpu as pltpu


# ----------------------------- in-kernel helpers ---------------------------

def _gelu_exact(x):
    # F.gelu default = exact erf gelu
    return 0.5 * x * (1.0 + lax.erf(x / jnp.float32(math.sqrt(2.0))))


def _layer_norm(x, g, b, eps):
    mean = jnp.mean(x, axis=-1, keepdims=True)
    var = jnp.mean((x - mean) ** 2, axis=-1, keepdims=True)
    return (x - mean) * lax.rsqrt(var + eps) * g + b


# ----------------------------- fused GPT kernel ----------------------------

def _make_gpt_kernel(n_layer, n_head, d_head, eps, scale, return_probs):
    H = n_head
    del d_head  # shapes are taken from the refs

    def kernel(x_ref, pos_ref,
               wqkv_ref, bqkv_ref, wo_ref, bo_ref, ln1g_ref, ln1b_ref,
               w1_ref, b1_ref, w2_ref, b2_ref, ln2g_ref, ln2b_ref,
               out_ref, *prob_refs):
        x = x_ref[0] + pos_ref[...]                       # (S, D)
        S, D = x.shape

        # reference mask: col >= row (diagonal masked too)
        row = lax.broadcasted_iota(jnp.int32, (S, S), 0)
        col = lax.broadcasted_iota(jnp.int32, (S, S), 1)
        mask = (col >= row)[None]                         # (1, S, S) -> bcast over heads

        prob_slabs = []
        for l in range(n_layer):
            # ---- fused QKV projection: one batched matmul over all 3*H heads ----
            xb = jnp.broadcast_to(x, (3 * H, S, D))       # cheap leading-dim bcast
            qkv = lax.dot_general(
                xb, wqkv_ref[l],
                dimension_numbers=(((2,), (1,)), ((0,), (0,))),
                preferred_element_type=jnp.float32) + bqkv_ref[l]   # (3H, S, dh)
            q = qkv[0:H] * scale                          # pre-scale q once
            k = qkv[H:2 * H]
            v = qkv[2 * H:3 * H]

            # ---- attention, batched over heads (no per-head loop / relayouts) ----
            scores = lax.dot_general(                     # (H, S, S)
                q, k, dimension_numbers=(((2,), (2,)), ((0,), (0,))),
                preferred_element_type=jnp.float32)
            scores = jnp.where(mask, jnp.float32(-1e9), scores)
            scores = scores - jnp.max(scores, axis=-1, keepdims=True)
            e = jnp.exp(scores)
            denom = jnp.sum(e, axis=-1, keepdims=True)
            prob = e * pl.reciprocal(denom, approx=True)  # (H, S, S), EUP recip

            ctx = lax.dot_general(                        # (H, S, dh)
                prob, v, dimension_numbers=(((2,), (1,)), ((0,), (0,))),
                preferred_element_type=jnp.float32)

            # output projection: per-head (dh, D) weights, then head-sum (VPU adds)
            proj = lax.dot_general(                       # (H, S, D)
                ctx, wo_ref[l],
                dimension_numbers=(((2,), (1,)), ((0,), (0,))),
                preferred_element_type=jnp.float32)
            attn_out = jnp.sum(proj, axis=0) + bo_ref[l, 0]

            y1 = _layer_norm(x + attn_out, ln1g_ref[l, 0], ln1b_ref[l, 0], eps)

            # ---- position-wise FFN (Conv1d kernel_size=1 == per-token Linear) ----
            h1 = _gelu_exact(jnp.dot(y1, w1_ref[l],
                                     preferred_element_type=jnp.float32)
                             + b1_ref[l, 0])
            h2 = jnp.dot(h1, w2_ref[l],
                         preferred_element_type=jnp.float32) + b2_ref[l, 0]
            x = _layer_norm(y1 + h2, ln2g_ref[l, 0], ln2b_ref[l, 0], eps)

            if return_probs:
                # lane-concatenate heads -> (S, H*S): widest last dim reachable
                # without sublane relayouts at tiny S
                prob_slabs.append(
                    jnp.concatenate([prob[h] for h in range(H)], axis=-1))

        out_ref[0] = x
        if return_probs:
            # single lane-dense store of all layers' probs: (S, n_layer*H*S)
            prob_refs[0][0] = jnp.concatenate(prob_slabs, axis=-1)

    return kernel


# ----------------------------- parameter packing ---------------------------

def _pack_params_for_kernel(params, cfg):
    """Stack per-layer weights and bake the head split into the weight layout
    (done once, outside the kernel) so the kernel needs no in-kernel slicing."""
    L, H, Dh, D = cfg["n_layer"], cfg["n_head"], cfg["d_head"], cfg["d_hidn"]

    def per_head_w(w):                         # (D, H*Dh) -> (H, D, Dh)
        return jnp.transpose(w.reshape(D, H, Dh), (1, 0, 2))

    def per_head_b(b):                         # (1, H*Dh) -> (H, 1, Dh)
        return b.reshape(H, Dh)[:, None, :]

    keys = ("wqkv", "bqkv", "wo", "bo", "ln1_g", "ln1_b",
            "w1", "b1", "w2", "b2", "ln2_g", "ln2_b")
    packed = {k: [] for k in keys}
    for lp in params["layers"]:
        packed["wqkv"].append(jnp.concatenate(
            [per_head_w(lp["wq"]), per_head_w(lp["wk"]), per_head_w(lp["wv"])],
            axis=0))                                           # (3H, D, Dh)
        packed["bqkv"].append(jnp.concatenate(
            [per_head_b(lp["bq"]), per_head_b(lp["bk"]), per_head_b(lp["bv"])],
            axis=0))                                           # (3H, 1, Dh)
        packed["wo"].append(lp["wo"].reshape(H, Dh, D))        # (H, Dh, D)
        for k in ("bo", "ln1_g", "ln1_b", "w1", "b1", "w2", "b2",
                  "ln2_g", "ln2_b"):
            packed[k].append(lp[k])
    return {k: jnp.stack(v, axis=0) for k, v in packed.items()}  # leading L axis


# ----------------------------- wrapper --------------------------------------

def gpt_forward(dec_inputs, params, cfg, return_probs=True):
    # start=True path: dec_inputs already (B, S, d_hidn) embeddings.
    B, S, D = dec_inputs.shape
    L, H, Dh = cfg["n_layer"], cfg["n_head"], cfg["d_head"]
    eps = cfg["layer_norm_epsilon"]
    scale = 1.0 / (Dh ** 0.5)
    pos = params["pos_emb"][:S]
    pk = _pack_params_for_kernel(params, cfg)

    weight_args = [pk["wqkv"], pk["bqkv"], pk["wo"], pk["bo"],
                   pk["ln1_g"], pk["ln1_b"], pk["w1"], pk["b1"],
                   pk["w2"], pk["b2"], pk["ln2_g"], pk["ln2_b"]]

    def full_spec(arr):
        zeros = (0,) * arr.ndim
        return pl.BlockSpec(arr.shape, lambda b, _z=zeros: _z)

    in_specs = ([pl.BlockSpec((1, S, D), lambda b: (b, 0, 0)),
                 full_spec(pos)] + [full_spec(a) for a in weight_args])

    out_spec_x = pl.BlockSpec((1, S, D), lambda b: (b, 0, 0))
    out_shape_x = jax.ShapeDtypeStruct((B, S, D), jnp.float32)
    if return_probs:
        PW = L * H * S
        out_specs = (out_spec_x, pl.BlockSpec((1, S, PW), lambda b: (b, 0, 0)))
        out_shape = (out_shape_x, jax.ShapeDtypeStruct((B, S, PW), jnp.float32))
    else:
        out_specs = out_spec_x
        out_shape = out_shape_x

    kernel = _make_gpt_kernel(L, H, Dh, eps, scale, return_probs)
    result = pl.pallas_call(
        kernel,
        out_shape=out_shape,
        grid_spec=pltpu.PrefetchScalarGridSpec(
            num_scalar_prefetch=0,
            grid=(B,),                      # >=2 parallel steps for v7x megacore
            in_specs=in_specs,
            out_specs=out_specs),
        compiler_params=pltpu.CompilerParams(
            dimension_semantics=("parallel",)),
    )(dec_inputs, pos, *weight_args)

    if not return_probs:
        return result, None
    out, prob_flat = result
    # unpack lane-dense slab back to the PyTorch per-layer (B, H, S, S) layout
    r = prob_flat.reshape(B, S, L, H, S)
    probs = [jnp.transpose(r[:, :, l], (0, 2, 1, 3)) for l in range(L)]
    return out, probs


# ----------------------------- parameter init -------------------------------

def get_sinusoid_encoding_table(n_seq, d_hidn):
    def cal_angle(position, i_hidn):
        return position / np.power(10000, 2 * (i_hidn // 2) / d_hidn)

    tab = np.array([[cal_angle(p, i) for i in range(d_hidn)]
                    for p in range(n_seq)])
    tab[:, 0::2] = np.sin(tab[:, 0::2])
    tab[:, 1::2] = np.cos(tab[:, 1::2])
    return tab.astype(np.float32)


def _linear_init(key, fan_in, fan_out):
    # nn.Linear / nn.Conv1d(k=1) default: U(-1/sqrt(fan_in), 1/sqrt(fan_in))
    kw, kb = jax.random.split(key)
    bound = 1.0 / math.sqrt(fan_in)
    w = jax.random.uniform(kw, (fan_in, fan_out), jnp.float32, -bound, bound)
    b = jax.random.uniform(kb, (1, fan_out), jnp.float32, -bound, bound)
    return w, b


def init_gpt_params(key, cfg):
    D, H, Dh, F = cfg["d_hidn"], cfg["n_head"], cfg["d_head"], cfg["d_ff"]
    layers = []
    keys = jax.random.split(key, cfg["n_layer"] + 1)
    for li in range(cfg["n_layer"]):
        k = jax.random.split(keys[li], 6)
        wq, bq = _linear_init(k[0], D, H * Dh)
        wk, bk = _linear_init(k[1], D, H * Dh)
        wv, bv = _linear_init(k[2], D, H * Dh)
        wo, bo = _linear_init(k[3], H * Dh, D)
        w1, b1 = _linear_init(k[4], D, F)      # conv1 (kernel_size=1)
        w2, b2 = _linear_init(k[5], F, D)      # conv2 (kernel_size=1)
        layers.append(dict(
            wq=wq, bq=bq, wk=wk, bk=bk, wv=wv, bv=bv, wo=wo, bo=bo,
            ln1_g=jnp.ones((1, D), jnp.float32), ln1_b=jnp.zeros((1, D), jnp.float32),
            w1=w1, b1=b1, w2=w2, b2=b2,
            ln2_g=jnp.ones((1, D), jnp.float32), ln2_b=jnp.zeros((1, D), jnp.float32)))
    # TODO(synk): self.dec_emb (n_dec_vocab, d_hidn) is declared in __init__ but
    # never used in the forward pass (start=True feeds embeddings directly), so
    # it is not materialized here.
    return dict(layers=layers,
                pos_emb=jnp.asarray(get_sinusoid_encoding_table(
                    cfg["n_dec_seq"], D)))


# ----------------------------- pure-JAX reference ---------------------------

def gpt_ref(dec_inputs, params, cfg):
    B, S, D = dec_inputs.shape
    H, Dh = cfg["n_head"], cfg["d_head"]
    eps = cfg["layer_norm_epsilon"]
    scale = 1.0 / (Dh ** 0.5)
    x = dec_inputs + params["pos_emb"][:S][None, :, :]
    mask = jnp.triu(jnp.ones((S, S), dtype=bool))

    def ln(v, g, b):
        m = jnp.mean(v, -1, keepdims=True)
        var = jnp.mean((v - m) ** 2, -1, keepdims=True)
        return (v - m) / jnp.sqrt(var + eps) * g[0] + b[0]

    probs = []
    for lp in params["layers"]:
        def proj(w, b):
            return (x @ w + b[0]).reshape(B, S, H, Dh).transpose(0, 2, 1, 3)
        q, k, v = proj(lp["wq"], lp["bq"]), proj(lp["wk"], lp["bk"]), proj(lp["wv"], lp["bv"])
        scores = jnp.einsum("bhqd,bhkd->bhqk", q, k) * scale
        scores = jnp.where(mask[None, None], -1e9, scores)
        prob = jax.nn.softmax(scores, axis=-1)
        probs.append(prob)
        ctx = jnp.einsum("bhqk,bhkd->bhqd", prob, v)
        ctx = ctx.transpose(0, 2, 1, 3).reshape(B, S, H * Dh)
        attn_out = ctx @ lp["wo"] + lp["bo"][0]
        y1 = ln(x + attn_out, lp["ln1_g"], lp["ln1_b"])
        h1 = jax.nn.gelu(y1 @ lp["w1"] + lp["b1"][0], approximate=False)
        h2 = h1 @ lp["w2"] + lp["b2"][0]
        x = ln(y1 + h2, lp["ln2_g"], lp["ln2_b"])
    return x, probs


# ----------------------------- main -----------------------------------------

if __name__ == "__main__":
    cfg = dict(n_dec_vocab=100, n_dec_seq=8, d_hidn=32, n_head=2, d_head=16,
               d_ff=64, n_layer=2, dropout=0.0, layer_norm_epsilon=1e-6)

    key = jax.random.PRNGKey(0)
    k_param, k_in = jax.random.split(key)
    params = init_gpt_params(k_param, cfg)

    B, S, D = 2, cfg["n_dec_seq"], cfg["d_hidn"]
    dec_inputs = jax.random.normal(k_in, (B, S, D), jnp.float32)

    out, probs = gpt_forward(dec_inputs, params, cfg, return_probs=True)
    out = jax.block_until_ready(out)
    probs = [jax.block_until_ready(p) for p in probs]

    # correctness check against a pure-JAX reference (tolerance covers the
    # EUP approximate reciprocal used in the in-kernel softmax)
    out_ref, probs_ref = gpt_ref(dec_inputs, params, cfg)
    np.testing.assert_allclose(np.asarray(out), np.asarray(out_ref),
                               rtol=5e-3, atol=5e-3)
    for p, pr in zip(probs, probs_ref):
        np.testing.assert_allclose(np.asarray(p), np.asarray(pr),
                                   rtol=5e-3, atol=5e-3)

    # prob-free path (drops the O(S^2) writeback; useful on bandwidth-weak v5e)
    out2, _ = gpt_forward(dec_inputs, params, cfg, return_probs=False)
    out2 = jax.block_until_ready(out2)
    np.testing.assert_allclose(np.asarray(out2), np.asarray(out_ref),
                               rtol=5e-3, atol=5e-3)

    print("KERNEL_OK")
</pallas_src>

<mosaic_0001>
module attributes {stable_mosaic.version = 11 : i64} {
  func.func @kernel(%arg0: i32, %arg1: memref<1x8x32xf32, #tpu.memory_space<vmem>>, %arg2: memref<8x32xf32, #tpu.memory_space<vmem>>, %arg3: memref<2x6x32x16xf32, #tpu.memory_space<vmem>>, %arg4: memref<2x6x1x16xf32, #tpu.memory_space<vmem>>, %arg5: memref<2x2x16x32xf32, #tpu.memory_space<vmem>>, %arg6: memref<2x1x32xf32, #tpu.memory_space<vmem>>, %arg7: memref<2x1x32xf32, #tpu.memory_space<vmem>>, %arg8: memref<2x1x32xf32, #tpu.memory_space<vmem>>, %arg9: memref<2x32x64xf32, #tpu.memory_space<vmem>>, %arg10: memref<2x1x64xf32, #tpu.memory_space<vmem>>, %arg11: memref<2x64x32xf32, #tpu.memory_space<vmem>>, %arg12: memref<2x1x32xf32, #tpu.memory_space<vmem>>, %arg13: memref<2x1x32xf32, #tpu.memory_space<vmem>>, %arg14: memref<2x1x32xf32, #tpu.memory_space<vmem>>, %arg15: memref<1x8x32xf32, #tpu.memory_space<vmem>>, %arg16: memref<1x8x32xf32, #tpu.memory_space<vmem>>) attributes {dimension_semantics = [#tpu.dimension_semantics<parallel>], iteration_bounds = array<i64: 2>, scalar_prefetch = 0 : i64, scratch_operands = 0 : i64, tpu.core_type = #tpu.core_type<tc>, window_params = [{transform_indices = @transform_0, window_bounds = array<i64: 1, 8, 32>}, {pipeline_mode = #tpu.pipeline_mode<synchronous>, transform_indices = @transform_1, window_bounds = array<i64: 8, 32>}, {pipeline_mode = #tpu.pipeline_mode<synchronous>, transform_indices = @transform_2, window_bounds = array<i64: 2, 6, 32, 16>}, {pipeline_mode = #tpu.pipeline_mode<synchronous>, transform_indices = @transform_3, window_bounds = array<i64: 2, 6, 1, 16>}, {pipeline_mode = #tpu.pipeline_mode<synchronous>, transform_indices = @transform_4, window_bounds = array<i64: 2, 2, 16, 32>}, {pipeline_mode = #tpu.pipeline_mode<synchronous>, transform_indices = @transform_5, window_bounds = array<i64: 2, 1, 32>}, {pipeline_mode = #tpu.pipeline_mode<synchronous>, transform_indices = @transform_6, window_bounds = array<i64: 2, 1, 32>}, {pipeline_mode = #tpu.pipeline_mode<synchronous>, transform_indices = @transform_7, window_bounds = array<i64: 2, 1, 32>}, {pipeline_mode = #tpu.pipeline_mode<synchronous>, transform_indices = @transform_8, window_bounds = array<i64: 2, 32, 64>}, {pipeline_mode = #tpu.pipeline_mode<synchronous>, transform_indices = @transform_9, window_bounds = array<i64: 2, 1, 64>}, {pipeline_mode = #tpu.pipeline_mode<synchronous>, transform_indices = @transform_10, window_bounds = array<i64: 2, 64, 32>}, {pipeline_mode = #tpu.pipeline_mode<synchronous>, transform_indices = @transform_11, window_bounds = array<i64: 2, 1, 32>}, {pipeline_mode = #tpu.pipeline_mode<synchronous>, transform_indices = @transform_12, window_bounds = array<i64: 2, 1, 32>}, {pipeline_mode = #tpu.pipeline_mode<synchronous>, transform_indices = @transform_13, window_bounds = array<i64: 2, 1, 32>}, {transform_indices = @transform_14, window_bounds = array<i64: 1, 8, 32>}, {transform_indices = @transform_15, window_bounds = array<i64: 1, 8, 32>}]} {
    %c0 = arith.constant 0 : index
    %c0_0 = arith.constant 0 : index
    %c0_1 = arith.constant 0 : index
    %0 = vector.load %arg1[%c0, %c0_0, %c0_1] : memref<1x8x32xf32, #tpu.memory_space<vmem>>, vector<1x8x32xf32>
    %1 = vector.shape_cast %0 : vector<1x8x32xf32> to vector<8x32xf32>
    %c0_2 = arith.constant 0 : index
    %c0_3 = arith.constant 0 : index
    %2 = vector.load %arg2[%c0_2, %c0_3] : memref<8x32xf32, #tpu.memory_space<vmem>>, vector<8x32xf32>
    %3 = arith.addf %1, %2 : vector<8x32xf32>
    %4 = tpu.iota {dimensions = array<i32: 0>} : vector<8x8xi32>
    %5 = tpu.iota {dimensions = array<i32: 1>} : vector<8x8xi32>
    %6 = arith.cmpi sge, %5, %4 : vector<8x8xi32>
    %7 = vector.shape_cast %6 : vector<8x8xi1> to vector<1x8x8xi1>
    %8 = vector.shape_cast %3 : vector<8x32xf32> to vector<1x8x32xf32>
    %9 = vector.broadcast %8 : vector<1x8x32xf32> to vector<6x8x32xf32>
    %c0_4 = arith.constant 0 : index
    %c0_5 = arith.constant 0 : index
    %c0_6 = arith.constant 0 : index
    %c0_7 = arith.constant 0 : index
    %10 = vector.load %arg3[%c0_4, %c0_5, %c0_6, %c0_7] : memref<2x6x32x16xf32, #tpu.memory_space<vmem>>, vector<1x6x32x16xf32>
    %11 = vector.shape_cast %10 : vector<1x6x32x16xf32> to vector<6x32x16xf32>
    %cst = arith.constant dense<0.000000e+00> : vector<6x8x16xf32>
    %12 = tpu.matmul %9, %11, %cst {dimension_numbers = #tpu.dot_dimension_numbers<[2], [1], [1], [2], [0, 0, 0, 1, 1, 2], [0], [0]>} : vector<6x8x32xf32>, vector<6x32x16xf32>, vector<6x8x16xf32> -> vector<6x8x16xf32>
    %c0_8 = arith.constant 0 : index
    %c0_9 = arith.constant 0 : index
    %c0_10 = arith.constant 0 : index
    %c0_11 = arith.constant 0 : index
    %13 = vector.load %arg4[%c0_8, %c0_9, %c0_10, %c0_11] : memref<2x6x1x16xf32, #tpu.memory_space<vmem>>, vector<1x6x1x16xf32>
    %14 = vector.shape_cast %13 : vector<1x6x1x16xf32> to vector<6x1x16xf32>
    %15 = vector.broadcast %14 : vector<6x1x16xf32> to vector<6x8x16xf32>
    %16 = arith.addf %12, %15 : vector<6x8x16xf32>
    %17 = vector.extract_strided_slice %16 {offsets = [0, 0, 0], sizes = [2, 8, 16], strides = [1, 1, 1]} : vector<6x8x16xf32> to vector<2x8x16xf32>
    %cst_12 = arith.constant 2.500000e-01 : f32
    %18 = vector.broadcast %cst_12 : f32 to vector<2x8x16xf32>
    %19 = arith.mulf %17, %18 : vector<2x8x16xf32>
    %20 = vector.extract_strided_slice %16 {offsets = [2, 0, 0], sizes = [2, 8, 16], strides = [1, 1, 1]} : vector<6x8x16xf32> to vector<2x8x16xf32>
    %21 = vector.extract_strided_slice %16 {offsets = [4, 0, 0], sizes = [2, 8, 16], strides = [1, 1, 1]} : vector<6x8x16xf32> to vector<2x8x16xf32>
    %cst_13 = arith.constant dense<0.000000e+00> : vector<2x8x8xf32>
    %22 = tpu.matmul %19, %20, %cst_13 {dimension_numbers = #tpu.dot_dimension_numbers<[2], [2], [1], [1], [0, 0, 0, 1, 1, 1], [0], [0]>} : vector<2x8x16xf32>, vector<2x8x16xf32>, vector<2x8x8xf32> -> vector<2x8x8xf32>
    %cst_14 = arith.constant -1.000000e+09 : f32
    %23 = vector.shape_cast %7 : vector<1x8x8xi1> to vector<1x8x8xi1>
    %24 = vector.broadcast %23 : vector<1x8x8xi1> to vector<2x8x8xi1>
    %25 = vector.broadcast %cst_14 : f32 to vector<2x8x8xf32>
    %26 = arith.select %24, %25, %22 : vector<2x8x8xi1>, vector<2x8x8xf32>
    %cst_15 = arith.constant dense<0xFF800000> : vector<2x8xf32>
    %27 = vector.multi_reduction <maximumf>, %26, %cst_15 [2] : vector<2x8x8xf32> to vector<2x8xf32>
    %28 = vector.shape_cast %27 : vector<2x8xf32> to vector<2x8x1xf32>
    %29 = vector.broadcast %28 : vector<2x8x1xf32> to vector<2x8x8xf32>
    %30 = arith.subf %26, %29 : vector<2x8x8xf32>
    %31 = math.exp %30 : vector<2x8x8xf32>
    %cst_16 = arith.constant dense<0.000000e+00> : vector<2x8xf32>
    %32 = vector.multi_reduction <add>, %31, %cst_16 [2] : vector<2x8x8xf32> to vector<2x8xf32>
    %33 = vector.shape_cast %32 : vector<2x8xf32> to vector<2x8x1xf32>
    %34 = tpu.reciprocal %33 {approx = true} : vector<2x8x1xf32> -> vector<2x8x1xf32>
    %35 = vector.broadcast %34 : vector<2x8x1xf32> to vector<2x8x8xf32>
    %36 = arith.mulf %31, %35 : vector<2x8x8xf32>
    %cst_17 = arith.constant dense<0.000000e+00> : vector<2x8x16xf32>
    %37 = tpu.matmul %36, %21, %cst_17 {dimension_numbers = #tpu.dot_dimension_numbers<[2], [1], [1], [2], [0, 0, 0, 1, 1, 2], [0], [0]>} : vector<2x8x8xf32>, vector<2x8x16xf32>, vector<2x8x16xf32> -> vector<2x8x16xf32>
    %c0_18 = arith.constant 0 : index
    %c0_19 = arith.constant 0 : index
    %c0_20 = arith.constant 0 : index
    %c0_21 = arith.constant 0 : index
    %38 = vector.load %arg5[%c0_18, %c0_19, %c0_20, %c0_21] : memref<2x2x16x32xf32, #tpu.memory_space<vmem>>, vector<1x2x16x32xf32>
    %39 = vector.shape_cast %38 : vector<1x2x16x32xf32> to vector<2x16x32xf32>
    %cst_22 = arith.constant dense<0.000000e+00> : vector<2x8x32xf32>
    %40 = tpu.matmul %37, %39, %cst_22 {dimension_numbers = #tpu.dot_dimension_numbers<[2], [1], [1], [2], [0, 0, 0, 1, 1, 2], [0], [0]>} : vector<2x8x16xf32>, vector<2x16x32xf32>, vector<2x8x32xf32> -> vector<2x8x32xf32>
    %cst_23 = arith.constant dense<0.000000e+00> : vector<8x32xf32>
    %41 = vector.multi_reduction <add>, %40, %cst_23 [0] : vector<2x8x32xf32> to vector<8x32xf32>
    %c0_24 = arith.constant 0 : index
    %c0_25 = arith.constant 0 : index
    %c0_26 = arith.constant 0 : index
    %42 = vector.load %arg6[%c0_24, %c0_25, %c0_26] : memref<2x1x32xf32, #tpu.memory_space<vmem>>, vector<1x1x32xf32>
    %43 = vector.shape_cast %42 : vector<1x1x32xf32> to vector<32xf32>
    %44 = vector.shape_cast %43 : vector<32xf32> to vector<1x32xf32>
    %45 = vector.broadcast %44 : vector<1x32xf32> to vector<8x32xf32>
    %46 = arith.addf %41, %45 : vector<8x32xf32>
    %47 = arith.addf %3, %46 : vector<8x32xf32>
    %c0_27 = arith.constant 0 : index
    %c0_28 = arith.constant 0 : index
    %c0_29 = arith.constant 0 : index
    %48 = vector.load %arg7[%c0_27, %c0_28, %c0_29] : memref<2x1x32xf32, #tpu.memory_space<vmem>>, vector<1x1x32xf32>
    %49 = vector.shape_cast %48 : vector<1x1x32xf32> to vector<32xf32>
    %c0_30 = arith.constant 0 : index
    %c0_31 = arith.constant 0 : index
    %c0_32 = arith.constant 0 : index
    %50 = vector.load %arg8[%c0_30, %c0_31, %c0_32] : memref<2x1x32xf32, #tpu.memory_space<vmem>>, vector<1x1x32xf32>
    %51 = vector.shape_cast %50 : vector<1x1x32xf32> to vector<32xf32>
    %cst_33 = arith.constant dense<0.000000e+00> : vector<8xf32>
    %52 = vector.multi_reduction <add>, %47, %cst_33 [1] : vector<8x32xf32> to vector<8xf32>
    %53 = vector.shape_cast %52 : vector<8xf32> to vector<8x1xf32>
    %cst_34 = arith.constant 3.200000e+01 : f32
    %54 = vector.broadcast %cst_34 : f32 to vector<8x1xf32>
    %55 = arith.divf %53, %54 : vector<8x1xf32>
    %56 = vector.broadcast %55 : vector<8x1xf32> to vector<8x32xf32>
    %57 = arith.subf %47, %56 : vector<8x32xf32>
    %58 = arith.mulf %57, %57 : vector<8x32xf32>
    %cst_35 = arith.constant dense<0.000000e+00> : vector<8xf32>
    %59 = vector.multi_reduction <add>, %58, %cst_35 [1] : vector<8x32xf32> to vector<8xf32>
    %60 = vector.shape_cast %59 : vector<8xf32> to vector<8x1xf32>
    %cst_36 = arith.constant 3.200000e+01 : f32
    %61 = vector.broadcast %cst_36 : f32 to vector<8x1xf32>
    %62 = arith.divf %60, %61 : vector<8x1xf32>
    %63 = vector.broadcast %55 : vector<8x1xf32> to vector<8x32xf32>
    %64 = arith.subf %47, %63 : vector<8x32xf32>
    %cst_37 = arith.constant 9.99999997E-7 : f32
    %65 = vector.broadcast %cst_37 : f32 to vector<8x1xf32>
    %66 = arith.addf %62, %65 : vector<8x1xf32>
    %67 = math.rsqrt %66 : vector<8x1xf32>
    %68 = vector.broadcast %67 : vector<8x1xf32> to vector<8x32xf32>
    %69 = arith.mulf %64, %68 : vector<8x32xf32>
    %70 = vector.shape_cast %49 : vector<32xf32> to vector<1x32xf32>
    %71 = vector.broadcast %70 : vector<1x32xf32> to vector<8x32xf32>
    %72 = arith.mulf %69, %71 : vector<8x32xf32>
    %73 = vector.shape_cast %51 : vector<32xf32> to vector<1x32xf32>
    %74 = vector.broadcast %73 : vector<1x32xf32> to vector<8x32xf32>
    %75 = arith.addf %72, %74 : vector<8x32xf32>
    %c0_38 = arith.constant 0 : index
    %c0_39 = arith.constant 0 : index
    %c0_40 = arith.constant 0 : index
    %76 = vector.load %arg9[%c0_38, %c0_39, %c0_40] : memref<2x32x64xf32, #tpu.memory_space<vmem>>, vector<1x32x64xf32>
    %77 = vector.shape_cast %76 : vector<1x32x64xf32> to vector<32x64xf32>
    %cst_41 = arith.constant dense<0.000000e+00> : vector<8x64xf32>
    %78 = tpu.matmul %75, %77, %cst_41 {dimension_numbers = #tpu.dot_dimension_numbers<[1], [0], [0], [1], [0, 0, 1, 1], [], []>} : vector<8x32xf32>, vector<32x64xf32>, vector<8x64xf32> -> vector<8x64xf32>
    %c0_42 = arith.constant 0 : index
    %c0_43 = arith.constant 0 : index
    %c0_44 = arith.constant 0 : index
    %79 = vector.load %arg10[%c0_42, %c0_43, %c0_44] : memref<2x1x64xf32, #tpu.memory_space<vmem>>, vector<1x1x64xf32>
    %80 = vector.shape_cast %79 : vector<1x1x64xf32> to vector<64xf32>
    %81 = vector.shape_cast %80 : vector<64xf32> to vector<1x64xf32>
    %82 = vector.broadcast %81 : vector<1x64xf32> to vector<8x64xf32>
    %83 = arith.addf %78, %82 : vector<8x64xf32>
    %cst_45 = arith.constant 5.000000e-01 : f32
    %84 = vector.broadcast %cst_45 : f32 to vector<8x64xf32>
    %85 = arith.mulf %84, %83 : vector<8x64xf32>
    %cst_46 = arith.constant 1.41421354 : f32
    %86 = vector.broadcast %cst_46 : f32 to vector<8x64xf32>
    %87 = arith.divf %83, %86 : vector<8x64xf32>
    %88 = math.erf %87 : vector<8x64xf32>
    %cst_47 = arith.constant 1.000000e+00 : f32
    %89 = vector.broadcast %cst_47 : f32 to vector<8x64xf32>
    %90 = arith.addf %89, %88 : vector<8x64xf32>
    %91 = arith.mulf %85, %90 : vector<8x64xf32>
    %c0_48 = arith.constant 0 : index
    %c0_49 = arith.constant 0 : index
    %c0_50 = arith.constant 0 : index
    %92 = vector.load %arg11[%c0_48, %c0_49, %c0_50] : memref<2x64x32xf32, #tpu.memory_space<vmem>>, vector<1x64x32xf32>
    %93 = vector.shape_cast %92 : vector<1x64x32xf32> to vector<64x32xf32>
    %cst_51 = arith.constant dense<0.000000e+00> : vector<8x32xf32>
    %94 = tpu.matmul %91, %93, %cst_51 {dimension_numbers = #tpu.dot_dimension_numbers<[1], [0], [0], [1], [0, 0, 1, 1], [], []>} : vector<8x64xf32>, vector<64x32xf32>, vector<8x32xf32> -> vector<8x32xf32>
    %c0_52 = arith.constant 0 : index
    %c0_53 = arith.constant 0 : index
    %c0_54 = arith.constant 0 : index
    %95 = vector.load %arg12[%c0_52, %c0_53, %c0_54] : memref<2x1x32xf32, #tpu.memory_space<vmem>>, vector<1x1x32xf32>
    %96 = vector.shape_cast %95 : vector<1x1x32xf32> to vector<32xf32>
    %97 = vector.shape_cast %96 : vector<32xf32> to vector<1x32xf32>
    %98 = vector.broadcast %97 : vector<1x32xf32> to vector<8x32xf32>
    %99 = arith.addf %94, %98 : vector<8x32xf32>
    %100 = arith.addf %75, %99 : vector<8x32xf32>
    %c0_55 = arith.constant 0 : index
    %c0_56 = arith.constant 0 : index
    %c0_57 = arith.constant 0 : index
    %101 = vector.load %arg13[%c0_55, %c0_56, %c0_57] : memref<2x1x32xf32, #tpu.memory_space<vmem>>, vector<1x1x32xf32>
    %102 = vector.shape_cast %101 : vector<1x1x32xf32> to vector<32xf32>
    %c0_58 = arith.constant 0 : index
    %c0_59 = arith.constant 0 : index
    %c0_60 = arith.constant 0 : index
    %103 = vector.load %arg14[%c0_58, %c0_59, %c0_60] : memref<2x1x32xf32, #tpu.memory_space<vmem>>, vector<1x1x32xf32>
    %104 = vector.shape_cast %103 : vector<1x1x32xf32> to vector<32xf32>
    %cst_61 = arith.constant dense<0.000000e+00> : vector<8xf32>
    %105 = vector.multi_reduction <add>, %100, %cst_61 [1] : vector<8x32xf32> to vector<8xf32>
    %106 = vector.shape_cast %105 : vector<8xf32> to vector<8x1xf32>
    %cst_62 = arith.constant 3.200000e+01 : f32
    %107 = vector.broadcast %cst_62 : f32 to vector<8x1xf32>
    %108 = arith.divf %106, %107 : vector<8x1xf32>
    %109 = vector.broadcast %108 : vector<8x1xf32> to vector<8x32xf32>
    %110 = arith.subf %100, %109 : vector<8x32xf32>
    %111 = arith.mulf %110, %110 : vector<8x32xf32>
    %cst_63 = arith.constant dense<0.000000e+00> : vector<8xf32>
    %112 = vector.multi_reduction <add>, %111, %cst_63 [1] : vector<8x32xf32> to vector<8xf32>
    %113 = vector.shape_cast %112 : vector<8xf32> to vector<8x1xf32>
    %cst_64 = arith.constant 3.200000e+01 : f32
    %114 = vector.broadcast %cst_64 : f32 to vector<8x1xf32>
    %115 = arith.divf %113, %114 : vector<8x1xf32>
    %116 = vector.broadcast %108 : vector<8x1xf32> to vector<8x32xf32>
    %117 = arith.subf %100, %116 : vector<8x32xf32>
    %cst_65 = arith.constant 9.99999997E-7 : f32
    %118 = vector.broadcast %cst_65 : f32 to vector<8x1xf32>
    %119 = arith.addf %115, %118 : vector<8x1xf32>
    %120 = math.rsqrt %119 : vector<8x1xf32>
    %121 = vector.broadcast %120 : vector<8x1xf32> to vector<8x32xf32>
    %122 = arith.mulf %117, %121 : vector<8x32xf32>
    %123 = vector.shape_cast %102 : vector<32xf32> to vector<1x32xf32>
    %124 = vector.broadcast %123 : vector<1x32xf32> to vector<8x32xf32>
    %125 = arith.mulf %122, %124 : vector<8x32xf32>
    %126 = vector.shape_cast %104 : vector<32xf32> to vector<1x32xf32>
    %127 = vector.broadcast %126 : vector<1x32xf32> to vector<8x32xf32>
    %128 = arith.addf %125, %127 : vector<8x32xf32>
    %129 = vector.extract_strided_slice %36 {offsets = [0, 0, 0], sizes = [1, 8, 8], strides = [1, 1, 1]} : vector<2x8x8xf32> to vector<1x8x8xf32>
    %130 = vector.shape_cast %129 : vector<1x8x8xf32> to vector<8x8xf32>
    %131 = vector.extract_strided_slice %36 {offsets = [1, 0, 0], sizes = [1, 8, 8], strides = [1, 1, 1]} : vector<2x8x8xf32> to vector<1x8x8xf32>
    %132 = vector.shape_cast %131 : vector<1x8x8xf32> to vector<8x8xf32>
    %133 = tpu.concatenate %130, %132 in 1 : vector<8x8xf32>, vector<8x8xf32> -> vector<8x16xf32>
    %134 = vector.shape_cast %128 : vector<8x32xf32> to vector<1x8x32xf32>
    %135 = vector.broadcast %134 : vector<1x8x32xf32> to vector<6x8x32xf32>
    %c1 = arith.constant 1 : index
    %c0_66 = arith.constant 0 : index
    %c0_67 = arith.constant 0 : index
    %c0_68 = arith.constant 0 : index
    %136 = vector.load %arg3[%c1, %c0_66, %c0_67, %c0_68] : memref<2x6x32x16xf32, #tpu.memory_space<vmem>>, vector<1x6x32x16xf32>
    %137 = vector.shape_cast %136 : vector<1x6x32x16xf32> to vector<6x32x16xf32>
    %cst_69 = arith.constant dense<0.000000e+00> : vector<6x8x16xf32>
    %138 = tpu.matmul %135, %137, %cst_69 {dimension_numbers = #tpu.dot_dimension_numbers<[2], [1], [1], [2], [0, 0, 0, 1, 1, 2], [0], [0]>} : vector<6x8x32xf32>, vector<6x32x16xf32>, vector<6x8x16xf32> -> vector<6x8x16xf32>
    %c1_70 = arith.constant 1 : index
    %c0_71 = arith.constant 0 : index
    %c0_72 = arith.constant 0 : index
    %c0_73 = arith.constant 0 : index
    %139 = vector.load %arg4[%c1_70, %c0_71, %c0_72, %c0_73] : memref<2x6x1x16xf32, #tpu.memory_space<vmem>>, vector<1x6x1x16xf32>
    %140 = vector.shape_cast %139 : vector<1x6x1x16xf32> to vector<6x1x16xf32>
    %141 = vector.broadcast %140 : vector<6x1x16xf32> to vector<6x8x16xf32>
    %142 = arith.addf %138, %141 : vector<6x8x16xf32>
    %143 = vector.extract_strided_slice %142 {offsets = [0, 0, 0], sizes = [2, 8, 16], strides = [1, 1, 1]} : vector<6x8x16xf32> to vector<2x8x16xf32>
    %cst_74 = arith.constant 2.500000e-01 : f32
    %144 = vector.broadcast %cst_74 : f32 to vector<2x8x16xf32>
    %145 = arith.mulf %143, %144 : vector<2x8x16xf32>
    %146 = vector.extract_strided_slice %142 {offsets = [2, 0, 0], sizes = [2, 8, 16], strides = [1, 1, 1]} : vector<6x8x16xf32> to vector<2x8x16xf32>
    %147 = vector.extract_strided_slice %142 {offsets = [4, 0, 0], sizes = [2, 8, 16], strides = [1, 1, 1]} : vector<6x8x16xf32> to vector<2x8x16xf32>
    %cst_75 = arith.constant dense<0.000000e+00> : vector<2x8x8xf32>
    %148 = tpu.matmul %145, %146, %cst_75 {dimension_numbers = #tpu.dot_dimension_numbers<[2], [2], [1], [1], [0, 0, 0, 1, 1, 1], [0], [0]>} : vector<2x8x16xf32>, vector<2x8x16xf32>, vector<2x8x8xf32> -> vector<2x8x8xf32>
    %cst_76 = arith.constant -1.000000e+09 : f32
    %149 = vector.shape_cast %7 : vector<1x8x8xi1> to vector<1x8x8xi1>
    %150 = vector.broadcast %149 : vector<1x8x8xi1> to vector<2x8x8xi1>
    %151 = vector.broadcast %cst_76 : f32 to vector<2x8x8xf32>
    %152 = arith.select %150, %151, %148 : vector<2x8x8xi1>, vector<2x8x8xf32>
    %cst_77 = arith.constant dense<0xFF800000> : vector<2x8xf32>
    %153 = vector.multi_reduction <maximumf>, %152, %cst_77 [2] : vector<2x8x8xf32> to vector<2x8xf32>
    %154 = vector.shape_cast %153 : vector<2x8xf32> to vector<2x8x1xf32>
    %155 = vector.broadcast %154 : vector<2x8x1xf32> to vector<2x8x8xf32>
    %156 = arith.subf %152, %155 : vector<2x8x8xf32>
    %157 = math.exp %156 : vector<2x8x8xf32>
    %cst_78 = arith.constant dense<0.000000e+00> : vector<2x8xf32>
    %158 = vector.multi_reduction <add>, %157, %cst_78 [2] : vector<2x8x8xf32> to vector<2x8xf32>
    %159 = vector.shape_cast %158 : vector<2x8xf32> to vector<2x8x1xf32>
    %160 = tpu.reciprocal %159 {approx = true} : vector<2x8x1xf32> -> vector<2x8x1xf32>
    %161 = vector.broadcast %160 : vector<2x8x1xf32> to vector<2x8x8xf32>
    %162 = arith.mulf %157, %161 : vector<2x8x8xf32>
    %cst_79 = arith.constant dense<0.000000e+00> : vector<2x8x16xf32>
    %163 = tpu.matmul %162, %147, %cst_79 {dimension_numbers = #tpu.dot_dimension_numbers<[2], [1], [1], [2], [0, 0, 0, 1, 1, 2], [0], [0]>} : vector<2x8x8xf32>, vector<2x8x16xf32>, vector<2x8x16xf32> -> vector<2x8x16xf32>
    %c1_80 = arith.constant 1 : index
    %c0_81 = arith.constant 0 : index
    %c0_82 = arith.constant 0 : index
    %c0_83 = arith.constant 0 : index
    %164 = vector.load %arg5[%c1_80, %c0_81, %c0_82, %c0_83] : memref<2x2x16x32xf32, #tpu.memory_space<vmem>>, vector<1x2x16x32xf32>
    %165 = vector.shape_cast %164 : vector<1x2x16x32xf32> to vector<2x16x32xf32>
    %cst_84 = arith.constant dense<0.000000e+00> : vector<2x8x32xf32>
    %166 = tpu.matmul %163, %165, %cst_84 {dimension_numbers = #tpu.dot_dimension_numbers<[2], [1], [1], [2], [0, 0, 0, 1, 1, 2], [0], [0]>} : vector<2x8x16xf32>, vector<2x16x32xf32>, vector<2x8x32xf32> -> vector<2x8x32xf32>
    %cst_85 = arith.constant dense<0.000000e+00> : vector<8x32xf32>
    %167 = vector.multi_reduction <add>, %166, %cst_85 [0] : vector<2x8x32xf32> to vector<8x32xf32>
    %c1_86 = arith.constant 1 : index
    %c0_87 = arith.constant 0 : index
    %c0_88 = arith.constant 0 : index
    %168 = vector.load %arg6[%c1_86, %c0_87, %c0_88] : memref<2x1x32xf32, #tpu.memory_space<vmem>>, vector<1x1x32xf32>
    %169 = vector.shape_cast %168 : vector<1x1x32xf32> to vector<32xf32>
    %170 = vector.shape_cast %169 : vector<32xf32> to vector<1x32xf32>
    %171 = vector.broadcast %170 : vector<1x32xf32> to vector<8x32xf32>
    %172 = arith.addf %167, %171 : vector<8x32xf32>
    %173 = arith.addf %128, %172 : vector<8x32xf32>
    %c1_89 = arith.constant 1 : index
    %c0_90 = arith.constant 0 : index
    %c0_91 = arith.constant 0 : index
    %174 = vector.load %arg7[%c1_89, %c0_90, %c0_91] : memref<2x1x32xf32, #tpu.memory_space<vmem>>, vector<1x1x32xf32>
    %175 = vector.shape_cast %174 : vector<1x1x32xf32> to vector<32xf32>
    %c1_92 = arith.constant 1 : index
    %c0_93 = arith.constant 0 : index
    %c0_94 = arith.constant 0 : index
    %176 = vector.load %arg8[%c1_92, %c0_93, %c0_94] : memref<2x1x32xf32, #tpu.memory_space<vmem>>, vector<1x1x32xf32>
    %177 = vector.shape_cast %176 : vector<1x1x32xf32> to vector<32xf32>
    %cst_95 = arith.constant dense<0.000000e+00> : vector<8xf32>
    %178 = vector.multi_reduction <add>, %173, %cst_95 [1] : vector<8x32xf32> to vector<8xf32>
    %179 = vector.shape_cast %178 : vector<8xf32> to vector<8x1xf32>
    %cst_96 = arith.constant 3.200000e+01 : f32
    %180 = vector.broadcast %cst_96 : f32 to vector<8x1xf32>
    %181 = arith.divf %179, %180 : vector<8x1xf32>
    %182 = vector.broadcast %181 : vector<8x1xf32> to vector<8x32xf32>
    %183 = arith.subf %173, %182 : vector<8x32xf32>
    %184 = arith.mulf %183, %183 : vector<8x32xf32>
    %cst_97 = arith.constant dense<0.000000e+00> : vector<8xf32>
    %185 = vector.multi_reduction <add>, %184, %cst_97 [1] : vector<8x32xf32> to vector<8xf32>
    %186 = vector.shape_cast %185 : vector<8xf32> to vector<8x1xf32>
    %cst_98 = arith.constant 3.200000e+01 : f32
    %187 = vector.broadcast %cst_98 : f32 to vector<8x1xf32>
    %188 = arith.divf %186, %187 : vector<8x1xf32>
    %189 = vector.broadcast %181 : vector<8x1xf32> to vector<8x32xf32>
    %190 = arith.subf %173, %189 : vector<8x32xf32>
    %cst_99 = arith.constant 9.99999997E-7 : f32
    %191 = vector.broadcast %cst_99 : f32 to vector<8x1xf32>
    %192 = arith.addf %188, %191 : vector<8x1xf32>
    %193 = math.rsqrt %192 : vector<8x1xf32>
    %194 = vector.broadcast %193 : vector<8x1xf32> to vector<8x32xf32>
    %195 = arith.mulf %190, %194 : vector<8x32xf32>
    %196 = vector.shape_cast %175 : vector<32xf32> to vector<1x32xf32>
    %197 = vector.broadcast %196 : vector<1x32xf32> to vector<8x32xf32>
    %198 = arith.mulf %195, %197 : vector<8x32xf32>
    %199 = vector.shape_cast %177 : vector<32xf32> to vector<1x32xf32>
    %200 = vector.broadcast %199 : vector<1x32xf32> to vector<8x32xf32>
    %201 = arith.addf %198, %200 : vector<8x32xf32>
    %c1_100 = arith.constant 1 : index
    %c0_101 = arith.constant 0 : index
    %c0_102 = arith.constant 0 : index
    %202 = vector.load %arg9[%c1_100, %c0_101, %c0_102] : memref<2x32x64xf32, #tpu.memory_space<vmem>>, vector<1x32x64xf32>
    %203 = vector.shape_cast %202 : vector<1x32x64xf32> to vector<32x64xf32>
    %cst_103 = arith.constant dense<0.000000e+00> : vector<8x64xf32>
    %204 = tpu.matmul %201, %203, %cst_103 {dimension_numbers = #tpu.dot_dimension_numbers<[1], [0], [0], [1], [0, 0, 1, 1], [], []>} : vector<8x32xf32>, vector<32x64xf32>, vector<8x64xf32> -> vector<8x64xf32>
    %c1_104 = arith.constant 1 : index
    %c0_105 = arith.constant 0 : index
    %c0_106 = arith.constant 0 : index
    %205 = vector.load %arg10[%c1_104, %c0_105, %c0_106] : memref<2x1x64xf32, #tpu.memory_space<vmem>>, vector<1x1x64xf32>
    %206 = vector.shape_cast %205 : vector<1x1x64xf32> to vector<64xf32>
    %207 = vector.shape_cast %206 : vector<64xf32> to vector<1x64xf32>
    %208 = vector.broadcast %207 : vector<1x64xf32> to vector<8x64xf32>
    %209 = arith.addf %204, %208 : vector<8x64xf32>
    %cst_107 = arith.constant 5.000000e-01 : f32
    %210 = vector.broadcast %cst_107 : f32 to vector<8x64xf32>
    %211 = arith.mulf %210, %209 : vector<8x64xf32>
    %cst_108 = arith.constant 1.41421354 : f32
    %212 = vector.broadcast %cst_108 : f32 to vector<8x64xf32>
    %213 = arith.divf %209, %212 : vector<8x64xf32>
    %214 = math.erf %213 : vector<8x64xf32>
    %cst_109 = arith.constant 1.000000e+00 : f32
    %215 = vector.broadcast %cst_109 : f32 to vector<8x64xf32>
    %216 = arith.addf %215, %214 : vector<8x64xf32>
    %217 = arith.mulf %211, %216 : vector<8x64xf32>
    %c1_110 = arith.constant 1 : index
    %c0_111 = arith.constant 0 : index
    %c0_112 = arith.constant 0 : index
    %218 = vector.load %arg11[%c1_110, %c0_111, %c0_112] : memref<2x64x32xf32, #tpu.memory_space<vmem>>, vector<1x64x32xf32>
    %219 = vector.shape_cast %218 : vector<1x64x32xf32> to vector<64x32xf32>
    %cst_113 = arith.constant dense<0.000000e+00> : vector<8x32xf32>
    %220 = tpu.matmul %217, %219, %cst_113 {dimension_numbers = #tpu.dot_dimension_numbers<[1], [0], [0], [1], [0, 0, 1, 1], [], []>} : vector<8x64xf32>, vector<64x32xf32>, vector<8x32xf32> -> vector<8x32xf32>
    %c1_114 = arith.constant 1 : index
    %c0_115 = arith.constant 0 : index
    %c0_116 = arith.constant 0 : index
    %221 = vector.load %arg12[%c1_114, %c0_115, %c0_116] : memref<2x1x32xf32, #tpu.memory_space<vmem>>, vector<1x1x32xf32>
    %222 = vector.shape_cast %221 : vector<1x1x32xf32> to vector<32xf32>
    %223 = vector.shape_cast %222 : vector<32xf32> to vector<1x32xf32>
    %224 = vector.broadcast %223 : vector<1x32xf32> to vector<8x32xf32>
    %225 = arith.addf %220, %224 : vector<8x32xf32>
    %226 = arith.addf %201, %225 : vector<8x32xf32>
    %c1_117 = arith.constant 1 : index
    %c0_118 = arith.constant 0 : index
    %c0_119 = arith.constant 0 : index
    %227 = vector.load %arg13[%c1_117, %c0_118, %c0_119] : memref<2x1x32xf32, #tpu.memory_space<vmem>>, vector<1x1x32xf32>
    %228 = vector.shape_cast %227 : vector<1x1x32xf32> to vector<32xf32>
    %c1_120 = arith.constant 1 : index
    %c0_121 = arith.constant 0 : index
    %c0_122 = arith.constant 0 : index
    %229 = vector.load %arg14[%c1_120, %c0_121, %c0_122] : memref<2x1x32xf32, #tpu.memory_space<vmem>>, vector<1x1x32xf32>
    %230 = vector.shape_cast %229 : vector<1x1x32xf32> to vector<32xf32>
    %cst_123 = arith.constant dense<0.000000e+00> : vector<8xf32>
    %231 = vector.multi_reduction <add>, %226, %cst_123 [1] : vector<8x32xf32> to vector<8xf32>
    %232 = vector.shape_cast %231 : vector<8xf32> to vector<8x1xf32>
    %cst_124 = arith.constant 3.200000e+01 : f32
    %233 = vector.broadcast %cst_124 : f32 to vector<8x1xf32>
    %234 = arith.divf %232, %233 : vector<8x1xf32>
    %235 = vector.broadcast %234 : vector<8x1xf32> to vector<8x32xf32>
    %236 = arith.subf %226, %235 : vector<8x32xf32>
    %237 = arith.mulf %236, %236 : vector<8x32xf32>
    %cst_125 = arith.constant dense<0.000000e+00> : vector<8xf32>
    %238 = vector.multi_reduction <add>, %237, %cst_125 [1] : vector<8x32xf32> to vector<8xf32>
    %239 = vector.shape_cast %238 : vector<8xf32> to vector<8x1xf32>
    %cst_126 = arith.constant 3.200000e+01 : f32
    %240 = vector.broadcast %cst_126 : f32 to vector<8x1xf32>
    %241 = arith.divf %239, %240 : vector<8x1xf32>
    %242 = vector.broadcast %234 : vector<8x1xf32> to vector<8x32xf32>
    %243 = arith.subf %226, %242 : vector<8x32xf32>
    %cst_127 = arith.constant 9.99999997E-7 : f32
    %244 = vector.broadcast %cst_127 : f32 to vector<8x1xf32>
    %245 = arith.addf %241, %244 : vector<8x1xf32>
    %246 = math.rsqrt %245 : vector<8x1xf32>
    %247 = vector.broadcast %246 : vector<8x1xf32> to vector<8x32xf32>
    %248 = arith.mulf %243, %247 : vector<8x32xf32>
    %249 = vector.shape_cast %228 : vector<32xf32> to vector<1x32xf32>
    %250 = vector.broadcast %249 : vector<1x32xf32> to vector<8x32xf32>
    %251 = arith.mulf %248, %250 : vector<8x32xf32>
    %252 = vector.shape_cast %230 : vector<32xf32> to vector<1x32xf32>
    %253 = vector.broadcast %252 : vector<1x32xf32> to vector<8x32xf32>
    %254 = arith.addf %251, %253 : vector<8x32xf32>
    %255 = vector.extract_strided_slice %162 {offsets = [0, 0, 0], sizes = [1, 8, 8], strides = [1, 1, 1]} : vector<2x8x8xf32> to vector<1x8x8xf32>
    %256 = vector.shape_cast %255 : vector<1x8x8xf32> to vector<8x8xf32>
    %257 = vector.extract_strided_slice %162 {offsets = [1, 0, 0], sizes = [1, 8, 8], strides = [1, 1, 1]} : vector<2x8x8xf32> to vector<1x8x8xf32>
    %258 = vector.shape_cast %257 : vector<1x8x8xf32> to vector<8x8xf32>
    %259 = tpu.concatenate %256, %258 in 1 : vector<8x8xf32>, vector<8x8xf32> -> vector<8x16xf32>
    %c0_128 = arith.constant 0 : index
    %c0_129 = arith.constant 0 : index
    %c0_130 = arith.constant 0 : index
    %260 = vector.load %arg15[%c0_128, %c0_129, %c0_130] : memref<1x8x32xf32, #tpu.memory_space<vmem>>, vector<1x8x32xf32>
    %261 = vector.shape_cast %260 : vector<1x8x32xf32> to vector<8x32xf32>
    %262 = vector.shape_cast %254 : vector<8x32xf32> to vector<1x8x32xf32>
    tpu.vector_store %arg15[%c0_128, %c0_129, %c0_130], %262 {strides = array<i32>} : memref<1x8x32xf32, #tpu.memory_space<vmem>>, vector<1x8x32xf32>,
    %263 = tpu.concatenate %133, %259 in 1 : vector<8x16xf32>, vector<8x16xf32> -> vector<8x32xf32>
    %c0_131 = arith.constant 0 : index
    %c0_132 = arith.constant 0 : index
    %c0_133 = arith.constant 0 : index
    %264 = vector.load %arg16[%c0_131, %c0_132, %c0_133] : memref<1x8x32xf32, #tpu.memory_space<vmem>>, vector<1x8x32xf32>
    %265 = vector.shape_cast %264 : vector<1x8x32xf32> to vector<8x32xf32>
    %266 = vector.shape_cast %263 : vector<8x32xf32> to vector<1x8x32xf32>
    tpu.vector_store %arg16[%c0_131, %c0_132, %c0_133], %266 {strides = array<i32>} : memref<1x8x32xf32, #tpu.memory_space<vmem>>, vector<1x8x32xf32>,
    return
  }
  func.func @transform_0(%arg0: i32) -> (i32, i32, i32) {
    %c0_i32 = arith.constant 0 : i32
    %c0_i32_0 = arith.constant 0 : i32
    %c0_i32_1 = arith.constant 0 : i32
    return %arg0, %c0_i32, %c0_i32_0 : i32, i32, i32
  }
  func.func @transform_1(%arg0: i32) -> (i32, i32) {
    %c0_i32 = arith.constant 0 : i32
    %c0_i32_0 = arith.constant 0 : i32
    %c0_i32_1 = arith.constant 0 : i32
    return %c0_i32, %c0_i32_0 : i32, i32
  }
  func.func @transform_2(%arg0: i32) -> (i32, i32, i32, i32) {
    %c0_i32 = arith.constant 0 : i32
    %c0_i32_0 = arith.constant 0 : i32
    %c0_i32_1 = arith.constant 0 : i32
    %c0_i32_2 = arith.constant 0 : i32
    %c0_i32_3 = arith.constant 0 : i32
    return %c0_i32, %c0_i32_0, %c0_i32_1, %c0_i32_2 : i32, i32, i32, i32
  }
  func.func @transform_3(%arg0: i32) -> (i32, i32, i32, i32) {
    %c0_i32 = arith.constant 0 : i32
    %c0_i32_0 = arith.constant 0 : i32
    %c0_i32_1 = arith.constant 0 : i32
    %c0_i32_2 = arith.constant 0 : i32
    %c0_i32_3 = arith.constant 0 : i32
    return %c0_i32, %c0_i32_0, %c0_i32_1, %c0_i32_2 : i32, i32, i32, i32
  }
  func.func @transform_4(%arg0: i32) -> (i32, i32, i32, i32) {
    %c0_i32 = arith.constant 0 : i32
    %c0_i32_0 = arith.constant 0 : i32
    %c0_i32_1 = arith.constant 0 : i32
    %c0_i32_2 = arith.constant 0 : i32
    %c0_i32_3 = arith.constant 0 : i32
    return %c0_i32, %c0_i32_0, %c0_i32_1, %c0_i32_2 : i32, i32, i32, i32
  }
  func.func @transform_5(%arg0: i32) -> (i32, i32, i32) {
    %c0_i32 = arith.constant 0 : i32
    %c0_i32_0 = arith.constant 0 : i32
    %c0_i32_1 = arith.constant 0 : i32
    %c0_i32_2 = arith.constant 0 : i32
    return %c0_i32, %c0_i32_0, %c0_i32_1 : i32, i32, i32
  }
  func.func @transform_6(%arg0: i32) -> (i32, i32, i32) {
    %c0_i32 = arith.constant 0 : i32
    %c0_i32_0 = arith.constant 0 : i32
    %c0_i32_1 = arith.constant 0 : i32
    %c0_i32_2 = arith.constant 0 : i32
    return %c0_i32, %c0_i32_0, %c0_i32_1 : i32, i32, i32
  }
  func.func @transform_7(%arg0: i32) -> (i32, i32, i32) {
    %c0_i32 = arith.constant 0 : i32
    %c0_i32_0 = arith.constant 0 : i32
    %c0_i32_1 = arith.constant 0 : i32
    %c0_i32_2 = arith.constant 0 : i32
    return %c0_i32, %c0_i32_0, %c0_i32_1 : i32, i32, i32
  }
  func.func @transform_8(%arg0: i32) -> (i32, i32, i32) {
    %c0_i32 = arith.constant 0 : i32
    %c0_i32_0 = arith.constant 0 : i32
    %c0_i32_1 = arith.constant 0 : i32
    %c0_i32_2 = arith.constant 0 : i32
    return %c0_i32, %c0_i32_0, %c0_i32_1 : i32, i32, i32
  }
  func.func @transform_9(%arg0: i32) -> (i32, i32, i32) {
    %c0_i32 = arith.constant 0 : i32
    %c0_i32_0 = arith.constant 0 : i32
    %c0_i32_1 = arith.constant 0 : i32
    %c0_i32_2 = arith.constant 0 : i32
    return %c0_i32, %c0_i32_0, %c0_i32_1 : i32, i32, i32
  }
  func.func @transform_10(%arg0: i32) -> (i32, i32, i32) {
    %c0_i32 = arith.constant 0 : i32
    %c0_i32_0 = arith.constant 0 : i32
    %c0_i32_1 = arith.constant 0 : i32
    %c0_i32_2 = arith.constant 0 : i32
    return %c0_i32, %c0_i32_0, %c0_i32_1 : i32, i32, i32
  }
  func.func @transform_11(%arg0: i32) -> (i32, i32, i32) {
    %c0_i32 = arith.constant 0 : i32
    %c0_i32_0 = arith.constant 0 : i32
    %c0_i32_1 = arith.constant 0 : i32
    %c0_i32_2 = arith.constant 0 : i32
    return %c0_i32, %c0_i32_0, %c0_i32_1 : i32, i32, i32
  }
  func.func @transform_12(%arg0: i32) -> (i32, i32, i32) {
    %c0_i32 = arith.constant 0 : i32
    %c0_i32_0 = arith.constant 0 : i32
    %c0_i32_1 = arith.constant 0 : i32
    %c0_i32_2 = arith.constant 0 : i32
    return %c0_i32, %c0_i32_0, %c0_i32_1 : i32, i32, i32
  }
  func.func @transform_13(%arg0: i32) -> (i32, i32, i32) {
    %c0_i32 = arith.constant 0 : i32
    %c0_i32_0 = arith.constant 0 : i32
    %c0_i32_1 = arith.constant 0 : i32
    %c0_i32_2 = arith.constant 0 : i32
    return %c0_i32, %c0_i32_0, %c0_i32_1 : i32, i32, i32
  }
  func.func @transform_14(%arg0: i32) -> (i32, i32, i32) {
    %c0_i32 = arith.constant 0 : i32
    %c0_i32_0 = arith.constant 0 : i32
    %c0_i32_1 = arith.constant 0 : i32
    return %arg0, %c0_i32, %c0_i32_0 : i32, i32, i32
  }
  func.func @transform_15(%arg0: i32) -> (i32, i32, i32) {
    %c0_i32 = arith.constant 0 : i32
    %c0_i32_0 = arith.constant 0 : i32
    %c0_i32_1 = arith.constant 0 : i32
    return %arg0, %c0_i32, %c0_i32_0 : i32, i32, i32
  }
}

</mosaic_0001>

<llo_original>
// kernel: tpu_custom_call.1
$region0: #{tpu_custom_call.1}
  #allocation0 [shape = 'u32[]', space=smem, size = 0x4, offset = 0x4, fixed_abs, tag = 'smem constant byte address 0x4 - core index']
  #allocation1 [shape = 'u32[144,128]{1,0:T(1,128)}', space=vmem, size = 0x12000, scoped, tag = 'internal scratch']
  %s0 = inlined_call_operand.vmem [shape: f32[2,8,32], index: 0, kind: input, shape index: {}]
  %s1 = inlined_call_operand.vmem [shape: f32[8,32], index: 1, kind: input, shape index: {}]
  %s2 = inlined_call_operand.vmem [shape: f32[2,6,32,16], index: 2, kind: input, shape index: {}]
  %s3 = inlined_call_operand.vmem [shape: f32[2,6,1,16], index: 3, kind: input, shape index: {}]
  %s4 = inlined_call_operand.vmem [shape: f32[2,2,16,32], index: 4, kind: input, shape index: {}]
  %s5 = inlined_call_operand.vmem [shape: f32[2,1,32], index: 5, kind: input, shape index: {}]
  %s6 = inlined_call_operand.vmem [shape: f32[2,1,32], index: 6, kind: input, shape index: {}]
  %s7 = inlined_call_operand.vmem [shape: f32[2,1,32], index: 7, kind: input, shape index: {}]
  %s8 = inlined_call_operand.vmem [shape: f32[2,32,64], index: 8, kind: input, shape index: {}]
  %s9 = inlined_call_operand.vmem [shape: f32[2,1,64], index: 9, kind: input, shape index: {}]
  %s10 = inlined_call_operand.vmem [shape: f32[2,64,32], index: 10, kind: input, shape index: {}]
  %s11 = inlined_call_operand.vmem [shape: f32[2,1,32], index: 11, kind: input, shape index: {}]
  %s12 = inlined_call_operand.vmem [shape: f32[2,1,32], index: 12, kind: input, shape index: {}]
  %s13 = inlined_call_operand.vmem [shape: f32[2,1,32], index: 13, kind: input, shape index: {}]
  %s14 = inlined_call_operand.hbm [shape: f32[2,8,32], index: 14, kind: output, shape index: {0}]
  %s15 = inlined_call_operand.hbm [shape: f32[2,8,32], index: 15, kind: output, shape index: {1}]
  %16 = xla_tuple %s14, %s15
  %s17 = sld [smem:[#allocation0]]
  $region97: #{tpu_custom_call.1} parent=0
    _
  %s19 = ssub.s32 1, %s17
  %s20 = scalar_select 0, %s19, %s17
  $region1: #{tpu_custom_call.1} parent=0
    #allocation2 [shape = 'u8[8192]{0}', space=vmem, size = 0x2000, scoped, tag = 'output window, operand 0']
    #allocation3 [shape = 's32[2]{0}', space=sflag, size = 0x8, scoped, tag = 'scoped memory for tpu_custom_call.1']
    #allocation4 [shape = 'u8[8192]{0}', space=vmem, size = 0x2000, scoped, tag = 'output window, operand 1']
    #allocation5 [shape = 's32[2]{0}', space=sflag, size = 0x8, scoped, tag = 'scoped memory for tpu_custom_call.1']
    %21 = vsyncpa [#allocation3], 0
    %s22 = scalar_lea.sflag [#allocation3], 1
    %23 = vsyncpa %s22, 0
    %24 = vsyncpa [#allocation5], 0
    %s25 = scalar_lea.sflag [#allocation5], 1
    %26 = vsyncpa %s25, 0
    loop: start=0, step=1, limit=4
    $region2: #{tpu_custom_call.1} parent=1 // loop_pre_header
      _
    $region3: #{tpu_custom_call.1} parent=1 // loop_header
      %s28 = sphi 0, %s32
      %p29 = scmp.ge.s32.totalorder %s28, 4
      %s38 = sphi 0, %s40
      %s41 = sphi 0, %s38
      %s42 = sphi 0, %s41
      %s58 = sphi 0, %s42
      %s62 = sphi 0, %s62
      %s64 = sphi 0, %s62
      %s65 = sphi 0, %s64
      %s79 = sphi 0, %s65
      %s83 = sphi 0, %s83
      %s85 = sphi 0, %s83
      %s86 = sphi 0, %s85
      %s100 = sphi 0, %s86
      %s104 = sphi 0, %s104
      %s106 = sphi 0, %s104
      %s107 = sphi 0, %s106
      %s121 = sphi 0, %s107
      %s125 = sphi 0, %s125
      %s127 = sphi 0, %s125
      %s128 = sphi 0, %s127
      %s142 = sphi 0, %s128
      %s146 = sphi 0, %s146
      %s148 = sphi 0, %s146
      %s149 = sphi 0, %s148
      %s163 = sphi 0, %s149
      %s167 = sphi 0, %s167
      %s169 = sphi 0, %s167
      %s170 = sphi 0, %s169
      %s184 = sphi 0, %s170
      %s188 = sphi 0, %s188
      %s190 = sphi 0, %s188
      %s191 = sphi 0, %s190
      %s205 = sphi 0, %s191
      %s209 = sphi 0, %s209
      %s211 = sphi 0, %s209
      %s212 = sphi 0, %s211
      %s226 = sphi 0, %s212
      %s230 = sphi 0, %s230
      %s232 = sphi 0, %s230
      %s233 = sphi 0, %s232
      %s247 = sphi 0, %s233
      %s251 = sphi 0, %s251
      %s253 = sphi 0, %s251
      %s254 = sphi 0, %s253
      %s268 = sphi 0, %s254
      %s272 = sphi 0, %s272
      %s274 = sphi 0, %s272
      %s275 = sphi 0, %s274
      %s289 = sphi 0, %s275
      %s293 = sphi 0, %s293
      %s295 = sphi 0, %s293
      %s296 = sphi 0, %s295
      %s310 = sphi 0, %s296
      %s314 = sphi 0, %s314
      %s316 = sphi 0, %s314
      %s317 = sphi 0, %s316
      %s331 = sphi 0, %s317
      %s337 = sphi 0, %s339
      %s340 = sphi 0, %s337
      %s341 = sphi 0, %s340
      %s357 = sphi 0, %s341
      %s363 = sphi 0, %s365
      %s366 = sphi 0, %s363
      %s367 = sphi 0, %s366
      %s383 = sphi 0, %s367
    $region4: #{tpu_custom_call.1} parent=1 // loop_header_branch
      %31 = sbr.rel (%p29) target = $region8
    $region5: #{tpu_custom_call.1} parent=1 // loop_body
      %s33 = ssub.s32 %s28, 1
      %s34 = ssub.s32 %s28, 2
      %s35 = sadd.s32 %s28, 1
      %s36 = ssub.s32 %s28, %s35
      %p37 = scmp.eq.s32.totalorder %s36, 0
      %s39 = sadd.s32 %s38, 1
      %s40 = scalar_select %p37, %s38, %s39
      %p43 = pneg %p37
      %p44 = scmp.eq.s32.totalorder %s28, 1
      %p45 = por %p43, %p44
      %p46 = scmp.ne.s32.totalorder %s38, %s41
      %p47 = scmp.eq.s32.totalorder %s28, 0
      %p48 = por %p46, %p47
      %p49 = scmp.ne.s32.totalorder %s38, %s41
      %p50 = scmp.eq.s32.totalorder %s33, 1
      %p51 = por %p49, %p50
      %p52 = scmp.ne.s32.totalorder %s41, %s42
      %p53 = scmp.eq.s32.totalorder %s33, 0
      %p54 = por %p52, %p53
      %p55 = scmp.ne.s32.totalorder %s41, %s42
      %p56 = scmp.eq.s32.totalorder %s34, 1
      %p57 = por %p55, %p56
      %p59 = scmp.ne.s32.totalorder %s42, %s58
      %p60 = scmp.eq.s32.totalorder %s34, 0
      %p61 = por %p59, %p60
      %s63 = sadd.s32 %s62, 1
      %p66 = scmp.eq.s32.totalorder %s28, 1
      %p67 = scmp.ne.s32.totalorder %s62, %s64
      %p68 = scmp.eq.s32.totalorder %s28, 0
      %p69 = por %p67, %p68
      %p70 = scmp.ne.s32.totalorder %s62, %s64
      %p71 = scmp.eq.s32.totalorder %s33, 1
      %p72 = por %p70, %p71
      %p73 = scmp.ne.s32.totalorder %s64, %s65
      %p74 = scmp.eq.s32.totalorder %s33, 0
      %p75 = por %p73, %p74
      %p76 = scmp.ne.s32.totalorder %s64, %s65
      %p77 = scmp.eq.s32.totalorder %s34, 1
      %p78 = por %p76, %p77
      %p80 = scmp.ne.s32.totalorder %s65, %s79
      %p81 = scmp.eq.s32.totalorder %s34, 0
      %p82 = por %p80, %p81
      %s84 = sadd.s32 %s83, 1
      %p87 = scmp.eq.s32.totalorder %s28, 1
      %p88 = scmp.ne.s32.totalorder %s83, %s85
      %p89 = scmp.eq.s32.totalorder %s28, 0
      %p90 = por %p88, %p89
      %p91 = scmp.ne.s32.totalorder %s83, %s85
      %p92 = scmp.eq.s32.totalorder %s33, 1
      %p93 = por %p91, %p92
      %p94 = scmp.ne.s32.totalorder %s85, %s86
      %p95 = scmp.eq.s32.totalorder %s33, 0
      %p96 = por %p94, %p95
      %p97 = scmp.ne.s32.totalorder %s85, %s86
      %p98 = scmp.eq.s32.totalorder %s34, 1
      %p99 = por %p97, %p98
      %p101 = scmp.ne.s32.totalorder %s86, %s100
      %p102 = scmp.eq.s32.totalorder %s34, 0
      %p103 = por %p101, %p102
      %s105 = sadd.s32 %s104, 1
      %p108 = scmp.eq.s32.totalorder %s28, 1
      %p109 = scmp.ne.s32.totalorder %s104, %s106
      %p110 = scmp.eq.s32.totalorder %s28, 0
      %p111 = por %p109, %p110
      %p112 = scmp.ne.s32.totalorder %s104, %s106
      %p113 = scmp.eq.s32.totalorder %s33, 1
      %p114 = por %p112, %p113
      %p115 = scmp.ne.s32.totalorder %s106, %s107
      %p116 = scmp.eq.s32.totalorder %s33, 0
      %p117 = por %p115, %p116
      %p118 = scmp.ne.s32.totalorder %s106, %s107
      %p119 = scmp.eq.s32.totalorder %s34, 1
      %p120 = por %p118, %p119
      %p122 = scmp.ne.s32.totalorder %s107, %s121
      %p123 = scmp.eq.s32.totalorder %s34, 0
      %p124 = por %p122, %p123
      %s126 = sadd.s32 %s125, 1
      %p129 = scmp.eq.s32.totalorder %s28, 1
      %p130 = scmp.ne.s32.totalorder %s125, %s127
      %p131 = scmp.eq.s32.totalorder %s28, 0
      %p132 = por %p130, %p131
      %p133 = scmp.ne.s32.totalorder %s125, %s127
      %p134 = scmp.eq.s32.totalorder %s33, 1
      %p135 = por %p133, %p134
      %p136 = scmp.ne.s32.totalorder %s127, %s128
      %p137 = scmp.eq.s32.totalorder %s33, 0
      %p138 = por %p136, %p137
      %p139 = scmp.ne.s32.totalorder %s127, %s128
      %p140 = scmp.eq.s32.totalorder %s34, 1
      %p141 = por %p139, %p140
      %p143 = scmp.ne.s32.totalorder %s128, %s142
      %p144 = scmp.eq.s32.totalorder %s34, 0
      %p145 = por %p143, %p144
      %s147 = sadd.s32 %s146, 1
      %p150 = scmp.eq.s32.totalorder %s28, 1
      %p151 = scmp.ne.s32.totalorder %s146, %s148
      %p152 = scmp.eq.s32.totalorder %s28, 0
      %p153 = por %p151, %p152
      %p154 = scmp.ne.s32.totalorder %s146, %s148
      %p155 = scmp.eq.s32.totalorder %s33, 1
      %p156 = por %p154, %p155
      %p157 = scmp.ne.s32.totalorder %s148, %s149
      %p158 = scmp.eq.s32.totalorder %s33, 0
      %p159 = por %p157, %p158
      %p160 = scmp.ne.s32.totalorder %s148, %s149
      %p161 = scmp.eq.s32.totalorder %s34, 1
      %p162 = por %p160, %p161
      %p164 = scmp.ne.s32.totalorder %s149, %s163
      %p165 = scmp.eq.s32.totalorder %s34, 0
      %p166 = por %p164, %p165
      %s168 = sadd.s32 %s167, 1
      %p171 = scmp.eq.s32.totalorder %s28, 1
      %p172 = scmp.ne.s32.totalorder %s167, %s169
      %p173 = scmp.eq.s32.totalorder %s28, 0
      %p174 = por %p172, %p173
      %p175 = scmp.ne.s32.totalorder %s167, %s169
      %p176 = scmp.eq.s32.totalorder %s33, 1
      %p177 = por %p175, %p176
      %p178 = scmp.ne.s32.totalorder %s169, %s170
      %p179 = scmp.eq.s32.totalorder %s33, 0
      %p180 = por %p178, %p179
      %p181 = scmp.ne.s32.totalorder %s169, %s170
      %p182 = scmp.eq.s32.totalorder %s34, 1
      %p183 = por %p181, %p182
      %p185 = scmp.ne.s32.totalorder %s170, %s184
      %p186 = scmp.eq.s32.totalorder %s34, 0
      %p187 = por %p185, %p186
      %s189 = sadd.s32 %s188, 1
      %p192 = scmp.eq.s32.totalorder %s28, 1
      %p193 = scmp.ne.s32.totalorder %s188, %s190
      %p194 = scmp.eq.s32.totalorder %s28, 0
      %p195 = por %p193, %p194
      %p196 = scmp.ne.s32.totalorder %s188, %s190
      %p197 = scmp.eq.s32.totalorder %s33, 1
      %p198 = por %p196, %p197
      %p199 = scmp.ne.s32.totalorder %s190, %s191
      %p200 = scmp.eq.s32.totalorder %s33, 0
      %p201 = por %p199, %p200
      %p202 = scmp.ne.s32.totalorder %s190, %s191
      %p203 = scmp.eq.s32.totalorder %s34, 1
      %p204 = por %p202, %p203
      %p206 = scmp.ne.s32.totalorder %s191, %s205
      %p207 = scmp.eq.s32.totalorder %s34, 0
      %p208 = por %p206, %p207
      %s210 = sadd.s32 %s209, 1
      %p213 = scmp.eq.s32.totalorder %s28, 1
      %p214 = scmp.ne.s32.totalorder %s209, %s211
      %p215 = scmp.eq.s32.totalorder %s28, 0
      %p216 = por %p214, %p215
      %p217 = scmp.ne.s32.totalorder %s209, %s211
      %p218 = scmp.eq.s32.totalorder %s33, 1
      %p219 = por %p217, %p218
      %p220 = scmp.ne.s32.totalorder %s211, %s212
      %p221 = scmp.eq.s32.totalorder %s33, 0
      %p222 = por %p220, %p221
      %p223 = scmp.ne.s32.totalorder %s211, %s212
      %p224 = scmp.eq.s32.totalorder %s34, 1
      %p225 = por %p223, %p224
      %p227 = scmp.ne.s32.totalorder %s212, %s226
      %p228 = scmp.eq.s32.totalorder %s34, 0
      %p229 = por %p227, %p228
      %s231 = sadd.s32 %s230, 1
      %p234 = scmp.eq.s32.totalorder %s28, 1
      %p235 = scmp.ne.s32.totalorder %s230, %s232
      %p236 = scmp.eq.s32.totalorder %s28, 0
      %p237 = por %p235, %p236
      %p238 = scmp.ne.s32.totalorder %s230, %s232
      %p239 = scmp.eq.s32.totalorder %s33, 1
      %p240 = por %p238, %p239
      %p241 = scmp.ne.s32.totalorder %s232, %s233
      %p242 = scmp.eq.s32.totalorder %s33, 0
      %p243 = por %p241, %p242
      %p244 = scmp.ne.s32.totalorder %s232, %s233
      %p245 = scmp.eq.s32.totalorder %s34, 1
      %p246 = por %p244, %p245
      %p248 = scmp.ne.s32.totalorder %s233, %s247
      %p249 = scmp.eq.s32.totalorder %s34, 0
      %p250 = por %p248, %p249
      %s252 = sadd.s32 %s251, 1
      %p255 = scmp.eq.s32.totalorder %s28, 1
      %p256 = scmp.ne.s32.totalorder %s251, %s253
      %p257 = scmp.eq.s32.totalorder %s28, 0
      %p258 = por %p256, %p257
      %p259 = scmp.ne.s32.totalorder %s251, %s253
      %p260 = scmp.eq.s32.totalorder %s33, 1
      %p261 = por %p259, %p260
      %p262 = scmp.ne.s32.totalorder %s253, %s254
      %p263 = scmp.eq.s32.totalorder %s33, 0
      %p264 = por %p262, %p263
      %p265 = scmp.ne.s32.totalorder %s253, %s254
      %p266 = scmp.eq.s32.totalorder %s34, 1
      %p267 = por %p265, %p266
      %p269 = scmp.ne.s32.totalorder %s254, %s268
      %p270 = scmp.eq.s32.totalorder %s34, 0
      %p271 = por %p269, %p270
      %s273 = sadd.s32 %s272, 1
      %p276 = scmp.eq.s32.totalorder %s28, 1
      %p277 = scmp.ne.s32.totalorder %s272, %s274
      %p278 = scmp.eq.s32.totalorder %s28, 0
      %p279 = por %p277, %p278
      %p280 = scmp.ne.s32.totalorder %s272, %s274
      %p281 = scmp.eq.s32.totalorder %s33, 1
      %p282 = por %p280, %p281
      %p283 = scmp.ne.s32.totalorder %s274, %s275
      %p284 = scmp.eq.s32.totalorder %s33, 0
      %p285 = por %p283, %p284
      %p286 = scmp.ne.s32.totalorder %s274, %s275
      %p287 = scmp.eq.s32.totalorder %s34, 1
      %p288 = por %p286, %p287
      %p290 = scmp.ne.s32.totalorder %s275, %s289
      %p291 = scmp.eq.s32.totalorder %s34, 0
      %p292 = por %p290, %p291
      %s294 = sadd.s32 %s293, 1
      %p297 = scmp.eq.s32.totalorder %s28, 1
      %p298 = scmp.ne.s32.totalorder %s293, %s295
      %p299 = scmp.eq.s32.totalorder %s28, 0
      %p300 = por %p298, %p299
      %p301 = scmp.ne.s32.totalorder %s293, %s295
      %p302 = scmp.eq.s32.totalorder %s33, 1
      %p303 = por %p301, %p302
      %p304 = scmp.ne.s32.totalorder %s295, %s296
      %p305 = scmp.eq.s32.totalorder %s33, 0
      %p306 = por %p304, %p305
      %p307 = scmp.ne.s32.totalorder %s295, %s296
      %p308 = scmp.eq.s32.totalorder %s34, 1
      %p309 = por %p307, %p308
      %p311 = scmp.ne.s32.totalorder %s296, %s310
      %p312 = scmp.eq.s32.totalorder %s34, 0
      %p313 = por %p311, %p312
      %s315 = sadd.s32 %s314, 1
      %p318 = scmp.eq.s32.totalorder %s28, 1
      %p319 = scmp.ne.s32.totalorder %s314, %s316
      %p320 = scmp.eq.s32.totalorder %s28, 0
      %p321 = por %p319, %p320
      %p322 = scmp.ne.s32.totalorder %s314, %s316
      %p323 = scmp.eq.s32.totalorder %s33, 1
      %p324 = por %p322, %p323
      %p325 = scmp.ne.s32.totalorder %s316, %s317
      %p326 = scmp.eq.s32.totalorder %s33, 0
      %p327 = por %p325, %p326
      %p328 = scmp.ne.s32.totalorder %s316, %s317
      %p329 = scmp.eq.s32.totalorder %s34, 1
      %p330 = por %p328, %p329
      %p332 = scmp.ne.s32.totalorder %s317, %s331
      %p333 = scmp.eq.s32.totalorder %s34, 0
      %p334 = por %p332, %p333
      %s335 = ssub.s32 %s28, %s35
      %p336 = scmp.eq.s32.totalorder %s335, 0
      %s338 = sadd.s32 %s337, 1
      %s339 = scalar_select %p336, %s337, %s338
      %p342 = pneg %p336
      %p343 = scmp.eq.s32.totalorder %s28, 1
      %p344 = por %p342, %p343
      %p345 = scmp.ne.s32.totalorder %s337, %s340
      %p346 = scmp.eq.s32.totalorder %s28, 0
      %p347 = por %p345, %p346
      %p348 = scmp.ne.s32.totalorder %s337, %s340
      %p349 = scmp.eq.s32.totalorder %s33, 1
      %p350 = por %p348, %p349
      %p351 = scmp.ne.s32.totalorder %s340, %s341
      %p352 = scmp.eq.s32.totalorder %s33, 0
      %p353 = por %p351, %p352
      %p354 = scmp.ne.s32.totalorder %s340, %s341
      %p355 = scmp.eq.s32.totalorder %s34, 1
      %p356 = por %p354, %p355
      %p358 = scmp.ne.s32.totalorder %s341, %s357
      %p359 = scmp.eq.s32.totalorder %s34, 0
      %p360 = por %p358, %p359
      %s361 = ssub.s32 %s28, %s35
      %p362 = scmp.eq.s32.totalorder %s361, 0
      %s364 = sadd.s32 %s363, 1
      %s365 = scalar_select %p362, %s363, %s364
      %p368 = pneg %p362
      %p369 = scmp.eq.s32.totalorder %s28, 1
      %p370 = por %p368, %p369
      %p371 = scmp.ne.s32.totalorder %s363, %s366
      %p372 = scmp.eq.s32.totalorder %s28, 0
      %p373 = por %p371, %p372
      %p374 = scmp.ne.s32.totalorder %s363, %s366
      %p375 = scmp.eq.s32.totalorder %s33, 1
      %p376 = por %p374, %p375
      %p377 = scmp.ne.s32.totalorder %s366, %s367
      %p378 = scmp.eq.s32.totalorder %s33, 0
      %p379 = por %p377, %p378
      %p380 = scmp.ne.s32.totalorder %s366, %s367
      %p381 = scmp.eq.s32.totalorder %s34, 1
      %p382 = por %p380, %p381
      %p384 = scmp.ne.s32.totalorder %s367, %s383
      %p385 = scmp.eq.s32.totalorder %s34, 0
      %p386 = por %p384, %p385
      %p387 = scmp.le.s32.totalorder 1, %s28
      %p388 = scmp.lt.s32.totalorder %s28, 3
      %p389 = pnand %p387, %p388
      %p390 = pneg %p389
      // Predicated region
      $region9: #{tpu_custom_call.1} parent=5 // pred_check
        _
      $region10: #{tpu_custom_call.1} parent=5 // pred_check_branch
        %392 = sbr.rel (%p389) target = $region12
      $region11: #{tpu_custom_call.1} parent=5 // pred_region
        %s393 = ssub.s32 %s28, 1
        // Predicated region
        $region13: #{tpu_custom_call.1} parent=11 // pred_check
          %p394 = pneg %p75
        $region14: #{tpu_custom_call.1} parent=11 // pred_check_branch
          %396 = sbr.rel (%p394) target = $region16
        $region15: #{tpu_custom_call.1} parent=11 // pred_region
          _
        $region16: #{tpu_custom_call.1} parent=11 // pred_fallthru
          _
        // Predicated region
        $region17: #{tpu_custom_call.1} parent=11 // pred_check
          %p397 = pneg %p96
        $region18: #{tpu_custom_call.1} parent=11 // pred_check_branch
          %399 = sbr.rel (%p397) target = $region20
        $region19: #{tpu_custom_call.1} parent=11 // pred_region
          _
        $region20: #{tpu_custom_call.1} parent=11 // pred_fallthru
          _
        // Predicated region
        $region21: #{tpu_custom_call.1} parent=11 // pred_check
          %p400 = pneg %p117
        $region22: #{tpu_custom_call.1} parent=11 // pred_check_branch
          %402 = sbr.rel (%p400) target = $region24
        $region23: #{tpu_custom_call.1} parent=11 // pred_region
          _
        $region24: #{tpu_custom_call.1} parent=11 // pred_fallthru
          _
        // Predicated region
        $region25: #{tpu_custom_call.1} parent=11 // pred_check
          %p403 = pneg %p138
        $region26: #{tpu_custom_call.1} parent=11 // pred_check_branch
          %405 = sbr.rel (%p403) target = $region28
        $region27: #{tpu_custom_call.1} parent=11 // pred_region
          _
        $region28: #{tpu_custom_call.1} parent=11 // pred_fallthru
          _
        // Predicated region
        $region29: #{tpu_custom_call.1} parent=11 // pred_check
          %p406 = pneg %p159
        $region30: #{tpu_custom_call.1} parent=11 // pred_check_branch
          %408 = sbr.rel (%p406) target = $region32
        $region31: #{tpu_custom_call.1} parent=11 // pred_region
          _
        $region32: #{tpu_custom_call.1} parent=11 // pred_fallthru
          _
        // Predicated region
        $region33: #{tpu_custom_call.1} parent=11 // pred_check
          %p409 = pneg %p180
        $region34: #{tpu_custom_call.1} parent=11 // pred_check_branch
          %411 = sbr.rel (%p409) target = $region36
        $region35: #{tpu_custom_call.1} parent=11 // pred_region
          _
        $region36: #{tpu_custom_call.1} parent=11 // pred_fallthru
          _
        // Predicated region
        $region37: #{tpu_custom_call.1} parent=11 // pred_check
          %p412 = pneg %p201
        $region38: #{tpu_custom_call.1} parent=11 // pred_check_branch
          %414 = sbr.rel (%p412) target = $region40
        $region39: #{tpu_custom_call.1} parent=11 // pred_region
          _
        $region40: #{tpu_custom_call.1} parent=11 // pred_fallthru
          _
        // Predicated region
        $region41: #{tpu_custom_call.1} parent=11 // pred_check
          %p415 = pneg %p222
        $region42: #{tpu_custom_call.1} parent=11 // pred_check_branch
          %417 = sbr.rel (%p415) target = $region44
        $region43: #{tpu_custom_call.1} parent=11 // pred_region
          _
        $region44: #{tpu_custom_call.1} parent=11 // pred_fallthru
          _
        // Predicated region
        $region45: #{tpu_custom_call.1} parent=11 // pred_check
          %p418 = pneg %p243
        $region46: #{tpu_custom_call.1} parent=11 // pred_check_branch
          %420 = sbr.rel (%p418) target = $region48
        $region47: #{tpu_custom_call.1} parent=11 // pred_region
          _
        $region48: #{tpu_custom_call.1} parent=11 // pred_fallthru
          _
        // Predicated region
        $region49: #{tpu_custom_call.1} parent=11 // pred_check
          %p421 = pneg %p264
        $region50: #{tpu_custom_call.1} parent=11 // pred_check_branch
          %423 = sbr.rel (%p421) target = $region52
        $region51: #{tpu_custom_call.1} parent=11 // pred_region
          _
        $region52: #{tpu_custom_call.1} parent=11 // pred_fallthru
          _
        // Predicated region
        $region53: #{tpu_custom_call.1} parent=11 // pred_check
          %p424 = pneg %p285
        $region54: #{tpu_custom_call.1} parent=11 // pred_check_branch
          %426 = sbr.rel (%p424) target = $region56
        $region55: #{tpu_custom_call.1} parent=11 // pred_region
          _
        $region56: #{tpu_custom_call.1} parent=11 // pred_fallthru
          _
        // Predicated region
        $region57: #{tpu_custom_call.1} parent=11 // pred_check
          %p427 = pneg %p306
        $region58: #{tpu_custom_call.1} parent=11 // pred_check_branch
          %429 = sbr.rel (%p427) target = $region60
        $region59: #{tpu_custom_call.1} parent=11 // pred_region
          _
        $region60: #{tpu_custom_call.1} parent=11 // pred_fallthru
          _
        // Predicated region
        $region61: #{tpu_custom_call.1} parent=11 // pred_check
          %p430 = pneg %p327
        $region62: #{tpu_custom_call.1} parent=11 // pred_check_branch
          %432 = sbr.rel (%p430) target = $region64
        $region63: #{tpu_custom_call.1} parent=11 // pred_region
          _
        $region64: #{tpu_custom_call.1} parent=11 // pred_fallthru
          _
      $region12: #{tpu_custom_call.1} parent=5 // pred_fallthru
        _
      %p433 = scmp.lt.s32.totalorder %s28, 2
      // Predicated region
      $region65: #{tpu_custom_call.1} parent=5 // pred_check
        %p434 = pneg %p433
      $region66: #{tpu_custom_call.1} parent=5 // pred_check_branch
        %436 = sbr.rel (%p434) target = $region68
      $region67: #{tpu_custom_call.1} parent=5 // pred_region
        // Predicated region
        $region69: #{tpu_custom_call.1} parent=67 // pred_check
          %p437 = pneg %p48
        $region70: #{tpu_custom_call.1} parent=67 // pred_check_branch
          %439 = sbr.rel (%p437) target = $region72
        $region71: #{tpu_custom_call.1} parent=67 // pred_region
          %p440 = scmp.lt.s32.totalorder %s28, 1
          %s441 = scalar_select %p440, %s28, 1
          %s442 = smul.addr %s441, 8
          %s443 = scalar_lea.vmem %s0, %s442
        $region72: #{tpu_custom_call.1} parent=67 // pred_fallthru
          _
      $region68: #{tpu_custom_call.1} parent=5 // pred_fallthru
        _
      %p444 = scmp.le.s32.totalorder 1, %s28
      %p445 = scmp.lt.s32.totalorder %s28, 3
      %p446 = pnand %p444, %p445
      %p447 = pneg %p446
      // Predicated region
      $region73: #{tpu_custom_call.1} parent=5 // pred_check
        _
      $region74: #{tpu_custom_call.1} parent=5 // pred_check_branch
        %449 = sbr.rel (%p446) target = $region76
      $region75: #{tpu_custom_call.1} parent=5 // pred_region
        %s450 = ssub.s32 %s28, 1
        %p451 = scmp.lt.s32.totalorder %s33, 1
        %s452 = scalar_select %p451, %s33, 1
        %s453 = smul.addr %s452, 8
        %s454 = scalar_lea.vmem %s0, %s453
        %p455 = pneg %p54
        %p456 = pneg %p51
        %p457 = pneg %p75
        %p458 = pneg %p72
        %p459 = pneg %p96
        %p460 = pneg %p93
        %p461 = pneg %p117
        %p462 = pneg %p114
        %p463 = pneg %p138
        %p464 = pneg %p135
        %p465 = pneg %p159
        %p466 = pneg %p156
        %p467 = pneg %p180
        %p468 = pneg %p177
        %p469 = pneg %p201
        %p470 = pneg %p198
        %p471 = pneg %p222
        %p472 = pneg %p219
        %p473 = pneg %p243
        %p474 = pneg %p240
        %p475 = pneg %p264
        %p476 = pneg %p261
        %p477 = pneg %p285
        %p478 = pneg %p282
        %p479 = pneg %p306
        %p480 = pneg %p303
        %p481 = pneg %p327
        %p482 = pneg %p324
        %p483 = pneg %p353
        %p484 = pneg %p350
        %s485 = sand.u32 %s340, 1
        %s486 = scalar_lea.sflag [#allocation3], %s485
        %s487 = sand.u32 %s340, 1
        %s488 = smul.addr %s487, 8
        %s489 = scalar_lea.vmem [#allocation2], %s488
        %p490 = pneg %p379
        %p491 = pneg %p376
        %s492 = sand.u32 %s366, 1
        %s493 = scalar_lea.sflag [#allocation5], %s492
        %s494 = sand.u32 %s366, 1
        %s495 = smul.addr %s494, 8
        %s496 = scalar_lea.vmem [#allocation4], %s495
        %p497 = scmp.lt.s32.totalorder %s33, 1
        %s498 = scalar_select %p497, %s33, 1
        %s499 = smul.addr %s498, 8
        %s500 = scalar_lea.vmem %s0, %s499
        %v501 = vld [vmem:[%s500] sm:$0xff]
        %v502 = vld [vmem:[%s1] sm:$0xff]
        %v503 = vadd.f32 %v501, %v502
        %v504 = vlaneseq
        %v505 = vshrl.u32 %v504, 7
        %v506 = vlaneseq
        %v507 = vand.u32 %v506, 127
        %vm508 = vcmp.ge.s32.totalorder %v507, %v505
        %v509 = vld [vmem:[%s2] sm:$0xff]
        %v510 = vld [vmem:[%s2 + $0x8] sm:$0xff]
        %v511 = vld [vmem:[%s2 + $0x10] sm:$0xff]
        %v512 = vld [vmem:[%s2 + $0x18] sm:$0xff]
        %v513 = vld [vmem:[%s2 + $0x20] sm:$0xff]
        %v514 = vld [vmem:[%s2 + $0x28] sm:$0xff]
        %v515 = vld [vmem:[%s2 + $0x30] sm:$0xff]
        %v516 = vld [vmem:[%s2 + $0x38] sm:$0xff]
        %v517 = vld [vmem:[%s2 + $0x40] sm:$0xff]
        %v518 = vld [vmem:[%s2 + $0x48] sm:$0xff]
        %v519 = vld [vmem:[%s2 + $0x50] sm:$0xff]
        %v520 = vld [vmem:[%s2 + $0x58] sm:$0xff]
        %v521 = vld [vmem:[%s2 + $0x60] sm:$0xff]
        %v522 = vld [vmem:[%s2 + $0x68] sm:$0xff]
        %v523 = vld [vmem:[%s2 + $0x70] sm:$0xff]
        %v524 = vld [vmem:[%s2 + $0x78] sm:$0xff]
        %v525 = vld [vmem:[%s2 + $0x80] sm:$0xff]
        %v526 = vld [vmem:[%s2 + $0x88] sm:$0xff]
        %v527 = vld [vmem:[%s2 + $0x90] sm:$0xff]
        %v528 = vld [vmem:[%s2 + $0x98] sm:$0xff]
        %v529 = vld [vmem:[%s2 + $0xa0] sm:$0xff]
        %v530 = vld [vmem:[%s2 + $0xa8] sm:$0xff]
        %v531 = vld [vmem:[%s2 + $0xb0] sm:$0xff]
        %v532 = vld [vmem:[%s2 + $0xb8] sm:$0xff]
        %v533 = vld [vmem:[%s3] sm:$0x1]
        %v534 = vld [vmem:[%s3 + $0x1] sm:$0x1]
        %v535 = vld [vmem:[%s3 + $0x2] sm:$0x1]
        %v536 = vld [vmem:[%s3 + $0x3] sm:$0x1]
        %v537 = vld [vmem:[%s3 + $0x4] sm:$0x1]
        %v538 = vld [vmem:[%s3 + $0x5] sm:$0x1]
        %v545 = vlaneseq
        %v546 = vshrl.u32 %v545, 7
        %v547 = vsub.s32 0, %v546
        %v548 = vrot.slane %v533, %v547
        %v549 = vlaneseq
        %v550 = vshrl.u32 %v549, 7
        %v551 = vsub.s32 0, %v550
        %v552 = vrot.slane %v534, %v551
        %v553 = vlaneseq
        %v554 = vshrl.u32 %v553, 7
        %v555 = vsub.s32 0, %v554
        %v556 = vrot.slane %v535, %v555
        %v557 = vlaneseq
        %v558 = vshrl.u32 %v557, 7
        %v559 = vsub.s32 0, %v558
        %v560 = vrot.slane %v536, %v559
        %v561 = vlaneseq
        %v562 = vshrl.u32 %v561, 7
        %v563 = vsub.s32 0, %v562
        %v564 = vrot.slane %v537, %v563
        %v565 = vlaneseq
        %v566 = vshrl.u32 %v565, 7
        %v567 = vsub.s32 0, %v566
        %v568 = vrot.slane %v538, %v567
        %vm575 = vcmask 261120
        %v577 = vsel %vm575, %v503, 0
        %579 = vmatprep.subr.mxu0 0.0
        %580 = vmatpush1.msra.mxu0 0.0
        %581 = vmatprep.subr.mxu0 0.0
        %582 = vmatpush1.msra.mxu0 0.0
        %583 = vmatprep.subr.mxu0 0.0
        %584 = vmatpush1.msra.mxu0 0.0
        %585 = vmatprep.subr.mxu0 0.0
        %586 = vmatpush1.msra.mxu0 0.0
        %587 = vmatprep.subr.mxu0 0.0
        %588 = vmatpush1.msra.mxu0 0.0
        %589 = vmatprep.subr.mxu0 0.0
        %590 = vmatpush1.msra.mxu0 0.0
        %591 = vmatprep.subr.mxu0 0.0
        %592 = vmatpush1.msra.mxu0 0.0
        %593 = vmatprep.subr.mxu0 0.0
        %594 = vmatpush1.msra.mxu0 0.0
        %595 = vmatprep.subr.mxu0 0.0
        %596 = vmatpush1.msra.mxu0 0.0
        %597 = vmatprep.subr.mxu0 0.0
        %598 = vmatpush1.msra.mxu0 0.0
        %599 = vmatprep.subr.mxu0 0.0
        %600 = vmatpush1.msra.mxu0 0.0
        %601 = vmatprep.subr.mxu0 0.0
        %602 = vmatpush1.msra.mxu0 0.0
        %603 = vmatprep.subr.mxu0 0.0
        %604 = vmatpush1.msra.mxu0 %v512
        %605 = vmatprep.subr.mxu0 0.0
        %606 = vmatpush1.msra.mxu0 %v511
        %607 = vmatprep.subr.mxu0 0.0
        %608 = vmatpush1.msra.mxu0 %v510
        %609 = vmatprep.subr.mxu0 0.0
        %610 = vmatpush1.msra.mxu0 %v509
        %611 = vmatprep.subr.mxu0 0.0
        %612 = vmatpush2.msra.mxu0 0.0
        %613 = vmatprep.subr.mxu0 0.0
        %614 = vmatpush2.msra.mxu0 0.0
        %615 = vmatprep.subr.mxu0 0.0
        %616 = vmatpush2.msra.mxu0 0.0
        %617 = vmatprep.subr.mxu0 0.0
        %618 = vmatpush2.msra.mxu0 0.0
        %619 = vmatprep.subr.mxu0 0.0
        %620 = vmatpush2.msra.mxu0 0.0
        %621 = vmatprep.subr.mxu0 0.0
        %622 = vmatpush2.msra.mxu0 0.0
        %623 = vmatprep.subr.mxu0 0.0
        %624 = vmatpush2.msra.mxu0 0.0
        %625 = vmatprep.subr.mxu0 0.0
        %626 = vmatpush2.msra.mxu0 0.0
        %627 = vmatprep.subr.mxu0 0.0
        %628 = vmatpush2.msra.mxu0 0.0
        %629 = vmatprep.subr.mxu0 0.0
        %630 = vmatpush2.msra.mxu0 0.0
        %631 = vmatprep.subr.mxu0 0.0
        %632 = vmatpush2.msra.mxu0 0.0
        %633 = vmatprep.subr.mxu0 0.0
        %634 = vmatpush2.msra.mxu0 0.0
        %635 = vmatprep.subr.mxu0 0.0
        %636 = vmatpush2.msra.mxu0 0.0
        %637 = vmatprep.subr.mxu0 0.0
        %638 = vmatpush2.msra.mxu0 0.0
        %639 = vmatprep.subr.mxu0 0.0
        %640 = vmatpush2.msra.mxu0 0.0
        %641 = vmatprep.subr.mxu0 0.0
        %642 = vmatpush2.msra.mxu0 0.0
        %643 = vmatprep.mubr.f32.mxu0 0.0
        %644 = vmatmul.mubr.f32.gmra.mxu0 %v577
        %v645 = vpop.f32.mrf.mxu0
        %v646 = vadd.f32 %v548, %v645
        %v647 = vpop.f32.mrf.mxu0
        %648 = vdwg.mxu0
        %649 = vmatprep.subr.mxu0 0.0
        %650 = vmatpush1.msra.mxu0 0.0
        %651 = vmatprep.subr.mxu0 0.0
        %652 = vmatpush1.msra.mxu0 0.0
        %653 = vmatprep.subr.mxu0 0.0
        %654 = vmatpush1.msra.mxu0 0.0
        %655 = vmatprep.subr.mxu0 0.0
        %656 = vmatpush1.msra.mxu0 0.0
        %657 = vmatprep.subr.mxu0 0.0
        %658 = vmatpush1.msra.mxu0 0.0
        %659 = vmatprep.subr.mxu0 0.0
        %660 = vmatpush1.msra.mxu0 0.0
        %661 = vmatprep.subr.mxu0 0.0
        %662 = vmatpush1.msra.mxu0 0.0
        %663 = vmatprep.subr.mxu0 0.0
        %664 = vmatpush1.msra.mxu0 0.0
        %665 = vmatprep.subr.mxu0 0.0
        %666 = vmatpush1.msra.mxu0 0.0
        %667 = vmatprep.subr.mxu0 0.0
        %668 = vmatpush1.msra.mxu0 0.0
        %669 = vmatprep.subr.mxu0 0.0
        %670 = vmatpush1.msra.mxu0 0.0
        %671 = vmatprep.subr.mxu0 0.0
        %672 = vmatpush1.msra.mxu0 0.0
        %673 = vmatprep.subr.mxu0 0.0
        %674 = vmatpush1.msra.mxu0 %v516
        %675 = vmatprep.subr.mxu0 0.0
        %676 = vmatpush1.msra.mxu0 %v515
        %677 = vmatprep.subr.mxu0 0.0
        %678 = vmatpush1.msra.mxu0 %v514
        %679 = vmatprep.subr.mxu0 0.0
        %680 = vmatpush1.msra.mxu0 %v513
        %681 = vmatprep.subr.mxu0 0.0
        %682 = vmatpush2.msra.mxu0 0.0
        %683 = vmatprep.subr.mxu0 0.0
        %684 = vmatpush2.msra.mxu0 0.0
        %685 = vmatprep.subr.mxu0 0.0
        %686 = vmatpush2.msra.mxu0 0.0
        %687 = vmatprep.subr.mxu0 0.0
        %688 = vmatpush2.msra.mxu0 0.0
        %689 = vmatprep.subr.mxu0 0.0
        %690 = vmatpush2.msra.mxu0 0.0
        %691 = vmatprep.subr.mxu0 0.0
        %692 = vmatpush2.msra.mxu0 0.0
        %693 = vmatprep.subr.mxu0 0.0
        %694 = vmatpush2.msra.mxu0 0.0
        %695 = vmatprep.subr.mxu0 0.0
        %696 = vmatpush2.msra.mxu0 0.0
        %697 = vmatprep.subr.mxu0 0.0
        %698 = vmatpush2.msra.mxu0 0.0
        %699 = vmatprep.subr.mxu0 0.0
        %700 = vmatpush2.msra.mxu0 0.0
        %701 = vmatprep.subr.mxu0 0.0
        %702 = vmatpush2.msra.mxu0 0.0
        %703 = vmatprep.subr.mxu0 0.0
        %704 = vmatpush2.msra.mxu0 0.0
        %705 = vmatprep.subr.mxu0 0.0
        %706 = vmatpush2.msra.mxu0 0.0
        %707 = vmatprep.subr.mxu0 0.0
        %708 = vmatpush2.msra.mxu0 0.0
        %709 = vmatprep.subr.mxu0 0.0
        %710 = vmatpush2.msra.mxu0 0.0
        %711 = vmatprep.subr.mxu0 0.0
        %712 = vmatpush2.msra.mxu0 0.0
        %713 = vmatprep.mubr.f32.mxu0 0.0
        %714 = vmatmul.mubr.f32.gmra.mxu0 %v577
        %v715 = vpop.f32.mrf.mxu0
        %v716 = vadd.f32 %v552, %v715
        %v717 = vpop.f32.mrf.mxu0
        %718 = vdwg.mxu0
        %719 = vmatprep.subr.mxu0 0.0
        %720 = vmatpush1.msra.mxu0 0.0
        %721 = vmatprep.subr.mxu0 0.0
        %722 = vmatpush1.msra.mxu0 0.0
        %723 = vmatprep.subr.mxu0 0.0
        %724 = vmatpush1.msra.mxu0 0.0
        %725 = vmatprep.subr.mxu0 0.0
        %726 = vmatpush1.msra.mxu0 0.0
        %727 = vmatprep.subr.mxu0 0.0
        %728 = vmatpush1.msra.mxu0 0.0
        %729 = vmatprep.subr.mxu0 0.0
        %730 = vmatpush1.msra.mxu0 0.0
        %731 = vmatprep.subr.mxu0 0.0
        %732 = vmatpush1.msra.mxu0 0.0
        %733 = vmatprep.subr.mxu0 0.0
        %734 = vmatpush1.msra.mxu0 0.0
        %735 = vmatprep.subr.mxu0 0.0
        %736 = vmatpush1.msra.mxu0 0.0
        %737 = vmatprep.subr.mxu0 0.0
        %738 = vmatpush1.msra.mxu0 0.0
        %739 = vmatprep.subr.mxu0 0.0
        %740 = vmatpush1.msra.mxu0 0.0
        %741 = vmatprep.subr.mxu0 0.0
        %742 = vmatpush1.msra.mxu0 0.0
        %743 = vmatprep.subr.mxu0 0.0
        %744 = vmatpush1.msra.mxu0 %v520
        %745 = vmatprep.subr.mxu0 0.0
        %746 = vmatpush1.msra.mxu0 %v519
        %747 = vmatprep.subr.mxu0 0.0
        %748 = vmatpush1.msra.mxu0 %v518
        %749 = vmatprep.subr.mxu0 0.0
        %750 = vmatpush1.msra.mxu0 %v517
        %751 = vmatprep.subr.mxu0 0.0
        %752 = vmatpush2.msra.mxu0 0.0
        %753 = vmatprep.subr.mxu0 0.0
        %754 = vmatpush2.msra.mxu0 0.0
        %755 = vmatprep.subr.mxu0 0.0
        %756 = vmatpush2.msra.mxu0 0.0
        %757 = vmatprep.subr.mxu0 0.0
        %758 = vmatpush2.msra.mxu0 0.0
        %759 = vmatprep.subr.mxu0 0.0
        %760 = vmatpush2.msra.mxu0 0.0
        %761 = vmatprep.subr.mxu0 0.0
        %762 = vmatpush2.msra.mxu0 0.0
        %763 = vmatprep.subr.mxu0 0.0
        %764 = vmatpush2.msra.mxu0 0.0
        %765 = vmatprep.subr.mxu0 0.0
        %766 = vmatpush2.msra.mxu0 0.0
        %767 = vmatprep.subr.mxu0 0.0
        %768 = vmatpush2.msra.mxu0 0.0
        %769 = vmatprep.subr.mxu0 0.0
        %770 = vmatpush2.msra.mxu0 0.0
        %771 = vmatprep.subr.mxu0 0.0
        %772 = vmatpush2.msra.mxu0 0.0
        %773 = vmatprep.subr.mxu0 0.0
        %774 = vmatpush2.msra.mxu0 0.0
        %775 = vmatprep.subr.mxu0 0.0
        %776 = vmatpush2.msra.mxu0 0.0
        %777 = vmatprep.subr.mxu0 0.0
        %778 = vmatpush2.msra.mxu0 0.0
        %779 = vmatprep.subr.mxu0 0.0
        %780 = vmatpush2.msra.mxu0 0.0
        %781 = vmatprep.subr.mxu0 0.0
        %782 = vmatpush2.msra.mxu0 0.0
        %783 = vmatprep.mubr.f32.mxu0 0.0
        %784 = vmatmul.mubr.f32.gmra.mxu0 %v577
        %v785 = vpop.f32.mrf.mxu0
        %v786 = vadd.f32 %v556, %v785
        %v787 = vpop.f32.mrf.mxu0
        %788 = vdwg.mxu0
        %789 = vmatprep.subr.mxu0 0.0
        %790 = vmatpush1.msra.mxu0 0.0
        %791 = vmatprep.subr.mxu0 0.0
        %792 = vmatpush1.msra.mxu0 0.0
        %793 = vmatprep.subr.mxu0 0.0
        %794 = vmatpush1.msra.mxu0 0.0
        %795 = vmatprep.subr.mxu0 0.0
        %796 = vmatpush1.msra.mxu0 0.0
        %797 = vmatprep.subr.mxu0 0.0
        %798 = vmatpush1.msra.mxu0 0.0
        %799 = vmatprep.subr.mxu0 0.0
        %800 = vmatpush1.msra.mxu0 0.0
        %801 = vmatprep.subr.mxu0 0.0
        %802 = vmatpush1.msra.mxu0 0.0
        %803 = vmatprep.subr.mxu0 0.0
        %804 = vmatpush1.msra.mxu0 0.0
        %805 = vmatprep.subr.mxu0 0.0
        %806 = vmatpush1.msra.mxu0 0.0
        %807 = vmatprep.subr.mxu0 0.0
        %808 = vmatpush1.msra.mxu0 0.0
        %809 = vmatprep.subr.mxu0 0.0
        %810 = vmatpush1.msra.mxu0 0.0
        %811 = vmatprep.subr.mxu0 0.0
        %812 = vmatpush1.msra.mxu0 0.0
        %813 = vmatprep.subr.mxu0 0.0
        %814 = vmatpush1.msra.mxu0 %v524
        %815 = vmatprep.subr.mxu0 0.0
        %816 = vmatpush1.msra.mxu0 %v523
        %817 = vmatprep.subr.mxu0 0.0
        %818 = vmatpush1.msra.mxu0 %v522
        %819 = vmatprep.subr.mxu0 0.0
        %820 = vmatpush1.msra.mxu0 %v521
        %821 = vmatprep.subr.mxu0 0.0
        %822 = vmatpush2.msra.mxu0 0.0
        %823 = vmatprep.subr.mxu0 0.0
        %824 = vmatpush2.msra.mxu0 0.0
        %825 = vmatprep.subr.mxu0 0.0
        %826 = vmatpush2.msra.mxu0 0.0
        %827 = vmatprep.subr.mxu0 0.0
        %828 = vmatpush2.msra.mxu0 0.0
        %829 = vmatprep.subr.mxu0 0.0
        %830 = vmatpush2.msra.mxu0 0.0
        %831 = vmatprep.subr.mxu0 0.0
        %832 = vmatpush2.msra.mxu0 0.0
        %833 = vmatprep.subr.mxu0 0.0
        %834 = vmatpush2.msra.mxu0 0.0
        %835 = vmatprep.subr.mxu0 0.0
        %836 = vmatpush2.msra.mxu0 0.0
        %837 = vmatprep.subr.mxu0 0.0
        %838 = vmatpush2.msra.mxu0 0.0
        %839 = vmatprep.subr.mxu0 0.0
        %840 = vmatpush2.msra.mxu0 0.0
        %841 = vmatprep.subr.mxu0 0.0
        %842 = vmatpush2.msra.mxu0 0.0
        %843 = vmatprep.subr.mxu0 0.0
        %844 = vmatpush2.msra.mxu0 0.0
        %845 = vmatprep.subr.mxu0 0.0
        %846 = vmatpush2.msra.mxu0 0.0
        %847 = vmatprep.subr.mxu0 0.0
        %848 = vmatpush2.msra.mxu0 0.0
        %849 = vmatprep.subr.mxu0 0.0
        %850 = vmatpush2.msra.mxu0 0.0
        %851 = vmatprep.subr.mxu0 0.0
        %852 = vmatpush2.msra.mxu0 0.0
        %853 = vmatprep.mubr.f32.mxu0 0.0
        %854 = vmatmul.mubr.f32.gmra.mxu0 %v577
        %v855 = vpop.f32.mrf.mxu0
        %v856 = vadd.f32 %v560, %v855
        %v857 = vpop.f32.mrf.mxu0
        %858 = vdwg.mxu0
        %859 = vmatprep.subr.mxu0 0.0
        %860 = vmatpush1.msra.mxu0 0.0
        %861 = vmatprep.subr.mxu0 0.0
        %862 = vmatpush1.msra.mxu0 0.0
        %863 = vmatprep.subr.mxu0 0.0
        %864 = vmatpush1.msra.mxu0 0.0
        %865 = vmatprep.subr.mxu0 0.0
        %866 = vmatpush1.msra.mxu0 0.0
        %867 = vmatprep.subr.mxu0 0.0
        %868 = vmatpush1.msra.mxu0 0.0
        %869 = vmatprep.subr.mxu0 0.0
        %870 = vmatpush1.msra.mxu0 0.0
        %871 = vmatprep.subr.mxu0 0.0
        %872 = vmatpush1.msra.mxu0 0.0
        %873 = vmatprep.subr.mxu0 0.0
        %874 = vmatpush1.msra.mxu0 0.0
        %875 = vmatprep.subr.mxu0 0.0
        %876 = vmatpush1.msra.mxu0 0.0
        %877 = vmatprep.subr.mxu0 0.0
        %878 = vmatpush1.msra.mxu0 0.0
        %879 = vmatprep.subr.mxu0 0.0
        %880 = vmatpush1.msra.mxu0 0.0
        %881 = vmatprep.subr.mxu0 0.0
        %882 = vmatpush1.msra.mxu0 0.0
        %883 = vmatprep.subr.mxu0 0.0
        %884 = vmatpush1.msra.mxu0 %v528
        %885 = vmatprep.subr.mxu0 0.0
        %886 = vmatpush1.msra.mxu0 %v527
        %887 = vmatprep.subr.mxu0 0.0
        %888 = vmatpush1.msra.mxu0 %v526
        %889 = vmatprep.subr.mxu0 0.0
        %890 = vmatpush1.msra.mxu0 %v525
        %891 = vmatprep.subr.mxu0 0.0
        %892 = vmatpush2.msra.mxu0 0.0
        %893 = vmatprep.subr.mxu0 0.0
        %894 = vmatpush2.msra.mxu0 0.0
        %895 = vmatprep.subr.mxu0 0.0
        %896 = vmatpush2.msra.mxu0 0.0
        %897 = vmatprep.subr.mxu0 0.0
        %898 = vmatpush2.msra.mxu0 0.0
        %899 = vmatprep.subr.mxu0 0.0
        %900 = vmatpush2.msra.mxu0 0.0
        %901 = vmatprep.subr.mxu0 0.0
        %902 = vmatpush2.msra.mxu0 0.0
        %903 = vmatprep.subr.mxu0 0.0
        %904 = vmatpush2.msra.mxu0 0.0
        %905 = vmatprep.subr.mxu0 0.0
        %906 = vmatpush2.msra.mxu0 0.0
        %907 = vmatprep.subr.mxu0 0.0
        %908 = vmatpush2.msra.mxu0 0.0
        %909 = vmatprep.subr.mxu0 0.0
        %910 = vmatpush2.msra.mxu0 0.0
        %911 = vmatprep.subr.mxu0 0.0
        %912 = vmatpush2.msra.mxu0 0.0
        %913 = vmatprep.subr.mxu0 0.0
        %914 = vmatpush2.msra.mxu0 0.0
        %915 = vmatprep.subr.mxu0 0.0
        %916 = vmatpush2.msra.mxu0 0.0
        %917 = vmatprep.subr.mxu0 0.0
        %918 = vmatpush2.msra.mxu0 0.0
        %919 = vmatprep.subr.mxu0 0.0
        %920 = vmatpush2.msra.mxu0 0.0
        %921 = vmatprep.subr.mxu0 0.0
        %922 = vmatpush2.msra.mxu0 0.0
        %923 = vmatprep.mubr.f32.mxu0 0.0
        %924 = vmatmul.mubr.f32.gmra.mxu0 %v577
        %v925 = vpop.f32.mrf.mxu0
        %v926 = vadd.f32 %v564, %v925
        %v927 = vpop.f32.mrf.mxu0
        %928 = vdwg.mxu0
        %929 = vmatprep.subr.mxu0 0.0
        %930 = vmatpush1.msra.mxu0 0.0
        %931 = vmatprep.subr.mxu0 0.0
        %932 = vmatpush1.msra.mxu0 0.0
        %933 = vmatprep.subr.mxu0 0.0
        %934 = vmatpush1.msra.mxu0 0.0
        %935 = vmatprep.subr.mxu0 0.0
        %936 = vmatpush1.msra.mxu0 0.0
        %937 = vmatprep.subr.mxu0 0.0
        %938 = vmatpush1.msra.mxu0 0.0
        %939 = vmatprep.subr.mxu0 0.0
        %940 = vmatpush1.msra.mxu0 0.0
        %941 = vmatprep.subr.mxu0 0.0
        %942 = vmatpush1.msra.mxu0 0.0
        %943 = vmatprep.subr.mxu0 0.0
        %944 = vmatpush1.msra.mxu0 0.0
        %945 = vmatprep.subr.mxu0 0.0
        %946 = vmatpush1.msra.mxu0 0.0
        %947 = vmatprep.subr.mxu0 0.0
        %948 = vmatpush1.msra.mxu0 0.0
        %949 = vmatprep.subr.mxu0 0.0
        %950 = vmatpush1.msra.mxu0 0.0
        %951 = vmatprep.subr.mxu0 0.0
        %952 = vmatpush1.msra.mxu0 0.0
        %953 = vmatprep.subr.mxu0 0.0
        %954 = vmatpush1.msra.mxu0 %v532
        %955 = vmatprep.subr.mxu0 0.0
        %956 = vmatpush1.msra.mxu0 %v531
        %957 = vmatprep.subr.mxu0 0.0
        %958 = vmatpush1.msra.mxu0 %v530
        %959 = vmatprep.subr.mxu0 0.0
        %960 = vmatpush1.msra.mxu0 %v529
        %961 = vmatprep.subr.mxu0 0.0
        %962 = vmatpush2.msra.mxu0 0.0
        %963 = vmatprep.subr.mxu0 0.0
        %964 = vmatpush2.msra.mxu0 0.0
        %965 = vmatprep.subr.mxu0 0.0
        %966 = vmatpush2.msra.mxu0 0.0
        %967 = vmatprep.subr.mxu0 0.0
        %968 = vmatpush2.msra.mxu0 0.0
        %969 = vmatprep.subr.mxu0 0.0
        %970 = vmatpush2.msra.mxu0 0.0
        %971 = vmatprep.subr.mxu0 0.0
        %972 = vmatpush2.msra.mxu0 0.0
        %973 = vmatprep.subr.mxu0 0.0
        %974 = vmatpush2.msra.mxu0 0.0
        %975 = vmatprep.subr.mxu0 0.0
        %976 = vmatpush2.msra.mxu0 0.0
        %977 = vmatprep.subr.mxu0 0.0
        %978 = vmatpush2.msra.mxu0 0.0
        %979 = vmatprep.subr.mxu0 0.0
        %980 = vmatpush2.msra.mxu0 0.0
        %981 = vmatprep.subr.mxu0 0.0
        %982 = vmatpush2.msra.mxu0 0.0
        %983 = vmatprep.subr.mxu0 0.0
        %984 = vmatpush2.msra.mxu0 0.0
        %985 = vmatprep.subr.mxu0 0.0
        %986 = vmatpush2.msra.mxu0 0.0
        %987 = vmatprep.subr.mxu0 0.0
        %988 = vmatpush2.msra.mxu0 0.0
        %989 = vmatprep.subr.mxu0 0.0
        %990 = vmatpush2.msra.mxu0 0.0
        %991 = vmatprep.subr.mxu0 0.0
        %992 = vmatpush2.msra.mxu0 0.0
        %993 = vmatprep.mubr.f32.mxu0 0.0
        %994 = vmatmul.mubr.f32.gmra.mxu0 %v577
        %v995 = vpop.f32.mrf.mxu0
        %v996 = vadd.f32 %v568, %v995
        %v997 = vpop.f32.mrf.mxu0
        %998 = vdwg.mxu0
        %v999 = vmul.f32 %v646, 0.25
        %v1000 = vmul.f32 %v716, 0.25
        %vm1001 = vcmask 130048
        %v1003 = vsel %vm1001, %v999, 0
        %v1006 = vsel %vm1001, %v786, 0
        %1008 = vmatprep.subr.mxu0 0.0
        %1009 = vmatpush1.xpose.msra.mxu0 0.0
        %1010 = vmatprep.subr.mxu0 0.0
        %1011 = vmatpush1.xpose.msra.mxu0 0.0
        %1012 = vmatprep.subr.mxu0 0.0
        %1013 = vmatpush1.xpose.msra.mxu0 0.0
        %1014 = vmatprep.subr.mxu0 0.0
        %1015 = vmatpush1.xpose.msra.mxu0 0.0
        %1016 = vmatprep.subr.mxu0 0.0
        %1017 = vmatpush1.xpose.msra.mxu0 0.0
        %1018 = vmatprep.subr.mxu0 0.0
        %1019 = vmatpush1.xpose.msra.mxu0 0.0
        %1020 = vmatprep.subr.mxu0 0.0
        %1021 = vmatpush1.xpose.msra.mxu0 0.0
        %1022 = vmatprep.subr.mxu0 0.0
        %1023 = vmatpush1.xpose.msra.mxu0 0.0
        %1024 = vmatprep.subr.mxu0 0.0
        %1025 = vmatpush1.xpose.msra.mxu0 0.0
        %1026 = vmatprep.subr.mxu0 0.0
        %1027 = vmatpush1.xpose.msra.mxu0 0.0
        %1028 = vmatprep.subr.mxu0 0.0
        %1029 = vmatpush1.xpose.msra.mxu0 0.0
        %1030 = vmatprep.subr.mxu0 0.0
        %1031 = vmatpush1.xpose.msra.mxu0 0.0
        %1032 = vmatprep.subr.mxu0 0.0
        %1033 = vmatpush1.xpose.msra.mxu0 0.0
        %1034 = vmatprep.subr.mxu0 0.0
        %1035 = vmatpush1.xpose.msra.mxu0 0.0
        %1036 = vmatprep.subr.mxu0 0.0
        %1037 = vmatpush1.xpose.msra.mxu0 0.0
        %1038 = vmatprep.subr.mxu0 0.0
        %1039 = vmatpush1.xpose.msra.mxu0 %v1006
        %1040 = vmatprep.subr.mxu0 0.0
        %1041 = vmatpush2.xpose.msra.mxu0 0.0
        %1042 = vmatprep.subr.mxu0 0.0
        %1043 = vmatpush2.xpose.msra.mxu0 0.0
        %1044 = vmatprep.subr.mxu0 0.0
        %1045 = vmatpush2.xpose.msra.mxu0 0.0
        %1046 = vmatprep.subr.mxu0 0.0
        %1047 = vmatpush2.xpose.msra.mxu0 0.0
        %1048 = vmatprep.subr.mxu0 0.0
        %1049 = vmatpush2.xpose.msra.mxu0 0.0
        %1050 = vmatprep.subr.mxu0 0.0
        %1051 = vmatpush2.xpose.msra.mxu0 0.0
        %1052 = vmatprep.subr.mxu0 0.0
        %1053 = vmatpush2.xpose.msra.mxu0 0.0
        %1054 = vmatprep.subr.mxu0 0.0
        %1055 = vmatpush2.xpose.msra.mxu0 0.0
        %1056 = vmatprep.subr.mxu0 0.0
        %1057 = vmatpush2.xpose.msra.mxu0 0.0
        %1058 = vmatprep.subr.mxu0 0.0
        %1059 = vmatpush2.xpose.msra.mxu0 0.0
        %1060 = vmatprep.subr.mxu0 0.0
        %1061 = vmatpush2.xpose.msra.mxu0 0.0
        %1062 = vmatprep.subr.mxu0 0.0
        %1063 = vmatpush2.xpose.msra.mxu0 0.0
        %1064 = vmatprep.subr.mxu0 0.0
        %1065 = vmatpush2.xpose.msra.mxu0 0.0
        %1066 = vmatprep.subr.mxu0 0.0
        %1067 = vmatpush2.xpose.msra.mxu0 0.0
        %1068 = vmatprep.subr.mxu0 0.0
        %1069 = vmatpush2.xpose.msra.mxu0 0.0
        %1070 = vmatprep.subr.mxu0 0.0
        %1071 = vmatpush2.xpose.msra.mxu0 0.0
        %1072 = vmatprep.mubr.f32.mxu0 0.0
        %1073 = vmatmul.mubr.f32.gmra.mxu0 %v1003
        %v1074 = vpop.f32.mrf.mxu0
        %v1075 = vadd.f32 0.0, %v1074
        %v1076 = vpop.f32.mrf.mxu0
        %1077 = vdwg.mxu0
        %v1079 = vsel %vm1001, %v1000, 0
        %v1082 = vsel %vm1001, %v856, 0
        %1084 = vmatprep.subr.mxu0 0.0
        %1085 = vmatpush1.xpose.msra.mxu0 0.0
        %1086 = vmatprep.subr.mxu0 0.0
        %1087 = vmatpush1.xpose.msra.mxu0 0.0
        %1088 = vmatprep.subr.mxu0 0.0
        %1089 = vmatpush1.xpose.msra.mxu0 0.0
        %1090 = vmatprep.subr.mxu0 0.0
        %1091 = vmatpush1.xpose.msra.mxu0 0.0
        %1092 = vmatprep.subr.mxu0 0.0
        %1093 = vmatpush1.xpose.msra.mxu0 0.0
        %1094 = vmatprep.subr.mxu0 0.0
        %1095 = vmatpush1.xpose.msra.mxu0 0.0
        %1096 = vmatprep.subr.mxu0 0.0
        %1097 = vmatpush1.xpose.msra.mxu0 0.0
        %1098 = vmatprep.subr.mxu0 0.0
        %1099 = vmatpush1.xpose.msra.mxu0 0.0
        %1100 = vmatprep.subr.mxu0 0.0
        %1101 = vmatpush1.xpose.msra.mxu0 0.0
        %1102 = vmatprep.subr.mxu0 0.0
        %1103 = vmatpush1.xpose.msra.mxu0 0.0
        %1104 = vmatprep.subr.mxu0 0.0
        %1105 = vmatpush1.xpose.msra.mxu0 0.0
        %1106 = vmatprep.subr.mxu0 0.0
        %1107 = vmatpush1.xpose.msra.mxu0 0.0
        %1108 = vmatprep.subr.mxu0 0.0
        %1109 = vmatpush1.xpose.msra.mxu0 0.0
        %1110 = vmatprep.subr.mxu0 0.0
        %1111 = vmatpush1.xpose.msra.mxu0 0.0
        %1112 = vmatprep.subr.mxu0 0.0
        %1113 = vmatpush1.xpose.msra.mxu0 0.0
        %1114 = vmatprep.subr.mxu0 0.0
        %1115 = vmatpush1.xpose.msra.mxu0 %v1082
        %1116 = vmatprep.subr.mxu0 0.0
        %1117 = vmatpush2.xpose.msra.mxu0 0.0
        %1118 = vmatprep.subr.mxu0 0.0
        %1119 = vmatpush2.xpose.msra.mxu0 0.0
        %1120 = vmatprep.subr.mxu0 0.0
        %1121 = vmatpush2.xpose.msra.mxu0 0.0
        %1122 = vmatprep.subr.mxu0 0.0
        %1123 = vmatpush2.xpose.msra.mxu0 0.0
        %1124 = vmatprep.subr.mxu0 0.0
        %1125 = vmatpush2.xpose.msra.mxu0 0.0
        %1126 = vmatprep.subr.mxu0 0.0
        %1127 = vmatpush2.xpose.msra.mxu0 0.0
        %1128 = vmatprep.subr.mxu0 0.0
        %1129 = vmatpush2.xpose.msra.mxu0 0.0
        %1130 = vmatprep.subr.mxu0 0.0
        %1131 = vmatpush2.xpose.msra.mxu0 0.0
        %1132 = vmatprep.subr.mxu0 0.0
        %1133 = vmatpush2.xpose.msra.mxu0 0.0
        %1134 = vmatprep.subr.mxu0 0.0
        %1135 = vmatpush2.xpose.msra.mxu0 0.0
        %1136 = vmatprep.subr.mxu0 0.0
        %1137 = vmatpush2.xpose.msra.mxu0 0.0
        %1138 = vmatprep.subr.mxu0 0.0
        %1139 = vmatpush2.xpose.msra.mxu0 0.0
        %1140 = vmatprep.subr.mxu0 0.0
        %1141 = vmatpush2.xpose.msra.mxu0 0.0
        %1142 = vmatprep.subr.mxu0 0.0
        %1143 = vmatpush2.xpose.msra.mxu0 0.0
        %1144 = vmatprep.subr.mxu0 0.0
        %1145 = vmatpush2.xpose.msra.mxu0 0.0
        %1146 = vmatprep.subr.mxu0 0.0
        %1147 = vmatpush2.xpose.msra.mxu0 0.0
        %1148 = vmatprep.mubr.f32.mxu0 0.0
        %1149 = vmatmul.mubr.f32.gmra.mxu0 %v1079
        %v1150 = vpop.f32.mrf.mxu0
        %v1151 = vadd.f32 0.0, %v1150
        %v1152 = vpop.f32.mrf.mxu0
        %1153 = vdwg.mxu0
        %v1154 = vsel %vm508, 1, 0
        %vm1155 = vcmp.eq.s32.totalorder %v1154, 1
        %v1156 = vsel %vm1155, -1e+09, %v1075
        %v1157 = vsel %vm1155, -1e+09, %v1151
        %vm1158 = vcmask 64512
        %v1159 = vsel %vm1158, %v1156, -inf
        %1160 = vmax.xlane.f32.xlu0 %v1159
        %v1161 = vpop.xlane.xlu0 %1160
        %v1162 = vsel %vm1158, %v1157, -inf
        %1163 = vmax.xlane.f32.xlu0 %v1162
        %v1164 = vpop.xlane.xlu0 %1163
        %v1165 = vsub.f32 %v1156, %v1161
        %v1166 = vsub.f32 %v1157, %v1164
        %v1167 = vmul.f32 %v1165, 1.442695
        %v1168 = vpow.pop %v1167
        %v1169 = vmul.f32 %v1166, 1.442695
        %v1170 = vpow.pop %v1169
        %v1171 = vsel %vm1158, %v1168, 0.0
        %1172 = vadd.xlane.f32.xlu0 %v1171
        %v1173 = vpop.xlane.xlu0 %1172
        %v1174 = vsel %vm1158, %v1170, 0.0
        %1175 = vadd.xlane.f32.xlu0 %v1174
        %v1176 = vpop.xlane.xlu0 %1175
        %v1177 = vrcp.pop %v1173
        %v1178 = vrcp.pop %v1176
        %v1179 = vmul.f32 %v1168, %v1177
        %v1180 = vmul.f32 %v1170, %v1178
        %v1182 = vsel %vm1158, %v1179, 0
        %1184 = vmatprep.subr.mxu0 0.0
        %1185 = vmatpush1.msra.mxu0 0.0
        %1186 = vmatprep.subr.mxu0 0.0
        %1187 = vmatpush1.msra.mxu0 0.0
        %1188 = vmatprep.subr.mxu0 0.0
        %1189 = vmatpush1.msra.mxu0 0.0
        %1190 = vmatprep.subr.mxu0 0.0
        %1191 = vmatpush1.msra.mxu0 0.0
        %1192 = vmatprep.subr.mxu0 0.0
        %1193 = vmatpush1.msra.mxu0 0.0
        %1194 = vmatprep.subr.mxu0 0.0
        %1195 = vmatpush1.msra.mxu0 0.0
        %1196 = vmatprep.subr.mxu0 0.0
        %1197 = vmatpush1.msra.mxu0 0.0
        %1198 = vmatprep.subr.mxu0 0.0
        %1199 = vmatpush1.msra.mxu0 0.0
        %1200 = vmatprep.subr.mxu0 0.0
        %1201 = vmatpush1.msra.mxu0 0.0
        %1202 = vmatprep.subr.mxu0 0.0
        %1203 = vmatpush1.msra.mxu0 0.0
        %1204 = vmatprep.subr.mxu0 0.0
        %1205 = vmatpush1.msra.mxu0 0.0
        %1206 = vmatprep.subr.mxu0 0.0
        %1207 = vmatpush1.msra.mxu0 0.0
        %1208 = vmatprep.subr.mxu0 0.0
        %1209 = vmatpush1.msra.mxu0 0.0
        %1210 = vmatprep.subr.mxu0 0.0
        %1211 = vmatpush1.msra.mxu0 0.0
        %1212 = vmatprep.subr.mxu0 0.0
        %1213 = vmatpush1.msra.mxu0 0.0
        %1214 = vmatprep.subr.mxu0 0.0
        %1215 = vmatpush1.msra.mxu0 %v926
        %1216 = vmatprep.subr.mxu0 0.0
        %1217 = vmatpush2.msra.mxu0 0.0
        %1218 = vmatprep.subr.mxu0 0.0
        %1219 = vmatpush2.msra.mxu0 0.0
        %1220 = vmatprep.subr.mxu0 0.0
        %1221 = vmatpush2.msra.mxu0 0.0
        %1222 = vmatprep.subr.mxu0 0.0
        %1223 = vmatpush2.msra.mxu0 0.0
        %1224 = vmatprep.subr.mxu0 0.0
        %1225 = vmatpush2.msra.mxu0 0.0
        %1226 = vmatprep.subr.mxu0 0.0
        %1227 = vmatpush2.msra.mxu0 0.0
        %1228 = vmatprep.subr.mxu0 0.0
        %1229 = vmatpush2.msra.mxu0 0.0
        %1230 = vmatprep.subr.mxu0 0.0
        %1231 = vmatpush2.msra.mxu0 0.0
        %1232 = vmatprep.subr.mxu0 0.0
        %1233 = vmatpush2.msra.mxu0 0.0
        %1234 = vmatprep.subr.mxu0 0.0
        %1235 = vmatpush2.msra.mxu0 0.0
        %1236 = vmatprep.subr.mxu0 0.0
        %1237 = vmatpush2.msra.mxu0 0.0
        %1238 = vmatprep.subr.mxu0 0.0
        %1239 = vmatpush2.msra.mxu0 0.0
        %1240 = vmatprep.subr.mxu0 0.0
        %1241 = vmatpush2.msra.mxu0 0.0
        %1242 = vmatprep.subr.mxu0 0.0
        %1243 = vmatpush2.msra.mxu0 0.0
        %1244 = vmatprep.subr.mxu0 0.0
        %1245 = vmatpush2.msra.mxu0 0.0
        %1246 = vmatprep.subr.mxu0 0.0
        %1247 = vmatpush2.msra.mxu0 0.0
        %1248 = vmatprep.mubr.f32.mxu0 0.0
        %1249 = vmatmul.mubr.f32.gmra.mxu0 %v1182
        %v1250 = vpop.f32.mrf.mxu0
        %v1251 = vadd.f32 0.0, %v1250
        %v1252 = vpop.f32.mrf.mxu0
        %1253 = vdwg.mxu0
        %v1255 = vsel %vm1158, %v1180, 0
        %1257 = vmatprep.subr.mxu0 0.0
        %1258 = vmatpush1.msra.mxu0 0.0
        %1259 = vmatprep.subr.mxu0 0.0
        %1260 = vmatpush1.msra.mxu0 0.0
        %1261 = vmatprep.subr.mxu0 0.0
        %1262 = vmatpush1.msra.mxu0 0.0
        %1263 = vmatprep.subr.mxu0 0.0
        %1264 = vmatpush1.msra.mxu0 0.0
        %1265 = vmatprep.subr.mxu0 0.0
        %1266 = vmatpush1.msra.mxu0 0.0
        %1267 = vmatprep.subr.mxu0 0.0
        %1268 = vmatpush1.msra.mxu0 0.0
        %1269 = vmatprep.subr.mxu0 0.0
        %1270 = vmatpush1.msra.mxu0 0.0
        %1271 = vmatprep.subr.mxu0 0.0
        %1272 = vmatpush1.msra.mxu0 0.0
        %1273 = vmatprep.subr.mxu0 0.0
        %1274 = vmatpush1.msra.mxu0 0.0
        %1275 = vmatprep.subr.mxu0 0.0
        %1276 = vmatpush1.msra.mxu0 0.0
        %1277 = vmatprep.subr.mxu0 0.0
        %1278 = vmatpush1.msra.mxu0 0.0
        %1279 = vmatprep.subr.mxu0 0.0
        %1280 = vmatpush1.msra.mxu0 0.0
        %1281 = vmatprep.subr.mxu0 0.0
        %1282 = vmatpush1.msra.mxu0 0.0
        %1283 = vmatprep.subr.mxu0 0.0
        %1284 = vmatpush1.msra.mxu0 0.0
        %1285 = vmatprep.subr.mxu0 0.0
        %1286 = vmatpush1.msra.mxu0 0.0
        %1287 = vmatprep.subr.mxu0 0.0
        %1288 = vmatpush1.msra.mxu0 %v996
        %1289 = vmatprep.subr.mxu0 0.0
        %1290 = vmatpush2.msra.mxu0 0.0
        %1291 = vmatprep.subr.mxu0 0.0
        %1292 = vmatpush2.msra.mxu0 0.0
        %1293 = vmatprep.subr.mxu0 0.0
        %1294 = vmatpush2.msra.mxu0 0.0
        %1295 = vmatprep.subr.mxu0 0.0
        %1296 = vmatpush2.msra.mxu0 0.0
        %1297 = vmatprep.subr.mxu0 0.0
        %1298 = vmatpush2.msra.mxu0 0.0
        %1299 = vmatprep.subr.mxu0 0.0
        %1300 = vmatpush2.msra.mxu0 0.0
        %1301 = vmatprep.subr.mxu0 0.0
        %1302 = vmatpush2.msra.mxu0 0.0
        %1303 = vmatprep.subr.mxu0 0.0
        %1304 = vmatpush2.msra.mxu0 0.0
        %1305 = vmatprep.subr.mxu0 0.0
        %1306 = vmatpush2.msra.mxu0 0.0
        %1307 = vmatprep.subr.mxu0 0.0
        %1308 = vmatpush2.msra.mxu0 0.0
        %1309 = vmatprep.subr.mxu0 0.0
        %1310 = vmatpush2.msra.mxu0 0.0
        %1311 = vmatprep.subr.mxu0 0.0
        %1312 = vmatpush2.msra.mxu0 0.0
        %1313 = vmatprep.subr.mxu0 0.0
        %1314 = vmatpush2.msra.mxu0 0.0
        %1315 = vmatprep.subr.mxu0 0.0
        %1316 = vmatpush2.msra.mxu0 0.0
        %1317 = vmatprep.subr.mxu0 0.0
        %1318 = vmatpush2.msra.mxu0 0.0
        %1319 = vmatprep.subr.mxu0 0.0
        %1320 = vmatpush2.msra.mxu0 0.0
        %1321 = vmatprep.mubr.f32.mxu0 0.0
        %1322 = vmatmul.mubr.f32.gmra.mxu0 %v1255
        %v1323 = vpop.f32.mrf.mxu0
        %v1324 = vadd.f32 0.0, %v1323
        %v1325 = vpop.f32.mrf.mxu0
        %1326 = vdwg.mxu0
        %v1327 = vld [vmem:[%s4] sm:$0xff]
        %v1328 = vld [vmem:[%s4 + $0x8] sm:$0xff]
        %v1329 = vld [vmem:[%s4 + $0x10] sm:$0xff]
        %v1330 = vld [vmem:[%s4 + $0x18] sm:$0xff]
        %v1332 = vsel %vm1001, %v1251, 0
        %1334 = vmatprep.subr.mxu0 0.0
        %1335 = vmatpush1.msra.mxu0 0.0
        %1336 = vmatprep.subr.mxu0 0.0
        %1337 = vmatpush1.msra.mxu0 0.0
        %1338 = vmatprep.subr.mxu0 0.0
        %1339 = vmatpush1.msra.mxu0 0.0
        %1340 = vmatprep.subr.mxu0 0.0
        %1341 = vmatpush1.msra.mxu0 0.0
        %1342 = vmatprep.subr.mxu0 0.0
        %1343 = vmatpush1.msra.mxu0 0.0
        %1344 = vmatprep.subr.mxu0 0.0
        %1345 = vmatpush1.msra.mxu0 0.0
        %1346 = vmatprep.subr.mxu0 0.0
        %1347 = vmatpush1.msra.mxu0 0.0
        %1348 = vmatprep.subr.mxu0 0.0
        %1349 = vmatpush1.msra.mxu0 0.0
        %1350 = vmatprep.subr.mxu0 0.0
        %1351 = vmatpush1.msra.mxu0 0.0
        %1352 = vmatprep.subr.mxu0 0.0
        %1353 = vmatpush1.msra.mxu0 0.0
        %1354 = vmatprep.subr.mxu0 0.0
        %1355 = vmatpush1.msra.mxu0 0.0
        %1356 = vmatprep.subr.mxu0 0.0
        %1357 = vmatpush1.msra.mxu0 0.0
        %1358 = vmatprep.subr.mxu0 0.0
        %1359 = vmatpush1.msra.mxu0 0.0
        %1360 = vmatprep.subr.mxu0 0.0
        %1361 = vmatpush1.msra.mxu0 0.0
        %1362 = vmatprep.subr.mxu0 0.0
        %1363 = vmatpush1.msra.mxu0 %v1328
        %1364 = vmatprep.subr.mxu0 0.0
        %1365 = vmatpush1.msra.mxu0 %v1327
        %1366 = vmatprep.subr.mxu0 0.0
        %1367 = vmatpush2.msra.mxu0 0.0
        %1368 = vmatprep.subr.mxu0 0.0
        %1369 = vmatpush2.msra.mxu0 0.0
        %1370 = vmatprep.subr.mxu0 0.0
        %1371 = vmatpush2.msra.mxu0 0.0
        %1372 = vmatprep.subr.mxu0 0.0
        %1373 = vmatpush2.msra.mxu0 0.0
        %1374 = vmatprep.subr.mxu0 0.0
        %1375 = vmatpush2.msra.mxu0 0.0
        %1376 = vmatprep.subr.mxu0 0.0
        %1377 = vmatpush2.msra.mxu0 0.0
        %1378 = vmatprep.subr.mxu0 0.0
        %1379 = vmatpush2.msra.mxu0 0.0
        %1380 = vmatprep.subr.mxu0 0.0
        %1381 = vmatpush2.msra.mxu0 0.0
        %1382 = vmatprep.subr.mxu0 0.0
        %1383 = vmatpush2.msra.mxu0 0.0
        %1384 = vmatprep.subr.mxu0 0.0
        %1385 = vmatpush2.msra.mxu0 0.0
        %1386 = vmatprep.subr.mxu0 0.0
        %1387 = vmatpush2.msra.mxu0 0.0
        %1388 = vmatprep.subr.mxu0 0.0
        %1389 = vmatpush2.msra.mxu0 0.0
        %1390 = vmatprep.subr.mxu0 0.0
        %1391 = vmatpush2.msra.mxu0 0.0
        %1392 = vmatprep.subr.mxu0 0.0
        %1393 = vmatpush2.msra.mxu0 0.0
        %1394 = vmatprep.subr.mxu0 0.0
        %1395 = vmatpush2.msra.mxu0 0.0
        %1396 = vmatprep.subr.mxu0 0.0
        %1397 = vmatpush2.msra.mxu0 0.0
        %1398 = vmatprep.mubr.f32.mxu0 0.0
        %1399 = vmatmul.mubr.f32.gmra.mxu0 %v1332
        %v1400 = vpop.f32.mrf.mxu0
        %v1401 = vadd.f32 0.0, %v1400
        %v1402 = vpop.f32.mrf.mxu0
        %1403 = vdwg.mxu0
        %v1405 = vsel %vm1001, %v1324, 0
        %1407 = vmatprep.subr.mxu0 0.0
        %1408 = vmatpush1.msra.mxu0 0.0
        %1409 = vmatprep.subr.mxu0 0.0
        %1410 = vmatpush1.msra.mxu0 0.0
        %1411 = vmatprep.subr.mxu0 0.0
        %1412 = vmatpush1.msra.mxu0 0.0
        %1413 = vmatprep.subr.mxu0 0.0
        %1414 = vmatpush1.msra.mxu0 0.0
        %1415 = vmatprep.subr.mxu0 0.0
        %1416 = vmatpush1.msra.mxu0 0.0
        %1417 = vmatprep.subr.mxu0 0.0
        %1418 = vmatpush1.msra.mxu0 0.0
        %1419 = vmatprep.subr.mxu0 0.0
        %1420 = vmatpush1.msra.mxu0 0.0
        %1421 = vmatprep.subr.mxu0 0.0
        %1422 = vmatpush1.msra.mxu0 0.0
        %1423 = vmatprep.subr.mxu0 0.0
        %1424 = vmatpush1.msra.mxu0 0.0
        %1425 = vmatprep.subr.mxu0 0.0
        %1426 = vmatpush1.msra.mxu0 0.0
        %1427 = vmatprep.subr.mxu0 0.0
        %1428 = vmatpush1.msra.mxu0 0.0
        %1429 = vmatprep.subr.mxu0 0.0
        %1430 = vmatpush1.msra.mxu0 0.0
        %1431 = vmatprep.subr.mxu0 0.0
        %1432 = vmatpush1.msra.mxu0 0.0
        %1433 = vmatprep.subr.mxu0 0.0
        %1434 = vmatpush1.msra.mxu0 0.0
        %1435 = vmatprep.subr.mxu0 0.0
        %1436 = vmatpush1.msra.mxu0 %v1330
        %1437 = vmatprep.subr.mxu0 0.0
        %1438 = vmatpush1.msra.mxu0 %v1329
        %1439 = vmatprep.subr.mxu0 0.0
        %1440 = vmatpush2.msra.mxu0 0.0
        %1441 = vmatprep.subr.mxu0 0.0
        %1442 = vmatpush2.msra.mxu0 0.0
        %1443 = vmatprep.subr.mxu0 0.0
        %1444 = vmatpush2.msra.mxu0 0.0
        %1445 = vmatprep.subr.mxu0 0.0
        %1446 = vmatpush2.msra.mxu0 0.0
        %1447 = vmatprep.subr.mxu0 0.0
        %1448 = vmatpush2.msra.mxu0 0.0
        %1449 = vmatprep.subr.mxu0 0.0
        %1450 = vmatpush2.msra.mxu0 0.0
        %1451 = vmatprep.subr.mxu0 0.0
        %1452 = vmatpush2.msra.mxu0 0.0
        %1453 = vmatprep.subr.mxu0 0.0
        %1454 = vmatpush2.msra.mxu0 0.0
        %1455 = vmatprep.subr.mxu0 0.0
        %1456 = vmatpush2.msra.mxu0 0.0
        %1457 = vmatprep.subr.mxu0 0.0
        %1458 = vmatpush2.msra.mxu0 0.0
        %1459 = vmatprep.subr.mxu0 0.0
        %1460 = vmatpush2.msra.mxu0 0.0
        %1461 = vmatprep.subr.mxu0 0.0
        %1462 = vmatpush2.msra.mxu0 0.0
        %1463 = vmatprep.subr.mxu0 0.0
        %1464 = vmatpush2.msra.mxu0 0.0
        %1465 = vmatprep.subr.mxu0 0.0
        %1466 = vmatpush2.msra.mxu0 0.0
        %1467 = vmatprep.subr.mxu0 0.0
        %1468 = vmatpush2.msra.mxu0 0.0
        %1469 = vmatprep.subr.mxu0 0.0
        %1470 = vmatpush2.msra.mxu0 0.0
        %1471 = vmatprep.mubr.f32.mxu0 0.0
        %1472 = vmatmul.mubr.f32.gmra.mxu0 %v1405
        %v1473 = vpop.f32.mrf.mxu0
        %v1474 = vadd.f32 0.0, %v1473
        %v1475 = vpop.f32.mrf.mxu0
        %1476 = vdwg.mxu0
        %v1477 = vsel %vm575, %v1401, 0.0
        %v1478 = vsel %vm575, %v1474, 0.0
        %v1479 = vadd.f32 %v1477, %v1478
        %v1480 = vld [vmem:[%s5] sm:$0x1]
        %v1482 = vlaneseq
        %v1483 = vshrl.u32 %v1482, 7
        %v1484 = vsub.s32 0, %v1483
        %v1485 = vrot.slane %v1480, %v1484
        %v1487 = vadd.f32 %v1479, %v1485
        %v1488 = vadd.f32 %v503, %v1487
        %v1489 = vld [vmem:[%s6] sm:$0x1]
        %v1490 = vld [vmem:[%s7] sm:$0x1]
        %v1491 = vsel %vm575, %v1488, 0.0
        %1492 = vadd.xlane.f32.xlu0 %v1491
        %v1493 = vpop.xlane.xlu0 %1492
        %v1494 = vrcp.pop 32.0
        %v1495 = vmul.f32 %v1493, %v1494
        %v1496 = vsub.f32 %v1488, %v1495
        %v1497 = vmul.f32 %v1496, %v1496
        %v1498 = vsel %vm575, %v1497, 0.0
        %1499 = vadd.xlane.f32.xlu0 %v1498
        %v1500 = vpop.xlane.xlu0 %1499
        %v1501 = vmul.f32 %v1500, %v1494
        %v1502 = vadd.f32 %v1501, 1e-06
        %v1503 = vrsqrt.pop %v1502
        %v1504 = vmul.f32 %v1496, %v1503
        %v1506 = vlaneseq
        %v1507 = vshrl.u32 %v1506, 7
        %v1508 = vsub.s32 0, %v1507
        %v1509 = vrot.slane %v1489, %v1508
        %v1511 = vmul.f32 %v1504, %v1509
        %v1513 = vlaneseq
        %v1514 = vshrl.u32 %v1513, 7
        %v1515 = vsub.s32 0, %v1514
        %v1516 = vrot.slane %v1490, %v1515
        %v1518 = vadd.f32 %v1511, %v1516
        %v1519 = vld [vmem:[%s8] sm:$0xff]
        %v1520 = vld [vmem:[%s8 + $0x8] sm:$0xff]
        %v1521 = vld [vmem:[%s8 + $0x10] sm:$0xff]
        %v1522 = vld [vmem:[%s8 + $0x18] sm:$0xff]
        %v1523 = vld [vmem:[%s9] sm:$0x1]
        %v1525 = vlaneseq
        %v1526 = vshrl.u32 %v1525, 7
        %v1527 = vsub.s32 0, %v1526
        %v1528 = vrot.slane %v1523, %v1527
        %v1531 = vsel %vm575, %v1518, 0
        %1533 = vmatprep.subr.mxu0 0.0
        %1534 = vmatpush1.msra.mxu0 0.0
        %1535 = vmatprep.subr.mxu0 0.0
        %1536 = vmatpush1.msra.mxu0 0.0
        %1537 = vmatprep.subr.mxu0 0.0
        %1538 = vmatpush1.msra.mxu0 0.0
        %1539 = vmatprep.subr.mxu0 0.0
        %1540 = vmatpush1.msra.mxu0 0.0
        %1541 = vmatprep.subr.mxu0 0.0
        %1542 = vmatpush1.msra.mxu0 0.0
        %1543 = vmatprep.subr.mxu0 0.0
        %1544 = vmatpush1.msra.mxu0 0.0
        %1545 = vmatprep.subr.mxu0 0.0
        %1546 = vmatpush1.msra.mxu0 0.0
        %1547 = vmatprep.subr.mxu0 0.0
        %1548 = vmatpush1.msra.mxu0 0.0
        %1549 = vmatprep.subr.mxu0 0.0
        %1550 = vmatpush1.msra.mxu0 0.0
        %1551 = vmatprep.subr.mxu0 0.0
        %1552 = vmatpush1.msra.mxu0 0.0
        %1553 = vmatprep.subr.mxu0 0.0
        %1554 = vmatpush1.msra.mxu0 0.0
        %1555 = vmatprep.subr.mxu0 0.0
        %1556 = vmatpush1.msra.mxu0 0.0
        %1557 = vmatprep.subr.mxu0 0.0
        %1558 = vmatpush1.msra.mxu0 %v1522
        %1559 = vmatprep.subr.mxu0 0.0
        %1560 = vmatpush1.msra.mxu0 %v1521
        %1561 = vmatprep.subr.mxu0 0.0
        %1562 = vmatpush1.msra.mxu0 %v1520
        %1563 = vmatprep.subr.mxu0 0.0
        %1564 = vmatpush1.msra.mxu0 %v1519
        %1565 = vmatprep.subr.mxu0 0.0
        %1566 = vmatpush2.msra.mxu0 0.0
        %1567 = vmatprep.subr.mxu0 0.0
        %1568 = vmatpush2.msra.mxu0 0.0
        %1569 = vmatprep.subr.mxu0 0.0
        %1570 = vmatpush2.msra.mxu0 0.0
        %1571 = vmatprep.subr.mxu0 0.0
        %1572 = vmatpush2.msra.mxu0 0.0
        %1573 = vmatprep.subr.mxu0 0.0
        %1574 = vmatpush2.msra.mxu0 0.0
        %1575 = vmatprep.subr.mxu0 0.0
        %1576 = vmatpush2.msra.mxu0 0.0
        %1577 = vmatprep.subr.mxu0 0.0
        %1578 = vmatpush2.msra.mxu0 0.0
        %1579 = vmatprep.subr.mxu0 0.0
        %1580 = vmatpush2.msra.mxu0 0.0
        %1581 = vmatprep.subr.mxu0 0.0
        %1582 = vmatpush2.msra.mxu0 0.0
        %1583 = vmatprep.subr.mxu0 0.0
        %1584 = vmatpush2.msra.mxu0 0.0
        %1585 = vmatprep.subr.mxu0 0.0
        %1586 = vmatpush2.msra.mxu0 0.0
        %1587 = vmatprep.subr.mxu0 0.0
        %1588 = vmatpush2.msra.mxu0 0.0
        %1589 = vmatprep.subr.mxu0 0.0
        %1590 = vmatpush2.msra.mxu0 0.0
        %1591 = vmatprep.subr.mxu0 0.0
        %1592 = vmatpush2.msra.mxu0 0.0
        %1593 = vmatprep.subr.mxu0 0.0
        %1594 = vmatpush2.msra.mxu0 0.0
        %1595 = vmatprep.subr.mxu0 0.0
        %1596 = vmatpush2.msra.mxu0 0.0
        %1597 = vmatprep.mubr.f32.mxu0 0.0
        %1598 = vmatmul.mubr.f32.gmra.mxu0 %v1531
        %v1599 = vpop.f32.mrf.mxu0
        %v1600 = vadd.f32 %v1528, %v1599
        %v1601 = vpop.f32.mrf.mxu0
        %1602 = vdwg.mxu0
        %v1603 = vmul.f32 %v1600, 0.5
        %v1604 = vrcp.pop 1.4142135
        %v1605 = vmul.f32 %v1600, %v1604
        %v1606 = verf.f32.pop %v1605
        %v1607 = vadd.f32 %v1606, 1.0
        %v1608 = vmul.f32 %v1603, %v1607
        %v1609 = vld [vmem:[%s10] sm:$0xff]
        %v1610 = vld [vmem:[%s10 + $0x8] sm:$0xff]
        %v1611 = vld [vmem:[%s10 + $0x10] sm:$0xff]
        %v1612 = vld [vmem:[%s10 + $0x18] sm:$0xff]
        %v1613 = vld [vmem:[%s10 + $0x20] sm:$0xff]
        %v1614 = vld [vmem:[%s10 + $0x28] sm:$0xff]
        %v1615 = vld [vmem:[%s10 + $0x30] sm:$0xff]
        %v1616 = vld [vmem:[%s10 + $0x38] sm:$0xff]
        %v1617 = vld [vmem:[%s11] sm:$0x1]
        %v1619 = vlaneseq
        %v1620 = vshrl.u32 %v1619, 7
        %v1621 = vsub.s32 0, %v1620
        %v1622 = vrot.slane %v1617, %v1621
        %vm1624 = vcmask 523264
        %v1626 = vsel %vm1624, %v1608, 0
        %1628 = vmatprep.subr.mxu0 0.0
        %1629 = vmatpush1.msra.mxu0 0.0
        %1630 = vmatprep.subr.mxu0 0.0
        %1631 = vmatpush1.msra.mxu0 0.0
        %1632 = vmatprep.subr.mxu0 0.0
        %1633 = vmatpush1.msra.mxu0 0.0
        %1634 = vmatprep.subr.mxu0 0.0
        %1635 = vmatpush1.msra.mxu0 0.0
        %1636 = vmatprep.subr.mxu0 0.0
        %1637 = vmatpush1.msra.mxu0 0.0
        %1638 = vmatprep.subr.mxu0 0.0
        %1639 = vmatpush1.msra.mxu0 0.0
        %1640 = vmatprep.subr.mxu0 0.0
        %1641 = vmatpush1.msra.mxu0 0.0
        %1642 = vmatprep.subr.mxu0 0.0
        %1643 = vmatpush1.msra.mxu0 0.0
        %1644 = vmatprep.subr.mxu0 0.0
        %1645 = vmatpush1.msra.mxu0 %v1616
        %1646 = vmatprep.subr.mxu0 0.0
        %1647 = vmatpush1.msra.mxu0 %v1615
        %1648 = vmatprep.subr.mxu0 0.0
        %1649 = vmatpush1.msra.mxu0 %v1614
        %1650 = vmatprep.subr.mxu0 0.0
        %1651 = vmatpush1.msra.mxu0 %v1613
        %1652 = vmatprep.subr.mxu0 0.0
        %1653 = vmatpush1.msra.mxu0 %v1612
        %1654 = vmatprep.subr.mxu0 0.0
        %1655 = vmatpush1.msra.mxu0 %v1611
        %1656 = vmatprep.subr.mxu0 0.0
        %1657 = vmatpush1.msra.mxu0 %v1610
        %1658 = vmatprep.subr.mxu0 0.0
        %1659 = vmatpush1.msra.mxu0 %v1609
        %1660 = vmatprep.subr.mxu0 0.0
        %1661 = vmatpush2.msra.mxu0 0.0
        %1662 = vmatprep.subr.mxu0 0.0
        %1663 = vmatpush2.msra.mxu0 0.0
        %1664 = vmatprep.subr.mxu0 0.0
        %1665 = vmatpush2.msra.mxu0 0.0
        %1666 = vmatprep.subr.mxu0 0.0
        %1667 = vmatpush2.msra.mxu0 0.0
        %1668 = vmatprep.subr.mxu0 0.0
        %1669 = vmatpush2.msra.mxu0 0.0
        %1670 = vmatprep.subr.mxu0 0.0
        %1671 = vmatpush2.msra.mxu0 0.0
        %1672 = vmatprep.subr.mxu0 0.0
        %1673 = vmatpush2.msra.mxu0 0.0
        %1674 = vmatprep.subr.mxu0 0.0
        %1675 = vmatpush2.msra.mxu0 0.0
        %1676 = vmatprep.subr.mxu0 0.0
        %1677 = vmatpush2.msra.mxu0 0.0
        %1678 = vmatprep.subr.mxu0 0.0
        %1679 = vmatpush2.msra.mxu0 0.0
        %1680 = vmatprep.subr.mxu0 0.0
        %1681 = vmatpush2.msra.mxu0 0.0
        %1682 = vmatprep.subr.mxu0 0.0
        %1683 = vmatpush2.msra.mxu0 0.0
        %1684 = vmatprep.subr.mxu0 0.0
        %1685 = vmatpush2.msra.mxu0 0.0
        %1686 = vmatprep.subr.mxu0 0.0
        %1687 = vmatpush2.msra.mxu0 0.0
        %1688 = vmatprep.subr.mxu0 0.0
        %1689 = vmatpush2.msra.mxu0 0.0
        %1690 = vmatprep.subr.mxu0 0.0
        %1691 = vmatpush2.msra.mxu0 0.0
        %1692 = vmatprep.mubr.f32.mxu0 0.0
        %1693 = vmatmul.mubr.f32.gmra.mxu0 %v1626
        %v1694 = vpop.f32.mrf.mxu0
        %v1695 = vadd.f32 %v1622, %v1694
        %v1696 = vpop.f32.mrf.mxu0
        %1697 = vdwg.mxu0
        %v1698 = vadd.f32 %v1518, %v1695
        %v1699 = vld [vmem:[%s12] sm:$0x1]
        %v1700 = vld [vmem:[%s13] sm:$0x1]
        %v1701 = vsel %vm575, %v1698, 0.0
        %1702 = vadd.xlane.f32.xlu0 %v1701
        %v1703 = vpop.xlane.xlu0 %1702
        %v1704 = vmul.f32 %v1703, %v1494
        %v1705 = vsub.f32 %v1698, %v1704
        %v1706 = vmul.f32 %v1705, %v1705
        %v1707 = vsel %vm575, %v1706, 0.0
        %1708 = vadd.xlane.f32.xlu0 %v1707
        %v1709 = vpop.xlane.xlu0 %1708
        %v1710 = vmul.f32 %v1709, %v1494
        %v1711 = vadd.f32 %v1710, 1e-06
        %v1712 = vrsqrt.pop %v1711
        %v1713 = vmul.f32 %v1705, %v1712
        %v1715 = vlaneseq
        %v1716 = vshrl.u32 %v1715, 7
        %v1717 = vsub.s32 0, %v1716
        %v1718 = vrot.slane %v1699, %v1717
        %v1720 = vmul.f32 %v1713, %v1718
        %v1722 = vlaneseq
        %v1723 = vshrl.u32 %v1722, 7
        %v1724 = vsub.s32 0, %v1723
        %v1725 = vrot.slane %v1700, %v1724
        %v1727 = vadd.f32 %v1720, %v1725
        %1728 = vrot.lane.b32.xlu0 %v1180, 8
        %v1729 = vpop.permute.xlu0 %1728
        %v1731 = vsel %vm1158, %v1179, %v1729
        %s1732 = scalar_lea.vmem %s2, 192
        %v1733 = vld [vmem:[%s1732] sm:$0xff]
        %v1734 = vld [vmem:[%s1732 + $0x8] sm:$0xff]
        %v1735 = vld [vmem:[%s1732 + $0x10] sm:$0xff]
        %v1736 = vld [vmem:[%s1732 + $0x18] sm:$0xff]
        %v1737 = vld [vmem:[%s1732 + $0x20] sm:$0xff]
        %v1738 = vld [vmem:[%s1732 + $0x28] sm:$0xff]
        %v1739 = vld [vmem:[%s1732 + $0x30] sm:$0xff]
        %v1740 = vld [vmem:[%s1732 + $0x38] sm:$0xff]
        %v1741 = vld [vmem:[%s1732 + $0x40] sm:$0xff]
        %v1742 = vld [vmem:[%s1732 + $0x48] sm:$0xff]
        %v1743 = vld [vmem:[%s1732 + $0x50] sm:$0xff]
        %v1744 = vld [vmem:[%s1732 + $0x58] sm:$0xff]
        %v1745 = vld [vmem:[%s1732 + $0x60] sm:$0xff]
        %v1746 = vld [vmem:[%s1732 + $0x68] sm:$0xff]
        %v1747 = vld [vmem:[%s1732 + $0x70] sm:$0xff]
        %v1748 = vld [vmem:[%s1732 + $0x78] sm:$0xff]
        %v1749 = vld [vmem:[%s1732 + $0x80] sm:$0xff]
        %v1750 = vld [vmem:[%s1732 + $0x88] sm:$0xff]
        %v1751 = vld [vmem:[%s1732 + $0x90] sm:$0xff]
        %v1752 = vld [vmem:[%s1732 + $0x98] sm:$0xff]
        %v1753 = vld [vmem:[%s1732 + $0xa0] sm:$0xff]
        %v1754 = vld [vmem:[%s1732 + $0xa8] sm:$0xff]
        %v1755 = vld [vmem:[%s1732 + $0xb0] sm:$0xff]
        %v1756 = vld [vmem:[%s1732 + $0xb8] sm:$0xff]
        %s1757 = scalar_lea.vmem %s3, 6
        %v1758 = vld [vmem:[%s1757] sm:$0x1]
        %v1759 = vld [vmem:[%s1757 + $0x1] sm:$0x1]
        %v1760 = vld [vmem:[%s1757 + $0x2] sm:$0x1]
        %v1761 = vld [vmem:[%s1757 + $0x3] sm:$0x1]
        %v1762 = vld [vmem:[%s1757 + $0x4] sm:$0x1]
        %v1763 = vld [vmem:[%s1757 + $0x5] sm:$0x1]
        %v1770 = vlaneseq
        %v1771 = vshrl.u32 %v1770, 7
        %v1772 = vsub.s32 0, %v1771
        %v1773 = vrot.slane %v1758, %v1772
        %v1774 = vlaneseq
        %v1775 = vshrl.u32 %v1774, 7
        %v1776 = vsub.s32 0, %v1775
        %v1777 = vrot.slane %v1759, %v1776
        %v1778 = vlaneseq
        %v1779 = vshrl.u32 %v1778, 7
        %v1780 = vsub.s32 0, %v1779
        %v1781 = vrot.slane %v1760, %v1780
        %v1782 = vlaneseq
        %v1783 = vshrl.u32 %v1782, 7
        %v1784 = vsub.s32 0, %v1783
        %v1785 = vrot.slane %v1761, %v1784
        %v1786 = vlaneseq
        %v1787 = vshrl.u32 %v1786, 7
        %v1788 = vsub.s32 0, %v1787
        %v1789 = vrot.slane %v1762, %v1788
        %v1790 = vlaneseq
        %v1791 = vshrl.u32 %v1790, 7
        %v1792 = vsub.s32 0, %v1791
        %v1793 = vrot.slane %v1763, %v1792
        %v1801 = vsel %vm575, %v1727, 0
        %1803 = vmatprep.subr.mxu0 0.0
        %1804 = vmatpush1.msra.mxu0 0.0
        %1805 = vmatprep.subr.mxu0 0.0
        %1806 = vmatpush1.msra.mxu0 0.0
        %1807 = vmatprep.subr.mxu0 0.0
        %1808 = vmatpush1.msra.mxu0 0.0
        %1809 = vmatprep.subr.mxu0 0.0
        %1810 = vmatpush1.msra.mxu0 0.0
        %1811 = vmatprep.subr.mxu0 0.0
        %1812 = vmatpush1.msra.mxu0 0.0
        %1813 = vmatprep.subr.mxu0 0.0
        %1814 = vmatpush1.msra.mxu0 0.0
        %1815 = vmatprep.subr.mxu0 0.0
        %1816 = vmatpush1.msra.mxu0 0.0
        %1817 = vmatprep.subr.mxu0 0.0
        %1818 = vmatpush1.msra.mxu0 0.0
        %1819 = vmatprep.subr.mxu0 0.0
        %1820 = vmatpush1.msra.mxu0 0.0
        %1821 = vmatprep.subr.mxu0 0.0
        %1822 = vmatpush1.msra.mxu0 0.0
        %1823 = vmatprep.subr.mxu0 0.0
        %1824 = vmatpush1.msra.mxu0 0.0
        %1825 = vmatprep.subr.mxu0 0.0
        %1826 = vmatpush1.msra.mxu0 0.0
        %1827 = vmatprep.subr.mxu0 0.0
        %1828 = vmatpush1.msra.mxu0 %v1736
        %1829 = vmatprep.subr.mxu0 0.0
        %1830 = vmatpush1.msra.mxu0 %v1735
        %1831 = vmatprep.subr.mxu0 0.0
        %1832 = vmatpush1.msra.mxu0 %v1734
        %1833 = vmatprep.subr.mxu0 0.0
        %1834 = vmatpush1.msra.mxu0 %v1733
        %1835 = vmatprep.subr.mxu0 0.0
        %1836 = vmatpush2.msra.mxu0 0.0
        %1837 = vmatprep.subr.mxu0 0.0
        %1838 = vmatpush2.msra.mxu0 0.0
        %1839 = vmatprep.subr.mxu0 0.0
        %1840 = vmatpush2.msra.mxu0 0.0
        %1841 = vmatprep.subr.mxu0 0.0
        %1842 = vmatpush2.msra.mxu0 0.0
        %1843 = vmatprep.subr.mxu0 0.0
        %1844 = vmatpush2.msra.mxu0 0.0
        %1845 = vmatprep.subr.mxu0 0.0
        %1846 = vmatpush2.msra.mxu0 0.0
        %1847 = vmatprep.subr.mxu0 0.0
        %1848 = vmatpush2.msra.mxu0 0.0
        %1849 = vmatprep.subr.mxu0 0.0
        %1850 = vmatpush2.msra.mxu0 0.0
        %1851 = vmatprep.subr.mxu0 0.0
        %1852 = vmatpush2.msra.mxu0 0.0
        %1853 = vmatprep.subr.mxu0 0.0
        %1854 = vmatpush2.msra.mxu0 0.0
        %1855 = vmatprep.subr.mxu0 0.0
        %1856 = vmatpush2.msra.mxu0 0.0
        %1857 = vmatprep.subr.mxu0 0.0
        %1858 = vmatpush2.msra.mxu0 0.0
        %1859 = vmatprep.subr.mxu0 0.0
        %1860 = vmatpush2.msra.mxu0 0.0
        %1861 = vmatprep.subr.mxu0 0.0
        %1862 = vmatpush2.msra.mxu0 0.0
        %1863 = vmatprep.subr.mxu0 0.0
        %1864 = vmatpush2.msra.mxu0 0.0
        %1865 = vmatprep.subr.mxu0 0.0
        %1866 = vmatpush2.msra.mxu0 0.0
        %1867 = vmatprep.mubr.f32.mxu0 0.0
        %1868 = vmatmul.mubr.f32.gmra.mxu0 %v1801
        %v1869 = vpop.f32.mrf.mxu0
        %v1870 = vadd.f32 %v1773, %v1869
        %v1871 = vpop.f32.mrf.mxu0
        %1872 = vdwg.mxu0
        %1873 = vmatprep.subr.mxu0 0.0
        %1874 = vmatpush1.msra.mxu0 0.0
        %1875 = vmatprep.subr.mxu0 0.0
        %1876 = vmatpush1.msra.mxu0 0.0
        %1877 = vmatprep.subr.mxu0 0.0
        %1878 = vmatpush1.msra.mxu0 0.0
        %1879 = vmatprep.subr.mxu0 0.0
        %1880 = vmatpush1.msra.mxu0 0.0
        %1881 = vmatprep.subr.mxu0 0.0
        %1882 = vmatpush1.msra.mxu0 0.0
        %1883 = vmatprep.subr.mxu0 0.0
        %1884 = vmatpush1.msra.mxu0 0.0
        %1885 = vmatprep.subr.mxu0 0.0
        %1886 = vmatpush1.msra.mxu0 0.0
        %1887 = vmatprep.subr.mxu0 0.0
        %1888 = vmatpush1.msra.mxu0 0.0
        %1889 = vmatprep.subr.mxu0 0.0
        %1890 = vmatpush1.msra.mxu0 0.0
        %1891 = vmatprep.subr.mxu0 0.0
        %1892 = vmatpush1.msra.mxu0 0.0
        %1893 = vmatprep.subr.mxu0 0.0
        %1894 = vmatpush1.msra.mxu0 0.0
        %1895 = vmatprep.subr.mxu0 0.0
        %1896 = vmatpush1.msra.mxu0 0.0
        %1897 = vmatprep.subr.mxu0 0.0
        %1898 = vmatpush1.msra.mxu0 %v1740
        %1899 = vmatprep.subr.mxu0 0.0
        %1900 = vmatpush1.msra.mxu0 %v1739
        %1901 = vmatprep.subr.mxu0 0.0
        %1902 = vmatpush1.msra.mxu0 %v1738
        %1903 = vmatprep.subr.mxu0 0.0
        %1904 = vmatpush1.msra.mxu0 %v1737
        %1905 = vmatprep.subr.mxu0 0.0
        %1906 = vmatpush2.msra.mxu0 0.0
        %1907 = vmatprep.subr.mxu0 0.0
        %1908 = vmatpush2.msra.mxu0 0.0
        %1909 = vmatprep.subr.mxu0 0.0
        %1910 = vmatpush2.msra.mxu0 0.0
        %1911 = vmatprep.subr.mxu0 0.0
        %1912 = vmatpush2.msra.mxu0 0.0
        %1913 = vmatprep.subr.mxu0 0.0
        %1914 = vmatpush2.msra.mxu0 0.0
        %1915 = vmatprep.subr.mxu0 0.0
        %1916 = vmatpush2.msra.mxu0 0.0
        %1917 = vmatprep.subr.mxu0 0.0
        %1918 = vmatpush2.msra.mxu0 0.0
        %1919 = vmatprep.subr.mxu0 0.0
        %1920 = vmatpush2.msra.mxu0 0.0
        %1921 = vmatprep.subr.mxu0 0.0
        %1922 = vmatpush2.msra.mxu0 0.0
        %1923 = vmatprep.subr.mxu0 0.0
        %1924 = vmatpush2.msra.mxu0 0.0
        %1925 = vmatprep.subr.mxu0 0.0
        %1926 = vmatpush2.msra.mxu0 0.0
        %1927 = vmatprep.subr.mxu0 0.0
        %1928 = vmatpush2.msra.mxu0 0.0
        %1929 = vmatprep.subr.mxu0 0.0
        %1930 = vmatpush2.msra.mxu0 0.0
        %1931 = vmatprep.subr.mxu0 0.0
        %1932 = vmatpush2.msra.mxu0 0.0
        %1933 = vmatprep.subr.mxu0 0.0
        %1934 = vmatpush2.msra.mxu0 0.0
        %1935 = vmatprep.subr.mxu0 0.0
        %1936 = vmatpush2.msra.mxu0 0.0
        %1937 = vmatprep.mubr.f32.mxu0 0.0
        %1938 = vmatmul.mubr.f32.gmra.mxu0 %v1801
        %v1939 = vpop.f32.mrf.mxu0
        %v1940 = vadd.f32 %v1777, %v1939
        %v1941 = vpop.f32.mrf.mxu0
        %1942 = vdwg.mxu0
        %1943 = vmatprep.subr.mxu0 0.0
        %1944 = vmatpush1.msra.mxu0 0.0
        %1945 = vmatprep.subr.mxu0 0.0
        %1946 = vmatpush1.msra.mxu0 0.0
        %1947 = vmatprep.subr.mxu0 0.0
        %1948 = vmatpush1.msra.mxu0 0.0
        %1949 = vmatprep.subr.mxu0 0.0
        %1950 = vmatpush1.msra.mxu0 0.0
        %1951 = vmatprep.subr.mxu0 0.0
        %1952 = vmatpush1.msra.mxu0 0.0
        %1953 = vmatprep.subr.mxu0 0.0
        %1954 = vmatpush1.msra.mxu0 0.0
        %1955 = vmatprep.subr.mxu0 0.0
        %1956 = vmatpush1.msra.mxu0 0.0
        %1957 = vmatprep.subr.mxu0 0.0
        %1958 = vmatpush1.msra.mxu0 0.0
        %1959 = vmatprep.subr.mxu0 0.0
        %1960 = vmatpush1.msra.mxu0 0.0
        %1961 = vmatprep.subr.mxu0 0.0
        %1962 = vmatpush1.msra.mxu0 0.0
        %1963 = vmatprep.subr.mxu0 0.0
        %1964 = vmatpush1.msra.mxu0 0.0
        %1965 = vmatprep.subr.mxu0 0.0
        %1966 = vmatpush1.msra.mxu0 0.0
        %1967 = vmatprep.subr.mxu0 0.0
        %1968 = vmatpush1.msra.mxu0 %v1744
        %1969 = vmatprep.subr.mxu0 0.0
        %1970 = vmatpush1.msra.mxu0 %v1743
        %1971 = vmatprep.subr.mxu0 0.0
        %1972 = vmatpush1.msra.mxu0 %v1742
        %1973 = vmatprep.subr.mxu0 0.0
        %1974 = vmatpush1.msra.mxu0 %v1741
        %1975 = vmatprep.subr.mxu0 0.0
        %1976 = vmatpush2.msra.mxu0 0.0
        %1977 = vmatprep.subr.mxu0 0.0
        %1978 = vmatpush2.msra.mxu0 0.0
        %1979 = vmatprep.subr.mxu0 0.0
        %1980 = vmatpush2.msra.mxu0 0.0
        %1981 = vmatprep.subr.mxu0 0.0
        %1982 = vmatpush2.msra.mxu0 0.0
        %1983 = vmatprep.subr.mxu0 0.0
        %1984 = vmatpush2.msra.mxu0 0.0
        %1985 = vmatprep.subr.mxu0 0.0
        %1986 = vmatpush2.msra.mxu0 0.0
        %1987 = vmatprep.subr.mxu0 0.0
        %1988 = vmatpush2.msra.mxu0 0.0
        %1989 = vmatprep.subr.mxu0 0.0
        %1990 = vmatpush2.msra.mxu0 0.0
        %1991 = vmatprep.subr.mxu0 0.0
        %1992 = vmatpush2.msra.mxu0 0.0
        %1993 = vmatprep.subr.mxu0 0.0
        %1994 = vmatpush2.msra.mxu0 0.0
        %1995 = vmatprep.subr.mxu0 0.0
        %1996 = vmatpush2.msra.mxu0 0.0
        %1997 = vmatprep.subr.mxu0 0.0
        %1998 = vmatpush2.msra.mxu0 0.0
        %1999 = vmatprep.subr.mxu0 0.0
        %2000 = vmatpush2.msra.mxu0 0.0
        %2001 = vmatprep.subr.mxu0 0.0
        %2002 = vmatpush2.msra.mxu0 0.0
        %2003 = vmatprep.subr.mxu0 0.0
        %2004 = vmatpush2.msra.mxu0 0.0
        %2005 = vmatprep.subr.mxu0 0.0
        %2006 = vmatpush2.msra.mxu0 0.0
        %2007 = vmatprep.mubr.f32.mxu0 0.0
        %2008 = vmatmul.mubr.f32.gmra.mxu0 %v1801
        %v2009 = vpop.f32.mrf.mxu0
        %v2010 = vadd.f32 %v1781, %v2009
        %v2011 = vpop.f32.mrf.mxu0
        %2012 = vdwg.mxu0
        %2013 = vmatprep.subr.mxu0 0.0
        %2014 = vmatpush1.msra.mxu0 0.0
        %2015 = vmatprep.subr.mxu0 0.0
        %2016 = vmatpush1.msra.mxu0 0.0
        %2017 = vmatprep.subr.mxu0 0.0
        %2018 = vmatpush1.msra.mxu0 0.0
        %2019 = vmatprep.subr.mxu0 0.0
        %2020 = vmatpush1.msra.mxu0 0.0
        %2021 = vmatprep.subr.mxu0 0.0
        %2022 = vmatpush1.msra.mxu0 0.0
        %2023 = vmatprep.subr.mxu0 0.0
        %2024 = vmatpush1.msra.mxu0 0.0
        %2025 = vmatprep.subr.mxu0 0.0
        %2026 = vmatpush1.msra.mxu0 0.0
        %2027 = vmatprep.subr.mxu0 0.0
        %2028 = vmatpush1.msra.mxu0 0.0
        %2029 = vmatprep.subr.mxu0 0.0
        %2030 = vmatpush1.msra.mxu0 0.0
        %2031 = vmatprep.subr.mxu0 0.0
        %2032 = vmatpush1.msra.mxu0 0.0
        %2033 = vmatprep.subr.mxu0 0.0
        %2034 = vmatpush1.msra.mxu0 0.0
        %2035 = vmatprep.subr.mxu0 0.0
        %2036 = vmatpush1.msra.mxu0 0.0
        %2037 = vmatprep.subr.mxu0 0.0
        %2038 = vmatpush1.msra.mxu0 %v1748
        %2039 = vmatprep.subr.mxu0 0.0
        %2040 = vmatpush1.msra.mxu0 %v1747
        %2041 = vmatprep.subr.mxu0 0.0
        %2042 = vmatpush1.msra.mxu0 %v1746
        %2043 = vmatprep.subr.mxu0 0.0
        %2044 = vmatpush1.msra.mxu0 %v1745
        %2045 = vmatprep.subr.mxu0 0.0
        %2046 = vmatpush2.msra.mxu0 0.0
        %2047 = vmatprep.subr.mxu0 0.0
        %2048 = vmatpush2.msra.mxu0 0.0
        %2049 = vmatprep.subr.mxu0 0.0
        %2050 = vmatpush2.msra.mxu0 0.0
        %2051 = vmatprep.subr.mxu0 0.0
        %2052 = vmatpush2.msra.mxu0 0.0
        %2053 = vmatprep.subr.mxu0 0.0
        %2054 = vmatpush2.msra.mxu0 0.0
        %2055 = vmatprep.subr.mxu0 0.0
        %2056 = vmatpush2.msra.mxu0 0.0
        %2057 = vmatprep.subr.mxu0 0.0
        %2058 = vmatpush2.msra.mxu0 0.0
        %2059 = vmatprep.subr.mxu0 0.0
        %2060 = vmatpush2.msra.mxu0 0.0
        %2061 = vmatprep.subr.mxu0 0.0
        %2062 = vmatpush2.msra.mxu0 0.0
        %2063 = vmatprep.subr.mxu0 0.0
        %2064 = vmatpush2.msra.mxu0 0.0
        %2065 = vmatprep.subr.mxu0 0.0
        %2066 = vmatpush2.msra.mxu0 0.0
        %2067 = vmatprep.subr.mxu0 0.0
        %2068 = vmatpush2.msra.mxu0 0.0
        %2069 = vmatprep.subr.mxu0 0.0
        %2070 = vmatpush2.msra.mxu0 0.0
        %2071 = vmatprep.subr.mxu0 0.0
        %2072 = vmatpush2.msra.mxu0 0.0
        %2073 = vmatprep.subr.mxu0 0.0
        %2074 = vmatpush2.msra.mxu0 0.0
        %2075 = vmatprep.subr.mxu0 0.0
        %2076 = vmatpush2.msra.mxu0 0.0
        %2077 = vmatprep.mubr.f32.mxu0 0.0
        %2078 = vmatmul.mubr.f32.gmra.mxu0 %v1801
        %v2079 = vpop.f32.mrf.mxu0
        %v2080 = vadd.f32 %v1785, %v2079
        %v2081 = vpop.f32.mrf.mxu0
        %2082 = vdwg.mxu0
        %2083 = vmatprep.subr.mxu0 0.0
        %2084 = vmatpush1.msra.mxu0 0.0
        %2085 = vmatprep.subr.mxu0 0.0
        %2086 = vmatpush1.msra.mxu0 0.0
        %2087 = vmatprep.subr.mxu0 0.0
        %2088 = vmatpush1.msra.mxu0 0.0
        %2089 = vmatprep.subr.mxu0 0.0
        %2090 = vmatpush1.msra.mxu0 0.0
        %2091 = vmatprep.subr.mxu0 0.0
        %2092 = vmatpush1.msra.mxu0 0.0
        %2093 = vmatprep.subr.mxu0 0.0
        %2094 = vmatpush1.msra.mxu0 0.0
        %2095 = vmatprep.subr.mxu0 0.0
        %2096 = vmatpush1.msra.mxu0 0.0
        %2097 = vmatprep.subr.mxu0 0.0
        %2098 = vmatpush1.msra.mxu0 0.0
        %2099 = vmatprep.subr.mxu0 0.0
        %2100 = vmatpush1.msra.mxu0 0.0
        %2101 = vmatprep.subr.mxu0 0.0
        %2102 = vmatpush1.msra.mxu0 0.0
        %2103 = vmatprep.subr.mxu0 0.0
        %2104 = vmatpush1.msra.mxu0 0.0
        %2105 = vmatprep.subr.mxu0 0.0
        %2106 = vmatpush1.msra.mxu0 0.0
        %2107 = vmatprep.subr.mxu0 0.0
        %2108 = vmatpush1.msra.mxu0 %v1752
        %2109 = vmatprep.subr.mxu0 0.0
        %2110 = vmatpush1.msra.mxu0 %v1751
        %2111 = vmatprep.subr.mxu0 0.0
        %2112 = vmatpush1.msra.mxu0 %v1750
        %2113 = vmatprep.subr.mxu0 0.0
        %2114 = vmatpush1.msra.mxu0 %v1749
        %2115 = vmatprep.subr.mxu0 0.0
        %2116 = vmatpush2.msra.mxu0 0.0
        %2117 = vmatprep.subr.mxu0 0.0
        %2118 = vmatpush2.msra.mxu0 0.0
        %2119 = vmatprep.subr.mxu0 0.0
        %2120 = vmatpush2.msra.mxu0 0.0
        %2121 = vmatprep.subr.mxu0 0.0
        %2122 = vmatpush2.msra.mxu0 0.0
        %2123 = vmatprep.subr.mxu0 0.0
        %2124 = vmatpush2.msra.mxu0 0.0
        %2125 = vmatprep.subr.mxu0 0.0
        %2126 = vmatpush2.msra.mxu0 0.0
        %2127 = vmatprep.subr.mxu0 0.0
        %2128 = vmatpush2.msra.mxu0 0.0
        %2129 = vmatprep.subr.mxu0 0.0
        %2130 = vmatpush2.msra.mxu0 0.0
        %2131 = vmatprep.subr.mxu0 0.0
        %2132 = vmatpush2.msra.mxu0 0.0
        %2133 = vmatprep.subr.mxu0 0.0
        %2134 = vmatpush2.msra.mxu0 0.0
        %2135 = vmatprep.subr.mxu0 0.0
        %2136 = vmatpush2.msra.mxu0 0.0
        %2137 = vmatprep.subr.mxu0 0.0
        %2138 = vmatpush2.msra.mxu0 0.0
        %2139 = vmatprep.subr.mxu0 0.0
        %2140 = vmatpush2.msra.mxu0 0.0
        %2141 = vmatprep.subr.mxu0 0.0
        %2142 = vmatpush2.msra.mxu0 0.0
        %2143 = vmatprep.subr.mxu0 0.0
        %2144 = vmatpush2.msra.mxu0 0.0
        %2145 = vmatprep.subr.mxu0 0.0
        %2146 = vmatpush2.msra.mxu0 0.0
        %2147 = vmatprep.mubr.f32.mxu0 0.0
        %2148 = vmatmul.mubr.f32.gmra.mxu0 %v1801
        %v2149 = vpop.f32.mrf.mxu0
        %v2150 = vadd.f32 %v1789, %v2149
        %v2151 = vpop.f32.mrf.mxu0
        %2152 = vdwg.mxu0
        %2153 = vmatprep.subr.mxu0 0.0
        %2154 = vmatpush1.msra.mxu0 0.0
        %2155 = vmatprep.subr.mxu0 0.0
        %2156 = vmatpush1.msra.mxu0 0.0
        %2157 = vmatprep.subr.mxu0 0.0
        %2158 = vmatpush1.msra.mxu0 0.0
        %2159 = vmatprep.subr.mxu0 0.0
        %2160 = vmatpush1.msra.mxu0 0.0
        %2161 = vmatprep.subr.mxu0 0.0
        %2162 = vmatpush1.msra.mxu0 0.0
        %2163 = vmatprep.subr.mxu0 0.0
        %2164 = vmatpush1.msra.mxu0 0.0
        %2165 = vmatprep.subr.mxu0 0.0
        %2166 = vmatpush1.msra.mxu0 0.0
        %2167 = vmatprep.subr.mxu0 0.0
        %2168 = vmatpush1.msra.mxu0 0.0
        %2169 = vmatprep.subr.mxu0 0.0
        %2170 = vmatpush1.msra.mxu0 0.0
        %2171 = vmatprep.subr.mxu0 0.0
        %2172 = vmatpush1.msra.mxu0 0.0
        %2173 = vmatprep.subr.mxu0 0.0
        %2174 = vmatpush1.msra.mxu0 0.0
        %2175 = vmatprep.subr.mxu0 0.0
        %2176 = vmatpush1.msra.mxu0 0.0
        %2177 = vmatprep.subr.mxu0 0.0
        %2178 = vmatpush1.msra.mxu0 %v1756
        %2179 = vmatprep.subr.mxu0 0.0
        %2180 = vmatpush1.msra.mxu0 %v1755
        %2181 = vmatprep.subr.mxu0 0.0
        %2182 = vmatpush1.msra.mxu0 %v1754
        %2183 = vmatprep.subr.mxu0 0.0
        %2184 = vmatpush1.msra.mxu0 %v1753
        %2185 = vmatprep.subr.mxu0 0.0
        %2186 = vmatpush2.msra.mxu0 0.0
        %2187 = vmatprep.subr.mxu0 0.0
        %2188 = vmatpush2.msra.mxu0 0.0
        %2189 = vmatprep.subr.mxu0 0.0
        %2190 = vmatpush2.msra.mxu0 0.0
        %2191 = vmatprep.subr.mxu0 0.0
        %2192 = vmatpush2.msra.mxu0 0.0
        %2193 = vmatprep.subr.mxu0 0.0
        %2194 = vmatpush2.msra.mxu0 0.0
        %2195 = vmatprep.subr.mxu0 0.0
        %2196 = vmatpush2.msra.mxu0 0.0
        %2197 = vmatprep.subr.mxu0 0.0
        %2198 = vmatpush2.msra.mxu0 0.0
        %2199 = vmatprep.subr.mxu0 0.0
        %2200 = vmatpush2.msra.mxu0 0.0
        %2201 = vmatprep.subr.mxu0 0.0
        %2202 = vmatpush2.msra.mxu0 0.0
        %2203 = vmatprep.subr.mxu0 0.0
        %2204 = vmatpush2.msra.mxu0 0.0
        %2205 = vmatprep.subr.mxu0 0.0
        %2206 = vmatpush2.msra.mxu0 0.0
        %2207 = vmatprep.subr.mxu0 0.0
        %2208 = vmatpush2.msra.mxu0 0.0
        %2209 = vmatprep.subr.mxu0 0.0
        %2210 = vmatpush2.msra.mxu0 0.0
        %2211 = vmatprep.subr.mxu0 0.0
        %2212 = vmatpush2.msra.mxu0 0.0
        %2213 = vmatprep.subr.mxu0 0.0
        %2214 = vmatpush2.msra.mxu0 0.0
        %2215 = vmatprep.subr.mxu0 0.0
        %2216 = vmatpush2.msra.mxu0 0.0
        %2217 = vmatprep.mubr.f32.mxu0 0.0
        %2218 = vmatmul.mubr.f32.gmra.mxu0 %v1801
        %v2219 = vpop.f32.mrf.mxu0
        %v2220 = vadd.f32 %v1793, %v2219
        %v2221 = vpop.f32.mrf.mxu0
        %2222 = vdwg.mxu0
        %v2223 = vmul.f32 %v1870, 0.25
        %v2224 = vmul.f32 %v1940, 0.25
        %v2226 = vsel %vm1001, %v2223, 0
        %v2229 = vsel %vm1001, %v2010, 0
        %2231 = vmatprep.subr.mxu0 0.0
        %2232 = vmatpush1.xpose.msra.mxu0 0.0
        %2233 = vmatprep.subr.mxu0 0.0
        %2234 = vmatpush1.xpose.msra.mxu0 0.0
        %2235 = vmatprep.subr.mxu0 0.0
        %2236 = vmatpush1.xpose.msra.mxu0 0.0
        %2237 = vmatprep.subr.mxu0 0.0
        %2238 = vmatpush1.xpose.msra.mxu0 0.0
        %2239 = vmatprep.subr.mxu0 0.0
        %2240 = vmatpush1.xpose.msra.mxu0 0.0
        %2241 = vmatprep.subr.mxu0 0.0
        %2242 = vmatpush1.xpose.msra.mxu0 0.0
        %2243 = vmatprep.subr.mxu0 0.0
        %2244 = vmatpush1.xpose.msra.mxu0 0.0
        %2245 = vmatprep.subr.mxu0 0.0
        %2246 = vmatpush1.xpose.msra.mxu0 0.0
        %2247 = vmatprep.subr.mxu0 0.0
        %2248 = vmatpush1.xpose.msra.mxu0 0.0
        %2249 = vmatprep.subr.mxu0 0.0
        %2250 = vmatpush1.xpose.msra.mxu0 0.0
        %2251 = vmatprep.subr.mxu0 0.0
        %2252 = vmatpush1.xpose.msra.mxu0 0.0
        %2253 = vmatprep.subr.mxu0 0.0
        %2254 = vmatpush1.xpose.msra.mxu0 0.0
        %2255 = vmatprep.subr.mxu0 0.0
        %2256 = vmatpush1.xpose.msra.mxu0 0.0
        %2257 = vmatprep.subr.mxu0 0.0
        %2258 = vmatpush1.xpose.msra.mxu0 0.0
        %2259 = vmatprep.subr.mxu0 0.0
        %2260 = vmatpush1.xpose.msra.mxu0 0.0
        %2261 = vmatprep.subr.mxu0 0.0
        %2262 = vmatpush1.xpose.msra.mxu0 %v2229
        %2263 = vmatprep.subr.mxu0 0.0
        %2264 = vmatpush2.xpose.msra.mxu0 0.0
        %2265 = vmatprep.subr.mxu0 0.0
        %2266 = vmatpush2.xpose.msra.mxu0 0.0
        %2267 = vmatprep.subr.mxu0 0.0
        %2268 = vmatpush2.xpose.msra.mxu0 0.0
        %2269 = vmatprep.subr.mxu0 0.0
        %2270 = vmatpush2.xpose.msra.mxu0 0.0
        %2271 = vmatprep.subr.mxu0 0.0
        %2272 = vmatpush2.xpose.msra.mxu0 0.0
        %2273 = vmatprep.subr.mxu0 0.0
        %2274 = vmatpush2.xpose.msra.mxu0 0.0
        %2275 = vmatprep.subr.mxu0 0.0
        %2276 = vmatpush2.xpose.msra.mxu0 0.0
        %2277 = vmatprep.subr.mxu0 0.0
        %2278 = vmatpush2.xpose.msra.mxu0 0.0
        %2279 = vmatprep.subr.mxu0 0.0
        %2280 = vmatpush2.xpose.msra.mxu0 0.0
        %2281 = vmatprep.subr.mxu0 0.0
        %2282 = vmatpush2.xpose.msra.mxu0 0.0
        %2283 = vmatprep.subr.mxu0 0.0
        %2284 = vmatpush2.xpose.msra.mxu0 0.0
        %2285 = vmatprep.subr.mxu0 0.0
        %2286 = vmatpush2.xpose.msra.mxu0 0.0
        %2287 = vmatprep.subr.mxu0 0.0
        %2288 = vmatpush2.xpose.msra.mxu0 0.0
        %2289 = vmatprep.subr.mxu0 0.0
        %2290 = vmatpush2.xpose.msra.mxu0 0.0
        %2291 = vmatprep.subr.mxu0 0.0
        %2292 = vmatpush2.xpose.msra.mxu0 0.0
        %2293 = vmatprep.subr.mxu0 0.0
        %2294 = vmatpush2.xpose.msra.mxu0 0.0
        %2295 = vmatprep.mubr.f32.mxu0 0.0
        %2296 = vmatmul.mubr.f32.gmra.mxu0 %v2226
        %v2297 = vpop.f32.mrf.mxu0
        %v2298 = vadd.f32 0.0, %v2297
        %v2299 = vpop.f32.mrf.mxu0
        %2300 = vdwg.mxu0
        %v2302 = vsel %vm1001, %v2224, 0
        %v2305 = vsel %vm1001, %v2080, 0
        %2307 = vmatprep.subr.mxu0 0.0
        %2308 = vmatpush1.xpose.msra.mxu0 0.0
        %2309 = vmatprep.subr.mxu0 0.0
        %2310 = vmatpush1.xpose.msra.mxu0 0.0
        %2311 = vmatprep.subr.mxu0 0.0
        %2312 = vmatpush1.xpose.msra.mxu0 0.0
        %2313 = vmatprep.subr.mxu0 0.0
        %2314 = vmatpush1.xpose.msra.mxu0 0.0
        %2315 = vmatprep.subr.mxu0 0.0
        %2316 = vmatpush1.xpose.msra.mxu0 0.0
        %2317 = vmatprep.subr.mxu0 0.0
        %2318 = vmatpush1.xpose.msra.mxu0 0.0
        %2319 = vmatprep.subr.mxu0 0.0
        %2320 = vmatpush1.xpose.msra.mxu0 0.0
        %2321 = vmatprep.subr.mxu0 0.0
        %2322 = vmatpush1.xpose.msra.mxu0 0.0
        %2323 = vmatprep.subr.mxu0 0.0
        %2324 = vmatpush1.xpose.msra.mxu0 0.0
        %2325 = vmatprep.subr.mxu0 0.0
        %2326 = vmatpush1.xpose.msra.mxu0 0.0
        %2327 = vmatprep.subr.mxu0 0.0
        %2328 = vmatpush1.xpose.msra.mxu0 0.0
        %2329 = vmatprep.subr.mxu0 0.0
        %2330 = vmatpush1.xpose.msra.mxu0 0.0
        %2331 = vmatprep.subr.mxu0 0.0
        %2332 = vmatpush1.xpose.msra.mxu0 0.0
        %2333 = vmatprep.subr.mxu0 0.0
        %2334 = vmatpush1.xpose.msra.mxu0 0.0
        %2335 = vmatprep.subr.mxu0 0.0
        %2336 = vmatpush1.xpose.msra.mxu0 0.0
        %2337 = vmatprep.subr.mxu0 0.0
        %2338 = vmatpush1.xpose.msra.mxu0 %v2305
        %2339 = vmatprep.subr.mxu0 0.0
        %2340 = vmatpush2.xpose.msra.mxu0 0.0
        %2341 = vmatprep.subr.mxu0 0.0
        %2342 = vmatpush2.xpose.msra.mxu0 0.0
        %2343 = vmatprep.subr.mxu0 0.0
        %2344 = vmatpush2.xpose.msra.mxu0 0.0
        %2345 = vmatprep.subr.mxu0 0.0
        %2346 = vmatpush2.xpose.msra.mxu0 0.0
        %2347 = vmatprep.subr.mxu0 0.0
        %2348 = vmatpush2.xpose.msra.mxu0 0.0
        %2349 = vmatprep.subr.mxu0 0.0
        %2350 = vmatpush2.xpose.msra.mxu0 0.0
        %2351 = vmatprep.subr.mxu0 0.0
        %2352 = vmatpush2.xpose.msra.mxu0 0.0
        %2353 = vmatprep.subr.mxu0 0.0
        %2354 = vmatpush2.xpose.msra.mxu0 0.0
        %2355 = vmatprep.subr.mxu0 0.0
        %2356 = vmatpush2.xpose.msra.mxu0 0.0
        %2357 = vmatprep.subr.mxu0 0.0
        %2358 = vmatpush2.xpose.msra.mxu0 0.0
        %2359 = vmatprep.subr.mxu0 0.0
        %2360 = vmatpush2.xpose.msra.mxu0 0.0
        %2361 = vmatprep.subr.mxu0 0.0
        %2362 = vmatpush2.xpose.msra.mxu0 0.0
        %2363 = vmatprep.subr.mxu0 0.0
        %2364 = vmatpush2.xpose.msra.mxu0 0.0
        %2365 = vmatprep.subr.mxu0 0.0
        %2366 = vmatpush2.xpose.msra.mxu0 0.0
        %2367 = vmatprep.subr.mxu0 0.0
        %2368 = vmatpush2.xpose.msra.mxu0 0.0
        %2369 = vmatprep.subr.mxu0 0.0
        %2370 = vmatpush2.xpose.msra.mxu0 0.0
        %2371 = vmatprep.mubr.f32.mxu0 0.0
        %2372 = vmatmul.mubr.f32.gmra.mxu0 %v2302
        %v2373 = vpop.f32.mrf.mxu0
        %v2374 = vadd.f32 0.0, %v2373
        %v2375 = vpop.f32.mrf.mxu0
        %2376 = vdwg.mxu0
        %v2377 = vsel %vm1155, -1e+09, %v2298
        %v2378 = vsel %vm1155, -1e+09, %v2374
        %v2379 = vsel %vm1158, %v2377, -inf
        %2380 = vmax.xlane.f32.xlu0 %v2379
        %v2381 = vpop.xlane.xlu0 %2380
        %v2382 = vsel %vm1158, %v2378, -inf
        %2383 = vmax.xlane.f32.xlu0 %v2382
        %v2384 = vpop.xlane.xlu0 %2383
        %v2385 = vsub.f32 %v2377, %v2381
        %v2386 = vsub.f32 %v2378, %v2384
        %v2387 = vmul.f32 %v2385, 1.442695
        %v2388 = vpow.pop %v2387
        %v2389 = vmul.f32 %v2386, 1.442695
        %v2390 = vpow.pop %v2389
        %v2391 = vsel %vm1158, %v2388, 0.0
        %2392 = vadd.xlane.f32.xlu0 %v2391
        %v2393 = vpop.xlane.xlu0 %2392
        %v2394 = vsel %vm1158, %v2390, 0.0
        %2395 = vadd.xlane.f32.xlu0 %v2394
        %v2396 = vpop.xlane.xlu0 %2395
        %v2397 = vrcp.pop %v2393
        %v2398 = vrcp.pop %v2396
        %v2399 = vmul.f32 %v2388, %v2397
        %v2400 = vmul.f32 %v2390, %v2398
        %v2402 = vsel %vm1158, %v2399, 0
        %2404 = vmatprep.subr.mxu0 0.0
        %2405 = vmatpush1.msra.mxu0 0.0
        %2406 = vmatprep.subr.mxu0 0.0
        %2407 = vmatpush1.msra.mxu0 0.0
        %2408 = vmatprep.subr.mxu0 0.0
        %2409 = vmatpush1.msra.mxu0 0.0
        %2410 = vmatprep.subr.mxu0 0.0
        %2411 = vmatpush1.msra.mxu0 0.0
        %2412 = vmatprep.subr.mxu0 0.0
        %2413 = vmatpush1.msra.mxu0 0.0
        %2414 = vmatprep.subr.mxu0 0.0
        %2415 = vmatpush1.msra.mxu0 0.0
        %2416 = vmatprep.subr.mxu0 0.0
        %2417 = vmatpush1.msra.mxu0 0.0
        %2418 = vmatprep.subr.mxu0 0.0
        %2419 = vmatpush1.msra.mxu0 0.0
        %2420 = vmatprep.subr.mxu0 0.0
        %2421 = vmatpush1.msra.mxu0 0.0
        %2422 = vmatprep.subr.mxu0 0.0
        %2423 = vmatpush1.msra.mxu0 0.0
        %2424 = vmatprep.subr.mxu0 0.0
        %2425 = vmatpush1.msra.mxu0 0.0
        %2426 = vmatprep.subr.mxu0 0.0
        %2427 = vmatpush1.msra.mxu0 0.0
        %2428 = vmatprep.subr.mxu0 0.0
        %2429 = vmatpush1.msra.mxu0 0.0
        %2430 = vmatprep.subr.mxu0 0.0
        %2431 = vmatpush1.msra.mxu0 0.0
        %2432 = vmatprep.subr.mxu0 0.0
        %2433 = vmatpush1.msra.mxu0 0.0
        %2434 = vmatprep.subr.mxu0 0.0
        %2435 = vmatpush1.msra.mxu0 %v2150
        %2436 = vmatprep.subr.mxu0 0.0
        %2437 = vmatpush2.msra.mxu0 0.0
        %2438 = vmatprep.subr.mxu0 0.0
        %2439 = vmatpush2.msra.mxu0 0.0
        %2440 = vmatprep.subr.mxu0 0.0
        %2441 = vmatpush2.msra.mxu0 0.0
        %2442 = vmatprep.subr.mxu0 0.0
        %2443 = vmatpush2.msra.mxu0 0.0
        %2444 = vmatprep.subr.mxu0 0.0
        %2445 = vmatpush2.msra.mxu0 0.0
        %2446 = vmatprep.subr.mxu0 0.0
        %2447 = vmatpush2.msra.mxu0 0.0
        %2448 = vmatprep.subr.mxu0 0.0
        %2449 = vmatpush2.msra.mxu0 0.0
        %2450 = vmatprep.subr.mxu0 0.0
        %2451 = vmatpush2.msra.mxu0 0.0
        %2452 = vmatprep.subr.mxu0 0.0
        %2453 = vmatpush2.msra.mxu0 0.0
        %2454 = vmatprep.subr.mxu0 0.0
        %2455 = vmatpush2.msra.mxu0 0.0
        %2456 = vmatprep.subr.mxu0 0.0
        %2457 = vmatpush2.msra.mxu0 0.0
        %2458 = vmatprep.subr.mxu0 0.0
        %2459 = vmatpush2.msra.mxu0 0.0
        %2460 = vmatprep.subr.mxu0 0.0
        %2461 = vmatpush2.msra.mxu0 0.0
        %2462 = vmatprep.subr.mxu0 0.0
        %2463 = vmatpush2.msra.mxu0 0.0
        %2464 = vmatprep.subr.mxu0 0.0
        %2465 = vmatpush2.msra.mxu0 0.0
        %2466 = vmatprep.subr.mxu0 0.0
        %2467 = vmatpush2.msra.mxu0 0.0
        %2468 = vmatprep.mubr.f32.mxu0 0.0
        %2469 = vmatmul.mubr.f32.gmra.mxu0 %v2402
        %v2470 = vpop.f32.mrf.mxu0
        %v2471 = vadd.f32 0.0, %v2470
        %v2472 = vpop.f32.mrf.mxu0
        %2473 = vdwg.mxu0
        %v2475 = vsel %vm1158, %v2400, 0
        %2477 = vmatprep.subr.mxu0 0.0
        %2478 = vmatpush1.msra.mxu0 0.0
        %2479 = vmatprep.subr.mxu0 0.0
        %2480 = vmatpush1.msra.mxu0 0.0
        %2481 = vmatprep.subr.mxu0 0.0
        %2482 = vmatpush1.msra.mxu0 0.0
        %2483 = vmatprep.subr.mxu0 0.0
        %2484 = vmatpush1.msra.mxu0 0.0
        %2485 = vmatprep.subr.mxu0 0.0
        %2486 = vmatpush1.msra.mxu0 0.0
        %2487 = vmatprep.subr.mxu0 0.0
        %2488 = vmatpush1.msra.mxu0 0.0
        %2489 = vmatprep.subr.mxu0 0.0
        %2490 = vmatpush1.msra.mxu0 0.0
        %2491 = vmatprep.subr.mxu0 0.0
        %2492 = vmatpush1.msra.mxu0 0.0
        %2493 = vmatprep.subr.mxu0 0.0
        %2494 = vmatpush1.msra.mxu0 0.0
        %2495 = vmatprep.subr.mxu0 0.0
        %2496 = vmatpush1.msra.mxu0 0.0
        %2497 = vmatprep.subr.mxu0 0.0
        %2498 = vmatpush1.msra.mxu0 0.0
        %2499 = vmatprep.subr.mxu0 0.0
        %2500 = vmatpush1.msra.mxu0 0.0
        %2501 = vmatprep.subr.mxu0 0.0
        %2502 = vmatpush1.msra.mxu0 0.0
        %2503 = vmatprep.subr.mxu0 0.0
        %2504 = vmatpush1.msra.mxu0 0.0
        %2505 = vmatprep.subr.mxu0 0.0
        %2506 = vmatpush1.msra.mxu0 0.0
        %2507 = vmatprep.subr.mxu0 0.0
        %2508 = vmatpush1.msra.mxu0 %v2220
        %2509 = vmatprep.subr.mxu0 0.0
        %2510 = vmatpush2.msra.mxu0 0.0
        %2511 = vmatprep.subr.mxu0 0.0
        %2512 = vmatpush2.msra.mxu0 0.0
        %2513 = vmatprep.subr.mxu0 0.0
        %2514 = vmatpush2.msra.mxu0 0.0
        %2515 = vmatprep.subr.mxu0 0.0
        %2516 = vmatpush2.msra.mxu0 0.0
        %2517 = vmatprep.subr.mxu0 0.0
        %2518 = vmatpush2.msra.mxu0 0.0
        %2519 = vmatprep.subr.mxu0 0.0
        %2520 = vmatpush2.msra.mxu0 0.0
        %2521 = vmatprep.subr.mxu0 0.0
        %2522 = vmatpush2.msra.mxu0 0.0
        %2523 = vmatprep.subr.mxu0 0.0
        %2524 = vmatpush2.msra.mxu0 0.0
        %2525 = vmatprep.subr.mxu0 0.0
        %2526 = vmatpush2.msra.mxu0 0.0
        %2527 = vmatprep.subr.mxu0 0.0
        %2528 = vmatpush2.msra.mxu0 0.0
        %2529 = vmatprep.subr.mxu0 0.0
        %2530 = vmatpush2.msra.mxu0 0.0
        %2531 = vmatprep.subr.mxu0 0.0
        %2532 = vmatpush2.msra.mxu0 0.0
        %2533 = vmatprep.subr.mxu0 0.0
        %2534 = vmatpush2.msra.mxu0 0.0
        %2535 = vmatprep.subr.mxu0 0.0
        %2536 = vmatpush2.msra.mxu0 0.0
        %2537 = vmatprep.subr.mxu0 0.0
        %2538 = vmatpush2.msra.mxu0 0.0
        %2539 = vmatprep.subr.mxu0 0.0
        %2540 = vmatpush2.msra.mxu0 0.0
        %2541 = vmatprep.mubr.f32.mxu0 0.0
        %2542 = vmatmul.mubr.f32.gmra.mxu0 %v2475
        %v2543 = vpop.f32.mrf.mxu0
        %v2544 = vadd.f32 0.0, %v2543
        %v2545 = vpop.f32.mrf.mxu0
        %2546 = vdwg.mxu0
        %s2547 = scalar_lea.vmem %s4, 32
        %v2548 = vld [vmem:[%s2547] sm:$0xff]
        %v2549 = vld [vmem:[%s2547 + $0x8] sm:$0xff]
        %v2550 = vld [vmem:[%s2547 + $0x10] sm:$0xff]
        %v2551 = vld [vmem:[%s2547 + $0x18] sm:$0xff]
        %v2553 = vsel %vm1001, %v2471, 0
        %2555 = vmatprep.subr.mxu0 0.0
        %2556 = vmatpush1.msra.mxu0 0.0
        %2557 = vmatprep.subr.mxu0 0.0
        %2558 = vmatpush1.msra.mxu0 0.0
        %2559 = vmatprep.subr.mxu0 0.0
        %2560 = vmatpush1.msra.mxu0 0.0
        %2561 = vmatprep.subr.mxu0 0.0
        %2562 = vmatpush1.msra.mxu0 0.0
        %2563 = vmatprep.subr.mxu0 0.0
        %2564 = vmatpush1.msra.mxu0 0.0
        %2565 = vmatprep.subr.mxu0 0.0
        %2566 = vmatpush1.msra.mxu0 0.0
        %2567 = vmatprep.subr.mxu0 0.0
        %2568 = vmatpush1.msra.mxu0 0.0
        %2569 = vmatprep.subr.mxu0 0.0
        %2570 = vmatpush1.msra.mxu0 0.0
        %2571 = vmatprep.subr.mxu0 0.0
        %2572 = vmatpush1.msra.mxu0 0.0
        %2573 = vmatprep.subr.mxu0 0.0
        %2574 = vmatpush1.msra.mxu0 0.0
        %2575 = vmatprep.subr.mxu0 0.0
        %2576 = vmatpush1.msra.mxu0 0.0
        %2577 = vmatprep.subr.mxu0 0.0
        %2578 = vmatpush1.msra.mxu0 0.0
        %2579 = vmatprep.subr.mxu0 0.0
        %2580 = vmatpush1.msra.mxu0 0.0
        %2581 = vmatprep.subr.mxu0 0.0
        %2582 = vmatpush1.msra.mxu0 0.0
        %2583 = vmatprep.subr.mxu0 0.0
        %2584 = vmatpush1.msra.mxu0 %v2549
        %2585 = vmatprep.subr.mxu0 0.0
        %2586 = vmatpush1.msra.mxu0 %v2548
        %2587 = vmatprep.subr.mxu0 0.0
        %2588 = vmatpush2.msra.mxu0 0.0
        %2589 = vmatprep.subr.mxu0 0.0
        %2590 = vmatpush2.msra.mxu0 0.0
        %2591 = vmatprep.subr.mxu0 0.0
        %2592 = vmatpush2.msra.mxu0 0.0
        %2593 = vmatprep.subr.mxu0 0.0
        %2594 = vmatpush2.msra.mxu0 0.0
        %2595 = vmatprep.subr.mxu0 0.0
        %2596 = vmatpush2.msra.mxu0 0.0
        %2597 = vmatprep.subr.mxu0 0.0
        %2598 = vmatpush2.msra.mxu0 0.0
        %2599 = vmatprep.subr.mxu0 0.0
        %2600 = vmatpush2.msra.mxu0 0.0
        %2601 = vmatprep.subr.mxu0 0.0
        %2602 = vmatpush2.msra.mxu0 0.0
        %2603 = vmatprep.subr.mxu0 0.0
        %2604 = vmatpush2.msra.mxu0 0.0
        %2605 = vmatprep.subr.mxu0 0.0
        %2606 = vmatpush2.msra.mxu0 0.0
        %2607 = vmatprep.subr.mxu0 0.0
        %2608 = vmatpush2.msra.mxu0 0.0
        %2609 = vmatprep.subr.mxu0 0.0
        %2610 = vmatpush2.msra.mxu0 0.0
        %2611 = vmatprep.subr.mxu0 0.0
        %2612 = vmatpush2.msra.mxu0 0.0
        %2613 = vmatprep.subr.mxu0 0.0
        %2614 = vmatpush2.msra.mxu0 0.0
        %2615 = vmatprep.subr.mxu0 0.0
        %2616 = vmatpush2.msra.mxu0 0.0
        %2617 = vmatprep.subr.mxu0 0.0
        %2618 = vmatpush2.msra.mxu0 0.0
        %2619 = vmatprep.mubr.f32.mxu0 0.0
        %2620 = vmatmul.mubr.f32.gmra.mxu0 %v2553
        %v2621 = vpop.f32.mrf.mxu0
        %v2622 = vadd.f32 0.0, %v2621
        %v2623 = vpop.f32.mrf.mxu0
        %2624 = vdwg.mxu0
        %v2626 = vsel %vm1001, %v2544, 0
        %2628 = vmatprep.subr.mxu0 0.0
        %2629 = vmatpush1.msra.mxu0 0.0
        %2630 = vmatprep.subr.mxu0 0.0
        %2631 = vmatpush1.msra.mxu0 0.0
        %2632 = vmatprep.subr.mxu0 0.0
        %2633 = vmatpush1.msra.mxu0 0.0
        %2634 = vmatprep.subr.mxu0 0.0
        %2635 = vmatpush1.msra.mxu0 0.0
        %2636 = vmatprep.subr.mxu0 0.0
        %2637 = vmatpush1.msra.mxu0 0.0
        %2638 = vmatprep.subr.mxu0 0.0
        %2639 = vmatpush1.msra.mxu0 0.0
        %2640 = vmatprep.subr.mxu0 0.0
        %2641 = vmatpush1.msra.mxu0 0.0
        %2642 = vmatprep.subr.mxu0 0.0
        %2643 = vmatpush1.msra.mxu0 0.0
        %2644 = vmatprep.subr.mxu0 0.0
        %2645 = vmatpush1.msra.mxu0 0.0
        %2646 = vmatprep.subr.mxu0 0.0
        %2647 = vmatpush1.msra.mxu0 0.0
        %2648 = vmatprep.subr.mxu0 0.0
        %2649 = vmatpush1.msra.mxu0 0.0
        %2650 = vmatprep.subr.mxu0 0.0
        %2651 = vmatpush1.msra.mxu0 0.0
        %2652 = vmatprep.subr.mxu0 0.0
        %2653 = vmatpush1.msra.mxu0 0.0
        %2654 = vmatprep.subr.mxu0 0.0
        %2655 = vmatpush1.msra.mxu0 0.0
        %2656 = vmatprep.subr.mxu0 0.0
        %2657 = vmatpush1.msra.mxu0 %v2551
        %2658 = vmatprep.subr.mxu0 0.0
        %2659 = vmatpush1.msra.mxu0 %v2550
        %2660 = vmatprep.subr.mxu0 0.0
        %2661 = vmatpush2.msra.mxu0 0.0
        %2662 = vmatprep.subr.mxu0 0.0
        %2663 = vmatpush2.msra.mxu0 0.0
        %2664 = vmatprep.subr.mxu0 0.0
        %2665 = vmatpush2.msra.mxu0 0.0
        %2666 = vmatprep.subr.mxu0 0.0
        %2667 = vmatpush2.msra.mxu0 0.0
        %2668 = vmatprep.subr.mxu0 0.0
        %2669 = vmatpush2.msra.mxu0 0.0
        %2670 = vmatprep.subr.mxu0 0.0
        %2671 = vmatpush2.msra.mxu0 0.0
        %2672 = vmatprep.subr.mxu0 0.0
        %2673 = vmatpush2.msra.mxu0 0.0
        %2674 = vmatprep.subr.mxu0 0.0
        %2675 = vmatpush2.msra.mxu0 0.0
        %2676 = vmatprep.subr.mxu0 0.0
        %2677 = vmatpush2.msra.mxu0 0.0
        %2678 = vmatprep.subr.mxu0 0.0
        %2679 = vmatpush2.msra.mxu0 0.0
        %2680 = vmatprep.subr.mxu0 0.0
        %2681 = vmatpush2.msra.mxu0 0.0
        %2682 = vmatprep.subr.mxu0 0.0
        %2683 = vmatpush2.msra.mxu0 0.0
        %2684 = vmatprep.subr.mxu0 0.0
        %2685 = vmatpush2.msra.mxu0 0.0
        %2686 = vmatprep.subr.mxu0 0.0
        %2687 = vmatpush2.msra.mxu0 0.0
        %2688 = vmatprep.subr.mxu0 0.0
        %2689 = vmatpush2.msra.mxu0 0.0
        %2690 = vmatprep.subr.mxu0 0.0
        %2691 = vmatpush2.msra.mxu0 0.0
        %2692 = vmatprep.mubr.f32.mxu0 0.0
        %2693 = vmatmul.mubr.f32.gmra.mxu0 %v2626
        %v2694 = vpop.f32.mrf.mxu0
        %v2695 = vadd.f32 0.0, %v2694
        %v2696 = vpop.f32.mrf.mxu0
        %2697 = vdwg.mxu0
        %v2698 = vsel %vm575, %v2622, 0.0
        %v2699 = vsel %vm575, %v2695, 0.0
        %v2700 = vadd.f32 %v2698, %v2699
        %s2701 = scalar_lea.vmem %s5, 1
        %v2702 = vld [vmem:[%s2701] sm:$0x1]
        %v2704 = vlaneseq
        %v2705 = vshrl.u32 %v2704, 7
        %v2706 = vsub.s32 0, %v2705
        %v2707 = vrot.slane %v2702, %v2706
        %v2709 = vadd.f32 %v2700, %v2707
        %v2710 = vadd.f32 %v1727, %v2709
        %s2711 = scalar_lea.vmem %s6, 1
        %v2712 = vld [vmem:[%s2711] sm:$0x1]
        %s2713 = scalar_lea.vmem %s7, 1
        %v2714 = vld [vmem:[%s2713] sm:$0x1]
        %v2715 = vsel %vm575, %v2710, 0.0
        %2716 = vadd.xlane.f32.xlu0 %v2715
        %v2717 = vpop.xlane.xlu0 %2716
        %v2718 = vmul.f32 %v2717, %v1494
        %v2719 = vsub.f32 %v2710, %v2718
        %v2720 = vmul.f32 %v2719, %v2719
        %v2721 = vsel %vm575, %v2720, 0.0
        %2722 = vadd.xlane.f32.xlu0 %v2721
        %v2723 = vpop.xlane.xlu0 %2722
        %v2724 = vmul.f32 %v2723, %v1494
        %v2725 = vadd.f32 %v2724, 1e-06
        %v2726 = vrsqrt.pop %v2725
        %v2727 = vmul.f32 %v2719, %v2726
        %v2729 = vlaneseq
        %v2730 = vshrl.u32 %v2729, 7
        %v2731 = vsub.s32 0, %v2730
        %v2732 = vrot.slane %v2712, %v2731
        %v2734 = vmul.f32 %v2727, %v2732
        %v2736 = vlaneseq
        %v2737 = vshrl.u32 %v2736, 7
        %v2738 = vsub.s32 0, %v2737
        %v2739 = vrot.slane %v2714, %v2738
        %v2741 = vadd.f32 %v2734, %v2739
        %s2742 = scalar_lea.vmem %s8, 32
        %v2743 = vld [vmem:[%s2742] sm:$0xff]
        %v2744 = vld [vmem:[%s2742 + $0x8] sm:$0xff]
        %v2745 = vld [vmem:[%s2742 + $0x10] sm:$0xff]
        %v2746 = vld [vmem:[%s2742 + $0x18] sm:$0xff]
        %s2747 = scalar_lea.vmem %s9, 1
        %v2748 = vld [vmem:[%s2747] sm:$0x1]
        %v2750 = vlaneseq
        %v2751 = vshrl.u32 %v2750, 7
        %v2752 = vsub.s32 0, %v2751
        %v2753 = vrot.slane %v2748, %v2752
        %v2756 = vsel %vm575, %v2741, 0
        %2758 = vmatprep.subr.mxu0 0.0
        %2759 = vmatpush1.msra.mxu0 0.0
        %2760 = vmatprep.subr.mxu0 0.0
        %2761 = vmatpush1.msra.mxu0 0.0
        %2762 = vmatprep.subr.mxu0 0.0
        %2763 = vmatpush1.msra.mxu0 0.0
        %2764 = vmatprep.subr.mxu0 0.0
        %2765 = vmatpush1.msra.mxu0 0.0
        %2766 = vmatprep.subr.mxu0 0.0
        %2767 = vmatpush1.msra.mxu0 0.0
        %2768 = vmatprep.subr.mxu0 0.0
        %2769 = vmatpush1.msra.mxu0 0.0
        %2770 = vmatprep.subr.mxu0 0.0
        %2771 = vmatpush1.msra.mxu0 0.0
        %2772 = vmatprep.subr.mxu0 0.0
        %2773 = vmatpush1.msra.mxu0 0.0
        %2774 = vmatprep.subr.mxu0 0.0
        %2775 = vmatpush1.msra.mxu0 0.0
        %2776 = vmatprep.subr.mxu0 0.0
        %2777 = vmatpush1.msra.mxu0 0.0
        %2778 = vmatprep.subr.mxu0 0.0
        %2779 = vmatpush1.msra.mxu0 0.0
        %2780 = vmatprep.subr.mxu0 0.0
        %2781 = vmatpush1.msra.mxu0 0.0
        %2782 = vmatprep.subr.mxu0 0.0
        %2783 = vmatpush1.msra.mxu0 %v2746
        %2784 = vmatprep.subr.mxu0 0.0
        %2785 = vmatpush1.msra.mxu0 %v2745
        %2786 = vmatprep.subr.mxu0 0.0
        %2787 = vmatpush1.msra.mxu0 %v2744
        %2788 = vmatprep.subr.mxu0 0.0
        %2789 = vmatpush1.msra.mxu0 %v2743
        %2790 = vmatprep.subr.mxu0 0.0
        %2791 = vmatpush2.msra.mxu0 0.0
        %2792 = vmatprep.subr.mxu0 0.0
        %2793 = vmatpush2.msra.mxu0 0.0
        %2794 = vmatprep.subr.mxu0 0.0
        %2795 = vmatpush2.msra.mxu0 0.0
        %2796 = vmatprep.subr.mxu0 0.0
        %2797 = vmatpush2.msra.mxu0 0.0
        %2798 = vmatprep.subr.mxu0 0.0
        %2799 = vmatpush2.msra.mxu0 0.0
        %2800 = vmatprep.subr.mxu0 0.0
        %2801 = vmatpush2.msra.mxu0 0.0
        %2802 = vmatprep.subr.mxu0 0.0
        %2803 = vmatpush2.msra.mxu0 0.0
        %2804 = vmatprep.subr.mxu0 0.0
        %2805 = vmatpush2.msra.mxu0 0.0
        %2806 = vmatprep.subr.mxu0 0.0
        %2807 = vmatpush2.msra.mxu0 0.0
        %2808 = vmatprep.subr.mxu0 0.0
        %2809 = vmatpush2.msra.mxu0 0.0
        %2810 = vmatprep.subr.mxu0 0.0
        %2811 = vmatpush2.msra.mxu0 0.0
        %2812 = vmatprep.subr.mxu0 0.0
        %2813 = vmatpush2.msra.mxu0 0.0
        %2814 = vmatprep.subr.mxu0 0.0
        %2815 = vmatpush2.msra.mxu0 0.0
        %2816 = vmatprep.subr.mxu0 0.0
        %2817 = vmatpush2.msra.mxu0 0.0
        %2818 = vmatprep.subr.mxu0 0.0
        %2819 = vmatpush2.msra.mxu0 0.0
        %2820 = vmatprep.subr.mxu0 0.0
        %2821 = vmatpush2.msra.mxu0 0.0
        %2822 = vmatprep.mubr.f32.mxu0 0.0
        %2823 = vmatmul.mubr.f32.gmra.mxu0 %v2756
        %v2824 = vpop.f32.mrf.mxu0
        %v2825 = vadd.f32 %v2753, %v2824
        %v2826 = vpop.f32.mrf.mxu0
        %2827 = vdwg.mxu0
        %v2828 = vmul.f32 %v2825, 0.5
        %v2829 = vmul.f32 %v2825, %v1604
        %v2830 = verf.f32.pop %v2829
        %v2831 = vadd.f32 %v2830, 1.0
        %v2832 = vmul.f32 %v2828, %v2831
        %s2833 = scalar_lea.vmem %s10, 64
        %v2834 = vld [vmem:[%s2833] sm:$0xff]
        %v2835 = vld [vmem:[%s2833 + $0x8] sm:$0xff]
        %v2836 = vld [vmem:[%s2833 + $0x10] sm:$0xff]
        %v2837 = vld [vmem:[%s2833 + $0x18] sm:$0xff]
        %v2838 = vld [vmem:[%s2833 + $0x20] sm:$0xff]
        %v2839 = vld [vmem:[%s2833 + $0x28] sm:$0xff]
        %v2840 = vld [vmem:[%s2833 + $0x30] sm:$0xff]
        %v2841 = vld [vmem:[%s2833 + $0x38] sm:$0xff]
        %s2842 = scalar_lea.vmem %s11, 1
        %v2843 = vld [vmem:[%s2842] sm:$0x1]
        %v2845 = vlaneseq
        %v2846 = vshrl.u32 %v2845, 7
        %v2847 = vsub.s32 0, %v2846
        %v2848 = vrot.slane %v2843, %v2847
        %v2851 = vsel %vm1624, %v2832, 0
        %2853 = vmatprep.subr.mxu0 0.0
        %2854 = vmatpush1.msra.mxu0 0.0
        %2855 = vmatprep.subr.mxu0 0.0
        %2856 = vmatpush1.msra.mxu0 0.0
        %2857 = vmatprep.subr.mxu0 0.0
        %2858 = vmatpush1.msra.mxu0 0.0
        %2859 = vmatprep.subr.mxu0 0.0
        %2860 = vmatpush1.msra.mxu0 0.0
        %2861 = vmatprep.subr.mxu0 0.0
        %2862 = vmatpush1.msra.mxu0 0.0
        %2863 = vmatprep.subr.mxu0 0.0
        %2864 = vmatpush1.msra.mxu0 0.0
        %2865 = vmatprep.subr.mxu0 0.0
        %2866 = vmatpush1.msra.mxu0 0.0
        %2867 = vmatprep.subr.mxu0 0.0
        %2868 = vmatpush1.msra.mxu0 0.0
        %2869 = vmatprep.subr.mxu0 0.0
        %2870 = vmatpush1.msra.mxu0 %v2841
        %2871 = vmatprep.subr.mxu0 0.0
        %2872 = vmatpush1.msra.mxu0 %v2840
        %2873 = vmatprep.subr.mxu0 0.0
        %2874 = vmatpush1.msra.mxu0 %v2839
        %2875 = vmatprep.subr.mxu0 0.0
        %2876 = vmatpush1.msra.mxu0 %v2838
        %2877 = vmatprep.subr.mxu0 0.0
        %2878 = vmatpush1.msra.mxu0 %v2837
        %2879 = vmatprep.subr.mxu0 0.0
        %2880 = vmatpush1.msra.mxu0 %v2836
        %2881 = vmatprep.subr.mxu0 0.0
        %2882 = vmatpush1.msra.mxu0 %v2835
        %2883 = vmatprep.subr.mxu0 0.0
        %2884 = vmatpush1.msra.mxu0 %v2834
        %2885 = vmatprep.subr.mxu0 0.0
        %2886 = vmatpush2.msra.mxu0 0.0
        %2887 = vmatprep.subr.mxu0 0.0
        %2888 = vmatpush2.msra.mxu0 0.0
        %2889 = vmatprep.subr.mxu0 0.0
        %2890 = vmatpush2.msra.mxu0 0.0
        %2891 = vmatprep.subr.mxu0 0.0
        %2892 = vmatpush2.msra.mxu0 0.0
        %2893 = vmatprep.subr.mxu0 0.0
        %2894 = vmatpush2.msra.mxu0 0.0
        %2895 = vmatprep.subr.mxu0 0.0
        %2896 = vmatpush2.msra.mxu0 0.0
        %2897 = vmatprep.subr.mxu0 0.0
        %2898 = vmatpush2.msra.mxu0 0.0
        %2899 = vmatprep.subr.mxu0 0.0
        %2900 = vmatpush2.msra.mxu0 0.0
        %2901 = vmatprep.subr.mxu0 0.0
        %2902 = vmatpush2.msra.mxu0 0.0
        %2903 = vmatprep.subr.mxu0 0.0
        %2904 = vmatpush2.msra.mxu0 0.0
        %2905 = vmatprep.subr.mxu0 0.0
        %2906 = vmatpush2.msra.mxu0 0.0
        %2907 = vmatprep.subr.mxu0 0.0
        %2908 = vmatpush2.msra.mxu0 0.0
        %2909 = vmatprep.subr.mxu0 0.0
        %2910 = vmatpush2.msra.mxu0 0.0
        %2911 = vmatprep.subr.mxu0 0.0
        %2912 = vmatpush2.msra.mxu0 0.0
        %2913 = vmatprep.subr.mxu0 0.0
        %2914 = vmatpush2.msra.mxu0 0.0
        %2915 = vmatprep.subr.mxu0 0.0
        %2916 = vmatpush2.msra.mxu0 0.0
        %2917 = vmatprep.mubr.f32.mxu0 0.0
        %2918 = vmatmul.mubr.f32.gmra.mxu0 %v2851
        %v2919 = vpop.f32.mrf.mxu0
        %v2920 = vadd.f32 %v2848, %v2919
        %v2921 = vpop.f32.mrf.mxu0
        %2922 = vdwg.mxu0
        %v2923 = vadd.f32 %v2741, %v2920
        %s2924 = scalar_lea.vmem %s12, 1
        %v2925 = vld [vmem:[%s2924] sm:$0x1]
        %s2926 = scalar_lea.vmem %s13, 1
        %v2927 = vld [vmem:[%s2926] sm:$0x1]
        %v2928 = vsel %vm575, %v2923, 0.0
        %2929 = vadd.xlane.f32.xlu0 %v2928
        %v2930 = vpop.xlane.xlu0 %2929
        %v2931 = vmul.f32 %v2930, %v1494
        %v2932 = vsub.f32 %v2923, %v2931
        %v2933 = vmul.f32 %v2932, %v2932
        %v2934 = vsel %vm575, %v2933, 0.0
        %2935 = vadd.xlane.f32.xlu0 %v2934
        %v2936 = vpop.xlane.xlu0 %2935
        %v2937 = vmul.f32 %v2936, %v1494
        %v2938 = vadd.f32 %v2937, 1e-06
        %v2939 = vrsqrt.pop %v2938
        %v2940 = vmul.f32 %v2932, %v2939
        %v2942 = vlaneseq
        %v2943 = vshrl.u32 %v2942, 7
        %v2944 = vsub.s32 0, %v2943
        %v2945 = vrot.slane %v2925, %v2944
        %v2947 = vmul.f32 %v2940, %v2945
        %v2949 = vlaneseq
        %v2950 = vshrl.u32 %v2949, 7
        %v2951 = vsub.s32 0, %v2950
        %v2952 = vrot.slane %v2927, %v2951
        %v2954 = vadd.f32 %v2947, %v2952
        %2955 = vrot.lane.b32.xlu0 %v2400, 8
        %v2956 = vpop.permute.xlu0 %2955
        %v2958 = vsel %vm1158, %v2399, %v2956
        %2959 = vst.msk [vmem:[%s489] sm:$0xff] %vm575, %v2954
        %2961 = vrot.lane.b32.xlu0 %v2958, 16
        %v2962 = vpop.permute.xlu0 %2961
        %v2964 = vsel %vm1001, %v1731, %v2962
        %2965 = vst.msk [vmem:[%s496] sm:$0xff] %vm575, %v2964
        %s2966 = sand.u32 %s340, 1
        %s2967 = scalar_lea.sflag [#allocation3], %s2966
        %s2968 = sand.u32 %s340, 1
        %s2969 = smul.addr %s2968, 8
        %s2970 = scalar_lea.vmem [#allocation2], %s2969
        %s2971 = sand.u32 %s366, 1
        %s2972 = scalar_lea.sflag [#allocation5], %s2971
        %s2973 = sand.u32 %s366, 1
        %s2974 = smul.addr %s2973, 8
        %s2975 = scalar_lea.vmem [#allocation4], %s2974
        // Predicated region
        $region77: #{tpu_custom_call.1} parent=75 // pred_check
          %p2976 = pneg %p350
        $region78: #{tpu_custom_call.1} parent=75 // pred_check_branch
          %2978 = sbr.rel (%p2976) target = $region80
        $region79: #{tpu_custom_call.1} parent=75 // pred_region
          %s2980 = ssub.s32 128, 128
          %2981 = vsyncadd %s2967, %s2980
          %s2982 = smul.addr %s33, 128
          %s2983 = scalar_lea.hbm %s14, %s2982
          %s2985 = sshll.u32 %s2970, 4
          %s2986 = int_to_ptr.vmem [resolvable:$true] %s2985
          %2988 = dma.vmem_to_hbm [thread:$0]  %s2986, 128, %s2983, %s2967
        $region80: #{tpu_custom_call.1} parent=75 // pred_fallthru
          _
        // Predicated region
        $region81: #{tpu_custom_call.1} parent=75 // pred_check
          %p2989 = pneg %p376
        $region82: #{tpu_custom_call.1} parent=75 // pred_check_branch
          %2991 = sbr.rel (%p2989) target = $region84
        $region83: #{tpu_custom_call.1} parent=75 // pred_region
          %s2993 = ssub.s32 128, 128
          %2994 = vsyncadd %s2972, %s2993
          %s2995 = smul.addr %s33, 128
          %s2996 = scalar_lea.hbm %s15, %s2995
          %s2998 = sshll.u32 %s2975, 4
          %s2999 = int_to_ptr.vmem [resolvable:$true] %s2998
          %3001 = dma.vmem_to_hbm [thread:$0]  %s2999, 128, %s2996, %s2972
        $region84: #{tpu_custom_call.1} parent=75 // pred_fallthru
          _
      $region76: #{tpu_custom_call.1} parent=5 // pred_fallthru
        _
      %p3002 = scmp.le.s32.totalorder 2, %s28
      // Predicated region
      $region85: #{tpu_custom_call.1} parent=5 // pred_check
        %p3003 = pneg %p3002
      $region86: #{tpu_custom_call.1} parent=5 // pred_check_branch
        %3005 = sbr.rel (%p3003) target = $region88
      $region87: #{tpu_custom_call.1} parent=5 // pred_region
        %s3006 = ssub.s32 %s28, 2
        // Predicated region
        $region89: #{tpu_custom_call.1} parent=87 // pred_check
          %p3007 = pneg %p356
        $region90: #{tpu_custom_call.1} parent=87 // pred_check_branch
          %3009 = sbr.rel (%p3007) target = $region92
        $region91: #{tpu_custom_call.1} parent=87 // pred_region
          %s3010 = sand.u32 %s341, 1
          %s3011 = scalar_lea.sflag [#allocation3], %s3010
          %s3012 = sand.u32 %s341, 1
          %s3013 = smul.addr %s3012, 8
          %s3014 = scalar_lea.vmem [#allocation2], %s3013
          %3015 = dma.done %s3011, 128
        $region92: #{tpu_custom_call.1} parent=87 // pred_fallthru
          _
        // Predicated region
        $region93: #{tpu_custom_call.1} parent=87 // pred_check
          %p3016 = pneg %p382
        $region94: #{tpu_custom_call.1} parent=87 // pred_check_branch
          %3018 = sbr.rel (%p3016) target = $region96
        $region95: #{tpu_custom_call.1} parent=87 // pred_region
          %s3019 = sand.u32 %s367, 1
          %s3020 = scalar_lea.sflag [#allocation5], %s3019
          %s3021 = sand.u32 %s367, 1
          %s3022 = smul.addr %s3021, 8
          %s3023 = scalar_lea.vmem [#allocation4], %s3022
          %3024 = dma.done %s3020, 128
        $region96: #{tpu_custom_call.1} parent=87 // pred_fallthru
          _
      $region88: #{tpu_custom_call.1} parent=5 // pred_fallthru
        _
    $region6: #{tpu_custom_call.1} parent=1 // loop_footer
      %s32 = sadd.s32 1, %s28
    $region7: #{tpu_custom_call.1} parent=1 // loop_footer_branch
      %27 = sbr.rel target = $region3
    $region8: #{tpu_custom_call.1} parent=1 // loop_exit
      _
    %3025 = vsyncpa [#allocation3], 1
    %s3026 = scalar_lea.sflag [#allocation3], 1
    %3027 = vsyncpa %s3026, 1
    %3028 = vsyncpa [#allocation5], 1
    %s3029 = scalar_lea.sflag [#allocation5], 1
    %3030 = vsyncpa %s3029, 1

</llo_original>
